<compile_context>
chip_gen: v7x
topology: tpu7x:2x2x1
jax: 0.10.0
libtpu: 0.0.40
codegen_flags: <defaults>
</compile_context>

<pallas_src>
import jax
import jax.numpy as jnp
from jax import lax
from jax.experimental import pallas as pl
from jax.experimental.pallas import tpu as pltpu

HIDDEN = 32
CIN_PAD = 16                     # layer-1 input channels padded 3 -> 16 (bf16 sublane tile)
EPS = 1e-5
NEG_SLOPE = 0.01                 # PyTorch nn.LeakyReLU default
ACT_DTYPE = jnp.bfloat16         # MXU operand / stored activation dtype


def _round_up(x, m):
    return (x + m - 1) // m * m


# ---------------------------------------------------------------------------
# Pallas kernel: entire Critic forward (built per static geometry)
# ---------------------------------------------------------------------------
def _build_critic_kernel(N, H, W, G0, Spix, Stot):
    Wp = W + 2
    M_valid = N * H * W          # BatchNorm population (interior pixels only)

    def kernel(xflat_ref, mask_ref, imask_ref,
               w1_ref, b1_ref, g1_ref, be1_ref,
               w2_ref, b2_ref, g2_ref, be2_ref,
               w3_ref, b3_ref, g3_ref, be3_ref,
               w4_ref, b4_ref,
               out_ref, act_ref):
        mask_c = mask_ref[...]                       # (1, Spix) f32, 1 on interior

        def conv3x3(src_ref, w_ref, b_ref):
            # Flat im2col: each tap is a contiguous lane-slice of the
            # zero-guarded flat buffer (static offsets, no NHWC window
            # shifting).  Flipped GEMM keeps the long pixel axis on lanes;
            # three accumulated K = 3*Cin matmuls (one per dy).
            acc = None
            for dy in range(3):
                base = G0 + (dy - 1) * Wp - 1
                taps = [src_ref[:, base + dx:base + dx + Spix] for dx in range(3)]
                patch = jnp.concatenate(taps, axis=0)          # (3*Cin, Spix) bf16
                part = jnp.dot(w_ref[dy], patch,
                               preferred_element_type=jnp.float32)
                acc = part if acc is None else acc + part
            return acc + b_ref[...]                            # (Cout, Spix) f32

        def lrelu_bn(a, g_ref, be_ref):
            # Fused LeakyReLU + masked one-pass BN statistics, applied as one
            # per-channel scale/shift.  The mask removes the garbage values
            # computed at padded-border positions and re-zeros them on output.
            # (One-pass E[x^2]-E[x]^2 in f32 is fine at these O(1) magnitudes;
            # the tiled two-pass form goes with the TODO grid version.)
            a = jnp.where(a >= 0, a, NEG_SLOPE * a)
            am = a * mask_c
            inv_m = 1.0 / M_valid
            mean = jnp.sum(am, axis=1, keepdims=True) * inv_m             # (C, 1)
            var = jnp.sum(am * am, axis=1, keepdims=True) * inv_m - mean * mean
            scale = g_ref[...] * lax.rsqrt(var + EPS)
            shift = be_ref[...] - mean * scale
            return am * scale + shift * mask_c       # borders stay exactly 0

        # Zero the guard bands of the activation scratch once; every layer
        # stores the full [G0, G0 + Spix) range so padded borders stay zero.
        act_ref[:, 0:G0] = jnp.zeros((HIDDEN, G0), ACT_DTYPE)
        act_ref[:, G0 + Spix:Stot] = jnp.zeros(
            (HIDDEN, Stot - G0 - Spix), ACT_DTYPE)

        # Layer 1: taps read directly from the flat input ref (no VMEM copy of
        # the padded input into the scratch).
        y = lrelu_bn(conv3x3(xflat_ref, w1_ref, b1_ref), g1_ref, be1_ref)
        act_ref[:, G0:G0 + Spix] = y.astype(ACT_DTYPE)

        # Layers 2-3: conv -> LeakyReLU -> BN, lane-dense writeback.
        for (w, b, g, be) in ((w2_ref, b2_ref, g2_ref, be2_ref),
                              (w3_ref, b3_ref, g3_ref, be3_ref)):
            y = lrelu_bn(conv3x3(act_ref, w, b), g, be)
            act_ref[:, G0:G0 + Spix] = y.astype(ACT_DTYPE)

        # Layer 4 (Cout = 1) + per-sample spatial mean: a single masked lane
        # contraction (imask rows are 1/(H*W) on each sample's interior).
        y4 = conv3x3(act_ref, w4_ref, b4_ref)                  # (1, Spix) f32
        out_ref[...] = jnp.sum(imask_ref[...] * y4, axis=1, keepdims=True)

    return kernel


# ---------------------------------------------------------------------------
# Host-side wrapper (layout plumbing only — all compute is in the kernel)
# ---------------------------------------------------------------------------
def _vmem_limit_bytes(Spix, Stot):
    est = (Stot * (HIDDEN + CIN_PAD) * 2        # flat input + activation scratch (bf16)
           + Spix * HIDDEN * 4 * 6              # live f32 intermediates (generous)
           + Spix * 3 * HIDDEN * 2              # one stacked (3*Cin, Spix) bf16 patch
           + 4 * 9 * HIDDEN * HIDDEN * 2        # bf16 weights
           + (2 << 20))                         # slack
    # Keep the request modest: <= 32 MiB is within the default scoped budget
    # on every generation (v7x has only 64 MiB physical VMEM).
    return int(min(32 * 1024 * 1024, max(8 * 1024 * 1024, 2 * est)))


def _prep_conv_w(w, cin_pad):
    """HWIO (3,3,Cin,Cout) -> (3, Cout, 3*cin_pad) bf16, grouped by ky (=dy),
    inner index ordered (kx, cin) to match the in-kernel tap stacking."""
    kh, kw, cin, cout = w.shape
    if cin < cin_pad:
        w = jnp.pad(w, ((0, 0), (0, 0), (0, cin_pad - cin), (0, 0)))
    w = jnp.transpose(w, (0, 3, 1, 2))              # (3, Cout, 3, cin_pad)
    return w.reshape(kh, cout, 3 * cin_pad).astype(ACT_DTYPE)


def _col(v):
    return jnp.asarray(v, jnp.float32).reshape(-1, 1)    # (1,C)/(C,) -> (C,1)


def critic_forward(x_nchw, params):
    """x_nchw: (N, 3, H, W) float32 -> (N,) float32."""
    (w1, b1, g1, be1, w2, b2, g2, be2, w3, b3, g3, be3, w4, b4) = params
    x = jnp.transpose(x_nchw, (0, 2, 3, 1)).astype(jnp.float32)    # NHWC
    N, H, W, cin = x.shape
    Hp, Wp = H + 2, W + 2
    Spix = N * Hp * Wp
    G0 = 128                                    # lane-aligned guard band (>= Wp + 1)
    assert Wp + 1 <= G0, "image width too large for the fixed guard band"
    Stot = G0 + _round_up(Spix + Wp + 1, 128)

    # Flat, zero-bordered, channel-padded input in (C, flat_pixels) layout.
    xpad = jnp.pad(x, ((0, 0), (1, 1), (1, 1), (0, CIN_PAD - cin)))
    xflat = jnp.transpose(xpad, (3, 0, 1, 2)).reshape(CIN_PAD, Spix)
    xflat = jnp.pad(xflat, ((0, 0), (G0, Stot - G0 - Spix))).astype(ACT_DTYPE)

    # Interior mask (1.0 at non-border pixels) and per-sample mean weights.
    m2 = jnp.zeros((Hp, Wp), jnp.float32).at[1:H + 1, 1:W + 1].set(1.0)
    mask = jnp.tile(m2.reshape(-1), N).reshape(1, Spix)
    imask = jnp.kron(jnp.eye(N, dtype=jnp.float32),
                     m2.reshape(1, Hp * Wp)) * (1.0 / (H * W))     # (N, Spix)

    args = (xflat, mask, imask,
            _prep_conv_w(w1, CIN_PAD), _col(b1), _col(g1), _col(be1),
            _prep_conv_w(w2, HIDDEN), _col(b2), _col(g2), _col(be2),
            _prep_conv_w(w3, HIDDEN), _col(b3), _col(g3), _col(be3),
            _prep_conv_w(w4, HIDDEN), _col(b4))

    kernel = _build_critic_kernel(N, H, W, G0, Spix, Stot)
    out = pl.pallas_call(
        kernel,
        out_shape=jax.ShapeDtypeStruct((N, 1), jnp.float32),
        in_specs=[pl.BlockSpec(memory_space=pltpu.MemorySpace.VMEM)] * len(args),
        out_specs=pl.BlockSpec(memory_space=pltpu.MemorySpace.VMEM),
        scratch_shapes=[pltpu.VMEM((HIDDEN, Stot), ACT_DTYPE)],
        compiler_params=pltpu.CompilerParams(
            vmem_limit_bytes=_vmem_limit_bytes(Spix, Stot)),
    )(*args)
    return out[:, 0]


# ---------------------------------------------------------------------------
# Deterministic parameter init (shapes from Critic.__init__, hidden_size=32)
# ---------------------------------------------------------------------------
def init_params(key, hidden=HIDDEN):
    def conv_init(k, cin, cout):
        kw, kb = jax.random.split(k)
        bound = 1.0 / float(jnp.sqrt(cin * 9))
        w = jax.random.uniform(kw, (3, 3, cin, cout), jnp.float32, -bound, bound)
        b = jax.random.uniform(kb, (1, cout), jnp.float32, -bound, bound)
        return w, b

    k1, k2, k3, k4 = jax.random.split(key, 4)
    w1, b1 = conv_init(k1, 3, hidden)
    w2, b2 = conv_init(k2, hidden, hidden)
    w3, b3 = conv_init(k3, hidden, hidden)
    w4, b4 = conv_init(k4, hidden, 1)
    gamma = jnp.ones((1, hidden), jnp.float32)   # BatchNorm2d default affine
    beta = jnp.zeros((1, hidden), jnp.float32)
    return (w1, b1, gamma, beta,
            w2, b2, gamma, beta,
            w3, b3, gamma, beta,
            w4, b4)


# ---------------------------------------------------------------------------
# Pure-JAX f32 reference (for correctness check)
# ---------------------------------------------------------------------------
def reference_forward(x_nchw, params):
    (w1, b1, g1, be1, w2, b2, g2, be2, w3, b3, g3, be3, w4, b4) = params
    x = jnp.transpose(x_nchw, (0, 2, 3, 1)).astype(jnp.float32)

    def conv(x, w, b):
        y = lax.conv_general_dilated(x, w, (1, 1), 'SAME',
                                     dimension_numbers=('NHWC', 'HWIO', 'NHWC'))
        return y + b

    def bn(x, g, be):
        mean = jnp.mean(x, axis=(0, 1, 2), keepdims=True)
        var = jnp.mean((x - mean) ** 2, axis=(0, 1, 2), keepdims=True)
        return (x - mean) / jnp.sqrt(var + EPS) * g + be

    def lrelu(x):
        return jnp.where(x >= 0, x, NEG_SLOPE * x)

    h = bn(lrelu(conv(x, w1, b1)), g1, be1)
    h = bn(lrelu(conv(h, w2, b2)), g2, be2)
    h = bn(lrelu(conv(h, w3, b3)), g3, be3)
    y = conv(h, w4, b4)
    return jnp.mean(y.reshape(y.shape[0], -1), axis=1)


if __name__ == "__main__":
    key = jax.random.PRNGKey(0)
    kx, kp = jax.random.split(key)
    x = jax.random.normal(kx, (2, 3, 16, 16), jnp.float32)   # (N, 3, H, W)
    params = init_params(kp)

    out = critic_forward(x, params)
    out = jax.block_until_ready(out)

    ref = reference_forward(x, params)
    assert out.shape == (2,), out.shape
    # bf16 MXU operands / bf16 inter-layer storage -> looser tolerance than a
    # pure-f32 comparison (statistics and normalization math stay in f32).
    assert float(jnp.max(jnp.abs(out - ref))) < 1e-2, (out, ref)
    print("KERNEL_OK")
</pallas_src>

<mosaic_0001>
module attributes {stable_mosaic.version = 11 : i64} {
  func.func @kernel(%arg0: memref<16x896xbf16, #tpu.memory_space<vmem>>, %arg1: memref<1x648xf32, #tpu.memory_space<vmem>>, %arg2: memref<2x648xf32, #tpu.memory_space<vmem>>, %arg3: memref<3x32x48xbf16, #tpu.memory_space<vmem>>, %arg4: memref<32x1xf32, #tpu.memory_space<vmem>>, %arg5: memref<32x1xf32, #tpu.memory_space<vmem>>, %arg6: memref<32x1xf32, #tpu.memory_space<vmem>>, %arg7: memref<3x32x96xbf16, #tpu.memory_space<vmem>>, %arg8: memref<32x1xf32, #tpu.memory_space<vmem>>, %arg9: memref<32x1xf32, #tpu.memory_space<vmem>>, %arg10: memref<32x1xf32, #tpu.memory_space<vmem>>, %arg11: memref<3x32x96xbf16, #tpu.memory_space<vmem>>, %arg12: memref<32x1xf32, #tpu.memory_space<vmem>>, %arg13: memref<32x1xf32, #tpu.memory_space<vmem>>, %arg14: memref<32x1xf32, #tpu.memory_space<vmem>>, %arg15: memref<3x1x96xbf16, #tpu.memory_space<vmem>>, %arg16: memref<1x1xf32, #tpu.memory_space<vmem>>, %arg17: memref<2x1xf32, #tpu.memory_space<vmem>>, %arg18: memref<32x896xbf16, #tpu.memory_space<vmem>>) attributes {dimension_semantics = [], scalar_prefetch = 0 : i64, scratch_operands = 1 : i64, tpu.core_type = #tpu.core_type<tc>} {
    %c0 = arith.constant 0 : index
    %c0_0 = arith.constant 0 : index
    %0 = vector.load %arg1[%c0, %c0_0] : memref<1x648xf32, #tpu.memory_space<vmem>>, vector<1x648xf32>
    %cst = arith.constant 0.000000e+00 : bf16
    %1 = vector.broadcast %cst : bf16 to vector<32x128xbf16>
    %c0_1 = arith.constant 0 : index
    %c0_2 = arith.constant 0 : index
    %2 = vector.load %arg18[%c0_1, %c0_2] : memref<32x896xbf16, #tpu.memory_space<vmem>>, vector<32x128xbf16>
    tpu.vector_store %arg18[%c0_1, %c0_2], %1 {strides = array<i32>} : memref<32x896xbf16, #tpu.memory_space<vmem>>, vector<32x128xbf16>,
    %cst_3 = arith.constant 0.000000e+00 : bf16
    %3 = vector.broadcast %cst_3 : bf16 to vector<32x120xbf16>
    %c0_4 = arith.constant 0 : index
    %c776 = arith.constant 776 : index
    %4 = vector.load %arg18[%c0_4, %c776] : memref<32x896xbf16, #tpu.memory_space<vmem>>, vector<32x120xbf16>
    tpu.vector_store %arg18[%c0_4, %c776], %3 {strides = array<i32>} : memref<32x896xbf16, #tpu.memory_space<vmem>>, vector<32x120xbf16>,
    %c0_5 = arith.constant 0 : index
    %c109 = arith.constant 109 : index
    %5 = vector.load %arg0[%c0_5, %c109] : memref<16x896xbf16, #tpu.memory_space<vmem>>, vector<16x648xbf16>
    %c0_6 = arith.constant 0 : index
    %c110 = arith.constant 110 : index
    %6 = vector.load %arg0[%c0_6, %c110] : memref<16x896xbf16, #tpu.memory_space<vmem>>, vector<16x648xbf16>
    %c0_7 = arith.constant 0 : index
    %c111 = arith.constant 111 : index
    %7 = vector.load %arg0[%c0_7, %c111] : memref<16x896xbf16, #tpu.memory_space<vmem>>, vector<16x648xbf16>
    %8 = tpu.concatenate %5, %6, %7 in 0 : vector<16x648xbf16>, vector<16x648xbf16>, vector<16x648xbf16> -> vector<48x648xbf16>
    %c0_8 = arith.constant 0 : index
    %c0_9 = arith.constant 0 : index
    %c0_10 = arith.constant 0 : index
    %9 = vector.load %arg3[%c0_8, %c0_9, %c0_10] : memref<3x32x48xbf16, #tpu.memory_space<vmem>>, vector<1x32x48xbf16>
    %10 = vector.shape_cast %9 : vector<1x32x48xbf16> to vector<32x48xbf16>
    %cst_11 = arith.constant dense<0.000000e+00> : vector<32x648xf32>
    %11 = tpu.matmul %10, %8, %cst_11 {dimension_numbers = #tpu.dot_dimension_numbers<[1], [0], [0], [1], [0, 0, 1, 1], [], []>} : vector<32x48xbf16>, vector<48x648xbf16>, vector<32x648xf32> -> vector<32x648xf32>
    %c0_12 = arith.constant 0 : index
    %c127 = arith.constant 127 : index
    %12 = vector.load %arg0[%c0_12, %c127] : memref<16x896xbf16, #tpu.memory_space<vmem>>, vector<16x648xbf16>
    %c0_13 = arith.constant 0 : index
    %c128 = arith.constant 128 : index
    %13 = vector.load %arg0[%c0_13, %c128] : memref<16x896xbf16, #tpu.memory_space<vmem>>, vector<16x648xbf16>
    %c0_14 = arith.constant 0 : index
    %c129 = arith.constant 129 : index
    %14 = vector.load %arg0[%c0_14, %c129] : memref<16x896xbf16, #tpu.memory_space<vmem>>, vector<16x648xbf16>
    %15 = tpu.concatenate %12, %13, %14 in 0 : vector<16x648xbf16>, vector<16x648xbf16>, vector<16x648xbf16> -> vector<48x648xbf16>
    %c1 = arith.constant 1 : index
    %c0_15 = arith.constant 0 : index
    %c0_16 = arith.constant 0 : index
    %16 = vector.load %arg3[%c1, %c0_15, %c0_16] : memref<3x32x48xbf16, #tpu.memory_space<vmem>>, vector<1x32x48xbf16>
    %17 = vector.shape_cast %16 : vector<1x32x48xbf16> to vector<32x48xbf16>
    %cst_17 = arith.constant dense<0.000000e+00> : vector<32x648xf32>
    %18 = tpu.matmul %17, %15, %cst_17 {dimension_numbers = #tpu.dot_dimension_numbers<[1], [0], [0], [1], [0, 0, 1, 1], [], []>} : vector<32x48xbf16>, vector<48x648xbf16>, vector<32x648xf32> -> vector<32x648xf32>
    %19 = arith.addf %11, %18 : vector<32x648xf32>
    %c0_18 = arith.constant 0 : index
    %c145 = arith.constant 145 : index
    %20 = vector.load %arg0[%c0_18, %c145] : memref<16x896xbf16, #tpu.memory_space<vmem>>, vector<16x648xbf16>
    %c0_19 = arith.constant 0 : index
    %c146 = arith.constant 146 : index
    %21 = vector.load %arg0[%c0_19, %c146] : memref<16x896xbf16, #tpu.memory_space<vmem>>, vector<16x648xbf16>
    %c0_20 = arith.constant 0 : index
    %c147 = arith.constant 147 : index
    %22 = vector.load %arg0[%c0_20, %c147] : memref<16x896xbf16, #tpu.memory_space<vmem>>, vector<16x648xbf16>
    %23 = tpu.concatenate %20, %21, %22 in 0 : vector<16x648xbf16>, vector<16x648xbf16>, vector<16x648xbf16> -> vector<48x648xbf16>
    %c2 = arith.constant 2 : index
    %c0_21 = arith.constant 0 : index
    %c0_22 = arith.constant 0 : index
    %24 = vector.load %arg3[%c2, %c0_21, %c0_22] : memref<3x32x48xbf16, #tpu.memory_space<vmem>>, vector<1x32x48xbf16>
    %25 = vector.shape_cast %24 : vector<1x32x48xbf16> to vector<32x48xbf16>
    %cst_23 = arith.constant dense<0.000000e+00> : vector<32x648xf32>
    %26 = tpu.matmul %25, %23, %cst_23 {dimension_numbers = #tpu.dot_dimension_numbers<[1], [0], [0], [1], [0, 0, 1, 1], [], []>} : vector<32x48xbf16>, vector<48x648xbf16>, vector<32x648xf32> -> vector<32x648xf32>
    %27 = arith.addf %19, %26 : vector<32x648xf32>
    %c0_24 = arith.constant 0 : index
    %c0_25 = arith.constant 0 : index
    %28 = vector.load %arg4[%c0_24, %c0_25] : memref<32x1xf32, #tpu.memory_space<vmem>>, vector<32x1xf32>
    %29 = vector.broadcast %28 : vector<32x1xf32> to vector<32x648xf32>
    %30 = arith.addf %27, %29 : vector<32x648xf32>
    %cst_26 = arith.constant 0.000000e+00 : f32
    %31 = vector.broadcast %cst_26 : f32 to vector<32x648xf32>
    %32 = arith.cmpf oge, %30, %31 : vector<32x648xf32>
    %cst_27 = arith.constant 0.00999999977 : f32
    %33 = vector.broadcast %cst_27 : f32 to vector<32x648xf32>
    %34 = arith.mulf %33, %30 : vector<32x648xf32>
    %35 = arith.select %32, %30, %34 : vector<32x648xi1>, vector<32x648xf32>
    %36 = vector.broadcast %0 : vector<1x648xf32> to vector<32x648xf32>
    %37 = arith.mulf %35, %36 : vector<32x648xf32>
    %cst_28 = arith.constant dense<0.000000e+00> : vector<32xf32>
    %38 = vector.multi_reduction <add>, %37, %cst_28 [1] : vector<32x648xf32> to vector<32xf32>
    %39 = vector.shape_cast %38 : vector<32xf32> to vector<32x1xf32>
    %cst_29 = arith.constant 0.001953125 : f32
    %40 = vector.broadcast %cst_29 : f32 to vector<32x1xf32>
    %41 = arith.mulf %39, %40 : vector<32x1xf32>
    %42 = arith.mulf %37, %37 : vector<32x648xf32>
    %cst_30 = arith.constant dense<0.000000e+00> : vector<32xf32>
    %43 = vector.multi_reduction <add>, %42, %cst_30 [1] : vector<32x648xf32> to vector<32xf32>
    %44 = vector.shape_cast %43 : vector<32xf32> to vector<32x1xf32>
    %cst_31 = arith.constant 0.001953125 : f32
    %45 = vector.broadcast %cst_31 : f32 to vector<32x1xf32>
    %46 = arith.mulf %44, %45 : vector<32x1xf32>
    %47 = arith.mulf %41, %41 : vector<32x1xf32>
    %48 = arith.subf %46, %47 : vector<32x1xf32>
    %c0_32 = arith.constant 0 : index
    %c0_33 = arith.constant 0 : index
    %49 = vector.load %arg5[%c0_32, %c0_33] : memref<32x1xf32, #tpu.memory_space<vmem>>, vector<32x1xf32>
    %cst_34 = arith.constant 9.99999974E-6 : f32
    %50 = vector.broadcast %cst_34 : f32 to vector<32x1xf32>
    %51 = arith.addf %48, %50 : vector<32x1xf32>
    %52 = math.rsqrt %51 : vector<32x1xf32>
    %53 = arith.mulf %49, %52 : vector<32x1xf32>
    %c0_35 = arith.constant 0 : index
    %c0_36 = arith.constant 0 : index
    %54 = vector.load %arg6[%c0_35, %c0_36] : memref<32x1xf32, #tpu.memory_space<vmem>>, vector<32x1xf32>
    %55 = arith.mulf %41, %53 : vector<32x1xf32>
    %56 = arith.subf %54, %55 : vector<32x1xf32>
    %57 = vector.broadcast %53 : vector<32x1xf32> to vector<32x648xf32>
    %58 = arith.mulf %37, %57 : vector<32x648xf32>
    %59 = vector.broadcast %56 : vector<32x1xf32> to vector<32x648xf32>
    %60 = vector.broadcast %0 : vector<1x648xf32> to vector<32x648xf32>
    %61 = arith.mulf %59, %60 : vector<32x648xf32>
    %62 = arith.addf %58, %61 : vector<32x648xf32>
    %63 = arith.truncf %62 : vector<32x648xf32> to vector<32x648xbf16>
    %c0_37 = arith.constant 0 : index
    %c128_38 = arith.constant 128 : index
    %64 = vector.load %arg18[%c0_37, %c128_38] : memref<32x896xbf16, #tpu.memory_space<vmem>>, vector<32x648xbf16>
    tpu.vector_store %arg18[%c0_37, %c128_38], %63 {strides = array<i32>} : memref<32x896xbf16, #tpu.memory_space<vmem>>, vector<32x648xbf16>,
    %c0_39 = arith.constant 0 : index
    %c109_40 = arith.constant 109 : index
    %65 = vector.load %arg18[%c0_39, %c109_40] : memref<32x896xbf16, #tpu.memory_space<vmem>>, vector<32x648xbf16>
    %c0_41 = arith.constant 0 : index
    %c110_42 = arith.constant 110 : index
    %66 = vector.load %arg18[%c0_41, %c110_42] : memref<32x896xbf16, #tpu.memory_space<vmem>>, vector<32x648xbf16>
    %c0_43 = arith.constant 0 : index
    %c111_44 = arith.constant 111 : index
    %67 = vector.load %arg18[%c0_43, %c111_44] : memref<32x896xbf16, #tpu.memory_space<vmem>>, vector<32x648xbf16>
    %68 = tpu.concatenate %65, %66, %67 in 0 : vector<32x648xbf16>, vector<32x648xbf16>, vector<32x648xbf16> -> vector<96x648xbf16>
    %c0_45 = arith.constant 0 : index
    %c0_46 = arith.constant 0 : index
    %c0_47 = arith.constant 0 : index
    %69 = vector.load %arg7[%c0_45, %c0_46, %c0_47] : memref<3x32x96xbf16, #tpu.memory_space<vmem>>, vector<1x32x96xbf16>
    %70 = vector.shape_cast %69 : vector<1x32x96xbf16> to vector<32x96xbf16>
    %cst_48 = arith.constant dense<0.000000e+00> : vector<32x648xf32>
    %71 = tpu.matmul %70, %68, %cst_48 {dimension_numbers = #tpu.dot_dimension_numbers<[1], [0], [0], [1], [0, 0, 1, 1], [], []>} : vector<32x96xbf16>, vector<96x648xbf16>, vector<32x648xf32> -> vector<32x648xf32>
    %c0_49 = arith.constant 0 : index
    %c127_50 = arith.constant 127 : index
    %72 = vector.load %arg18[%c0_49, %c127_50] : memref<32x896xbf16, #tpu.memory_space<vmem>>, vector<32x648xbf16>
    %c0_51 = arith.constant 0 : index
    %c128_52 = arith.constant 128 : index
    %73 = vector.load %arg18[%c0_51, %c128_52] : memref<32x896xbf16, #tpu.memory_space<vmem>>, vector<32x648xbf16>
    %c0_53 = arith.constant 0 : index
    %c129_54 = arith.constant 129 : index
    %74 = vector.load %arg18[%c0_53, %c129_54] : memref<32x896xbf16, #tpu.memory_space<vmem>>, vector<32x648xbf16>
    %75 = tpu.concatenate %72, %73, %74 in 0 : vector<32x648xbf16>, vector<32x648xbf16>, vector<32x648xbf16> -> vector<96x648xbf16>
    %c1_55 = arith.constant 1 : index
    %c0_56 = arith.constant 0 : index
    %c0_57 = arith.constant 0 : index
    %76 = vector.load %arg7[%c1_55, %c0_56, %c0_57] : memref<3x32x96xbf16, #tpu.memory_space<vmem>>, vector<1x32x96xbf16>
    %77 = vector.shape_cast %76 : vector<1x32x96xbf16> to vector<32x96xbf16>
    %cst_58 = arith.constant dense<0.000000e+00> : vector<32x648xf32>
    %78 = tpu.matmul %77, %75, %cst_58 {dimension_numbers = #tpu.dot_dimension_numbers<[1], [0], [0], [1], [0, 0, 1, 1], [], []>} : vector<32x96xbf16>, vector<96x648xbf16>, vector<32x648xf32> -> vector<32x648xf32>
    %79 = arith.addf %71, %78 : vector<32x648xf32>
    %c0_59 = arith.constant 0 : index
    %c145_60 = arith.constant 145 : index
    %80 = vector.load %arg18[%c0_59, %c145_60] : memref<32x896xbf16, #tpu.memory_space<vmem>>, vector<32x648xbf16>
    %c0_61 = arith.constant 0 : index
    %c146_62 = arith.constant 146 : index
    %81 = vector.load %arg18[%c0_61, %c146_62] : memref<32x896xbf16, #tpu.memory_space<vmem>>, vector<32x648xbf16>
    %c0_63 = arith.constant 0 : index
    %c147_64 = arith.constant 147 : index
    %82 = vector.load %arg18[%c0_63, %c147_64] : memref<32x896xbf16, #tpu.memory_space<vmem>>, vector<32x648xbf16>
    %83 = tpu.concatenate %80, %81, %82 in 0 : vector<32x648xbf16>, vector<32x648xbf16>, vector<32x648xbf16> -> vector<96x648xbf16>
    %c2_65 = arith.constant 2 : index
    %c0_66 = arith.constant 0 : index
    %c0_67 = arith.constant 0 : index
    %84 = vector.load %arg7[%c2_65, %c0_66, %c0_67] : memref<3x32x96xbf16, #tpu.memory_space<vmem>>, vector<1x32x96xbf16>
    %85 = vector.shape_cast %84 : vector<1x32x96xbf16> to vector<32x96xbf16>
    %cst_68 = arith.constant dense<0.000000e+00> : vector<32x648xf32>
    %86 = tpu.matmul %85, %83, %cst_68 {dimension_numbers = #tpu.dot_dimension_numbers<[1], [0], [0], [1], [0, 0, 1, 1], [], []>} : vector<32x96xbf16>, vector<96x648xbf16>, vector<32x648xf32> -> vector<32x648xf32>
    %87 = arith.addf %79, %86 : vector<32x648xf32>
    %c0_69 = arith.constant 0 : index
    %c0_70 = arith.constant 0 : index
    %88 = vector.load %arg8[%c0_69, %c0_70] : memref<32x1xf32, #tpu.memory_space<vmem>>, vector<32x1xf32>
    %89 = vector.broadcast %88 : vector<32x1xf32> to vector<32x648xf32>
    %90 = arith.addf %87, %89 : vector<32x648xf32>
    %cst_71 = arith.constant 0.000000e+00 : f32
    %91 = vector.broadcast %cst_71 : f32 to vector<32x648xf32>
    %92 = arith.cmpf oge, %90, %91 : vector<32x648xf32>
    %cst_72 = arith.constant 0.00999999977 : f32
    %93 = vector.broadcast %cst_72 : f32 to vector<32x648xf32>
    %94 = arith.mulf %93, %90 : vector<32x648xf32>
    %95 = arith.select %92, %90, %94 : vector<32x648xi1>, vector<32x648xf32>
    %96 = vector.broadcast %0 : vector<1x648xf32> to vector<32x648xf32>
    %97 = arith.mulf %95, %96 : vector<32x648xf32>
    %cst_73 = arith.constant dense<0.000000e+00> : vector<32xf32>
    %98 = vector.multi_reduction <add>, %97, %cst_73 [1] : vector<32x648xf32> to vector<32xf32>
    %99 = vector.shape_cast %98 : vector<32xf32> to vector<32x1xf32>
    %cst_74 = arith.constant 0.001953125 : f32
    %100 = vector.broadcast %cst_74 : f32 to vector<32x1xf32>
    %101 = arith.mulf %99, %100 : vector<32x1xf32>
    %102 = arith.mulf %97, %97 : vector<32x648xf32>
    %cst_75 = arith.constant dense<0.000000e+00> : vector<32xf32>
    %103 = vector.multi_reduction <add>, %102, %cst_75 [1] : vector<32x648xf32> to vector<32xf32>
    %104 = vector.shape_cast %103 : vector<32xf32> to vector<32x1xf32>
    %cst_76 = arith.constant 0.001953125 : f32
    %105 = vector.broadcast %cst_76 : f32 to vector<32x1xf32>
    %106 = arith.mulf %104, %105 : vector<32x1xf32>
    %107 = arith.mulf %101, %101 : vector<32x1xf32>
    %108 = arith.subf %106, %107 : vector<32x1xf32>
    %c0_77 = arith.constant 0 : index
    %c0_78 = arith.constant 0 : index
    %109 = vector.load %arg9[%c0_77, %c0_78] : memref<32x1xf32, #tpu.memory_space<vmem>>, vector<32x1xf32>
    %cst_79 = arith.constant 9.99999974E-6 : f32
    %110 = vector.broadcast %cst_79 : f32 to vector<32x1xf32>
    %111 = arith.addf %108, %110 : vector<32x1xf32>
    %112 = math.rsqrt %111 : vector<32x1xf32>
    %113 = arith.mulf %109, %112 : vector<32x1xf32>
    %c0_80 = arith.constant 0 : index
    %c0_81 = arith.constant 0 : index
    %114 = vector.load %arg10[%c0_80, %c0_81] : memref<32x1xf32, #tpu.memory_space<vmem>>, vector<32x1xf32>
    %115 = arith.mulf %101, %113 : vector<32x1xf32>
    %116 = arith.subf %114, %115 : vector<32x1xf32>
    %117 = vector.broadcast %113 : vector<32x1xf32> to vector<32x648xf32>
    %118 = arith.mulf %97, %117 : vector<32x648xf32>
    %119 = vector.broadcast %116 : vector<32x1xf32> to vector<32x648xf32>
    %120 = vector.broadcast %0 : vector<1x648xf32> to vector<32x648xf32>
    %121 = arith.mulf %119, %120 : vector<32x648xf32>
    %122 = arith.addf %118, %121 : vector<32x648xf32>
    %123 = arith.truncf %122 : vector<32x648xf32> to vector<32x648xbf16>
    %c0_82 = arith.constant 0 : index
    %c128_83 = arith.constant 128 : index
    %124 = vector.load %arg18[%c0_82, %c128_83] : memref<32x896xbf16, #tpu.memory_space<vmem>>, vector<32x648xbf16>
    tpu.vector_store %arg18[%c0_82, %c128_83], %123 {strides = array<i32>} : memref<32x896xbf16, #tpu.memory_space<vmem>>, vector<32x648xbf16>,
    %c0_84 = arith.constant 0 : index
    %c109_85 = arith.constant 109 : index
    %125 = vector.load %arg18[%c0_84, %c109_85] : memref<32x896xbf16, #tpu.memory_space<vmem>>, vector<32x648xbf16>
    %c0_86 = arith.constant 0 : index
    %c110_87 = arith.constant 110 : index
    %126 = vector.load %arg18[%c0_86, %c110_87] : memref<32x896xbf16, #tpu.memory_space<vmem>>, vector<32x648xbf16>
    %c0_88 = arith.constant 0 : index
    %c111_89 = arith.constant 111 : index
    %127 = vector.load %arg18[%c0_88, %c111_89] : memref<32x896xbf16, #tpu.memory_space<vmem>>, vector<32x648xbf16>
    %128 = tpu.concatenate %125, %126, %127 in 0 : vector<32x648xbf16>, vector<32x648xbf16>, vector<32x648xbf16> -> vector<96x648xbf16>
    %c0_90 = arith.constant 0 : index
    %c0_91 = arith.constant 0 : index
    %c0_92 = arith.constant 0 : index
    %129 = vector.load %arg11[%c0_90, %c0_91, %c0_92] : memref<3x32x96xbf16, #tpu.memory_space<vmem>>, vector<1x32x96xbf16>
    %130 = vector.shape_cast %129 : vector<1x32x96xbf16> to vector<32x96xbf16>
    %cst_93 = arith.constant dense<0.000000e+00> : vector<32x648xf32>
    %131 = tpu.matmul %130, %128, %cst_93 {dimension_numbers = #tpu.dot_dimension_numbers<[1], [0], [0], [1], [0, 0, 1, 1], [], []>} : vector<32x96xbf16>, vector<96x648xbf16>, vector<32x648xf32> -> vector<32x648xf32>
    %c0_94 = arith.constant 0 : index
    %c127_95 = arith.constant 127 : index
    %132 = vector.load %arg18[%c0_94, %c127_95] : memref<32x896xbf16, #tpu.memory_space<vmem>>, vector<32x648xbf16>
    %c0_96 = arith.constant 0 : index
    %c128_97 = arith.constant 128 : index
    %133 = vector.load %arg18[%c0_96, %c128_97] : memref<32x896xbf16, #tpu.memory_space<vmem>>, vector<32x648xbf16>
    %c0_98 = arith.constant 0 : index
    %c129_99 = arith.constant 129 : index
    %134 = vector.load %arg18[%c0_98, %c129_99] : memref<32x896xbf16, #tpu.memory_space<vmem>>, vector<32x648xbf16>
    %135 = tpu.concatenate %132, %133, %134 in 0 : vector<32x648xbf16>, vector<32x648xbf16>, vector<32x648xbf16> -> vector<96x648xbf16>
    %c1_100 = arith.constant 1 : index
    %c0_101 = arith.constant 0 : index
    %c0_102 = arith.constant 0 : index
    %136 = vector.load %arg11[%c1_100, %c0_101, %c0_102] : memref<3x32x96xbf16, #tpu.memory_space<vmem>>, vector<1x32x96xbf16>
    %137 = vector.shape_cast %136 : vector<1x32x96xbf16> to vector<32x96xbf16>
    %cst_103 = arith.constant dense<0.000000e+00> : vector<32x648xf32>
    %138 = tpu.matmul %137, %135, %cst_103 {dimension_numbers = #tpu.dot_dimension_numbers<[1], [0], [0], [1], [0, 0, 1, 1], [], []>} : vector<32x96xbf16>, vector<96x648xbf16>, vector<32x648xf32> -> vector<32x648xf32>
    %139 = arith.addf %131, %138 : vector<32x648xf32>
    %c0_104 = arith.constant 0 : index
    %c145_105 = arith.constant 145 : index
    %140 = vector.load %arg18[%c0_104, %c145_105] : memref<32x896xbf16, #tpu.memory_space<vmem>>, vector<32x648xbf16>
    %c0_106 = arith.constant 0 : index
    %c146_107 = arith.constant 146 : index
    %141 = vector.load %arg18[%c0_106, %c146_107] : memref<32x896xbf16, #tpu.memory_space<vmem>>, vector<32x648xbf16>
    %c0_108 = arith.constant 0 : index
    %c147_109 = arith.constant 147 : index
    %142 = vector.load %arg18[%c0_108, %c147_109] : memref<32x896xbf16, #tpu.memory_space<vmem>>, vector<32x648xbf16>
    %143 = tpu.concatenate %140, %141, %142 in 0 : vector<32x648xbf16>, vector<32x648xbf16>, vector<32x648xbf16> -> vector<96x648xbf16>
    %c2_110 = arith.constant 2 : index
    %c0_111 = arith.constant 0 : index
    %c0_112 = arith.constant 0 : index
    %144 = vector.load %arg11[%c2_110, %c0_111, %c0_112] : memref<3x32x96xbf16, #tpu.memory_space<vmem>>, vector<1x32x96xbf16>
    %145 = vector.shape_cast %144 : vector<1x32x96xbf16> to vector<32x96xbf16>
    %cst_113 = arith.constant dense<0.000000e+00> : vector<32x648xf32>
    %146 = tpu.matmul %145, %143, %cst_113 {dimension_numbers = #tpu.dot_dimension_numbers<[1], [0], [0], [1], [0, 0, 1, 1], [], []>} : vector<32x96xbf16>, vector<96x648xbf16>, vector<32x648xf32> -> vector<32x648xf32>
    %147 = arith.addf %139, %146 : vector<32x648xf32>
    %c0_114 = arith.constant 0 : index
    %c0_115 = arith.constant 0 : index
    %148 = vector.load %arg12[%c0_114, %c0_115] : memref<32x1xf32, #tpu.memory_space<vmem>>, vector<32x1xf32>
    %149 = vector.broadcast %148 : vector<32x1xf32> to vector<32x648xf32>
    %150 = arith.addf %147, %149 : vector<32x648xf32>
    %cst_116 = arith.constant 0.000000e+00 : f32
    %151 = vector.broadcast %cst_116 : f32 to vector<32x648xf32>
    %152 = arith.cmpf oge, %150, %151 : vector<32x648xf32>
    %cst_117 = arith.constant 0.00999999977 : f32
    %153 = vector.broadcast %cst_117 : f32 to vector<32x648xf32>
    %154 = arith.mulf %153, %150 : vector<32x648xf32>
    %155 = arith.select %152, %150, %154 : vector<32x648xi1>, vector<32x648xf32>
    %156 = vector.broadcast %0 : vector<1x648xf32> to vector<32x648xf32>
    %157 = arith.mulf %155, %156 : vector<32x648xf32>
    %cst_118 = arith.constant dense<0.000000e+00> : vector<32xf32>
    %158 = vector.multi_reduction <add>, %157, %cst_118 [1] : vector<32x648xf32> to vector<32xf32>
    %159 = vector.shape_cast %158 : vector<32xf32> to vector<32x1xf32>
    %cst_119 = arith.constant 0.001953125 : f32
    %160 = vector.broadcast %cst_119 : f32 to vector<32x1xf32>
    %161 = arith.mulf %159, %160 : vector<32x1xf32>
    %162 = arith.mulf %157, %157 : vector<32x648xf32>
    %cst_120 = arith.constant dense<0.000000e+00> : vector<32xf32>
    %163 = vector.multi_reduction <add>, %162, %cst_120 [1] : vector<32x648xf32> to vector<32xf32>
    %164 = vector.shape_cast %163 : vector<32xf32> to vector<32x1xf32>
    %cst_121 = arith.constant 0.001953125 : f32
    %165 = vector.broadcast %cst_121 : f32 to vector<32x1xf32>
    %166 = arith.mulf %164, %165 : vector<32x1xf32>
    %167 = arith.mulf %161, %161 : vector<32x1xf32>
    %168 = arith.subf %166, %167 : vector<32x1xf32>
    %c0_122 = arith.constant 0 : index
    %c0_123 = arith.constant 0 : index
    %169 = vector.load %arg13[%c0_122, %c0_123] : memref<32x1xf32, #tpu.memory_space<vmem>>, vector<32x1xf32>
    %cst_124 = arith.constant 9.99999974E-6 : f32
    %170 = vector.broadcast %cst_124 : f32 to vector<32x1xf32>
    %171 = arith.addf %168, %170 : vector<32x1xf32>
    %172 = math.rsqrt %171 : vector<32x1xf32>
    %173 = arith.mulf %169, %172 : vector<32x1xf32>
    %c0_125 = arith.constant 0 : index
    %c0_126 = arith.constant 0 : index
    %174 = vector.load %arg14[%c0_125, %c0_126] : memref<32x1xf32, #tpu.memory_space<vmem>>, vector<32x1xf32>
    %175 = arith.mulf %161, %173 : vector<32x1xf32>
    %176 = arith.subf %174, %175 : vector<32x1xf32>
    %177 = vector.broadcast %173 : vector<32x1xf32> to vector<32x648xf32>
    %178 = arith.mulf %157, %177 : vector<32x648xf32>
    %179 = vector.broadcast %176 : vector<32x1xf32> to vector<32x648xf32>
    %180 = vector.broadcast %0 : vector<1x648xf32> to vector<32x648xf32>
    %181 = arith.mulf %179, %180 : vector<32x648xf32>
    %182 = arith.addf %178, %181 : vector<32x648xf32>
    %183 = arith.truncf %182 : vector<32x648xf32> to vector<32x648xbf16>
    %c0_127 = arith.constant 0 : index
    %c128_128 = arith.constant 128 : index
    %184 = vector.load %arg18[%c0_127, %c128_128] : memref<32x896xbf16, #tpu.memory_space<vmem>>, vector<32x648xbf16>
    tpu.vector_store %arg18[%c0_127, %c128_128], %183 {strides = array<i32>} : memref<32x896xbf16, #tpu.memory_space<vmem>>, vector<32x648xbf16>,
    %c0_129 = arith.constant 0 : index
    %c109_130 = arith.constant 109 : index
    %185 = vector.load %arg18[%c0_129, %c109_130] : memref<32x896xbf16, #tpu.memory_space<vmem>>, vector<32x648xbf16>
    %c0_131 = arith.constant 0 : index
    %c110_132 = arith.constant 110 : index
    %186 = vector.load %arg18[%c0_131, %c110_132] : memref<32x896xbf16, #tpu.memory_space<vmem>>, vector<32x648xbf16>
    %c0_133 = arith.constant 0 : index
    %c111_134 = arith.constant 111 : index
    %187 = vector.load %arg18[%c0_133, %c111_134] : memref<32x896xbf16, #tpu.memory_space<vmem>>, vector<32x648xbf16>
    %188 = tpu.concatenate %185, %186, %187 in 0 : vector<32x648xbf16>, vector<32x648xbf16>, vector<32x648xbf16> -> vector<96x648xbf16>
    %c0_135 = arith.constant 0 : index
    %c0_136 = arith.constant 0 : index
    %c0_137 = arith.constant 0 : index
    %189 = vector.load %arg15[%c0_135, %c0_136, %c0_137] : memref<3x1x96xbf16, #tpu.memory_space<vmem>>, vector<1x1x96xbf16>
    %190 = vector.shape_cast %189 : vector<1x1x96xbf16> to vector<1x96xbf16>
    %cst_138 = arith.constant dense<0.000000e+00> : vector<1x648xf32>
    %191 = tpu.matmul %190, %188, %cst_138 {dimension_numbers = #tpu.dot_dimension_numbers<[1], [0], [0], [1], [0, 0, 1, 1], [], []>} : vector<1x96xbf16>, vector<96x648xbf16>, vector<1x648xf32> -> vector<1x648xf32>
    %c0_139 = arith.constant 0 : index
    %c127_140 = arith.constant 127 : index
    %192 = vector.load %arg18[%c0_139, %c127_140] : memref<32x896xbf16, #tpu.memory_space<vmem>>, vector<32x648xbf16>
    %c0_141 = arith.constant 0 : index
    %c128_142 = arith.constant 128 : index
    %193 = vector.load %arg18[%c0_141, %c128_142] : memref<32x896xbf16, #tpu.memory_space<vmem>>, vector<32x648xbf16>
    %c0_143 = arith.constant 0 : index
    %c129_144 = arith.constant 129 : index
    %194 = vector.load %arg18[%c0_143, %c129_144] : memref<32x896xbf16, #tpu.memory_space<vmem>>, vector<32x648xbf16>
    %195 = tpu.concatenate %192, %193, %194 in 0 : vector<32x648xbf16>, vector<32x648xbf16>, vector<32x648xbf16> -> vector<96x648xbf16>
    %c1_145 = arith.constant 1 : index
    %c0_146 = arith.constant 0 : index
    %c0_147 = arith.constant 0 : index
    %196 = vector.load %arg15[%c1_145, %c0_146, %c0_147] : memref<3x1x96xbf16, #tpu.memory_space<vmem>>, vector<1x1x96xbf16>
    %197 = vector.shape_cast %196 : vector<1x1x96xbf16> to vector<1x96xbf16>
    %cst_148 = arith.constant dense<0.000000e+00> : vector<1x648xf32>
    %198 = tpu.matmul %197, %195, %cst_148 {dimension_numbers = #tpu.dot_dimension_numbers<[1], [0], [0], [1], [0, 0, 1, 1], [], []>} : vector<1x96xbf16>, vector<96x648xbf16>, vector<1x648xf32> -> vector<1x648xf32>
    %199 = arith.addf %191, %198 : vector<1x648xf32>
    %c0_149 = arith.constant 0 : index
    %c145_150 = arith.constant 145 : index
    %200 = vector.load %arg18[%c0_149, %c145_150] : memref<32x896xbf16, #tpu.memory_space<vmem>>, vector<32x648xbf16>
    %c0_151 = arith.constant 0 : index
    %c146_152 = arith.constant 146 : index
    %201 = vector.load %arg18[%c0_151, %c146_152] : memref<32x896xbf16, #tpu.memory_space<vmem>>, vector<32x648xbf16>
    %c0_153 = arith.constant 0 : index
    %c147_154 = arith.constant 147 : index
    %202 = vector.load %arg18[%c0_153, %c147_154] : memref<32x896xbf16, #tpu.memory_space<vmem>>, vector<32x648xbf16>
    %203 = tpu.concatenate %200, %201, %202 in 0 : vector<32x648xbf16>, vector<32x648xbf16>, vector<32x648xbf16> -> vector<96x648xbf16>
    %c2_155 = arith.constant 2 : index
    %c0_156 = arith.constant 0 : index
    %c0_157 = arith.constant 0 : index
    %204 = vector.load %arg15[%c2_155, %c0_156, %c0_157] : memref<3x1x96xbf16, #tpu.memory_space<vmem>>, vector<1x1x96xbf16>
    %205 = vector.shape_cast %204 : vector<1x1x96xbf16> to vector<1x96xbf16>
    %cst_158 = arith.constant dense<0.000000e+00> : vector<1x648xf32>
    %206 = tpu.matmul %205, %203, %cst_158 {dimension_numbers = #tpu.dot_dimension_numbers<[1], [0], [0], [1], [0, 0, 1, 1], [], []>} : vector<1x96xbf16>, vector<96x648xbf16>, vector<1x648xf32> -> vector<1x648xf32>
    %207 = arith.addf %199, %206 : vector<1x648xf32>
    %c0_159 = arith.constant 0 : index
    %c0_160 = arith.constant 0 : index
    %208 = vector.load %arg16[%c0_159, %c0_160] : memref<1x1xf32, #tpu.memory_space<vmem>>, vector<1x1xf32>
    %209 = vector.broadcast %208 : vector<1x1xf32> to vector<1x648xf32>
    %210 = arith.addf %207, %209 : vector<1x648xf32>
    %c0_161 = arith.constant 0 : index
    %c0_162 = arith.constant 0 : index
    %211 = vector.load %arg2[%c0_161, %c0_162] : memref<2x648xf32, #tpu.memory_space<vmem>>, vector<2x648xf32>
    %212 = vector.broadcast %210 : vector<1x648xf32> to vector<2x648xf32>
    %213 = arith.mulf %211, %212 : vector<2x648xf32>
    %cst_163 = arith.constant dense<0.000000e+00> : vector<2xf32>
    %214 = vector.multi_reduction <add>, %213, %cst_163 [1] : vector<2x648xf32> to vector<2xf32>
    %215 = vector.shape_cast %214 : vector<2xf32> to vector<2x1xf32>
    %c0_164 = arith.constant 0 : index
    %c0_165 = arith.constant 0 : index
    %216 = vector.load %arg17[%c0_164, %c0_165] : memref<2x1xf32, #tpu.memory_space<vmem>>, vector<2x1xf32>
    tpu.vector_store %arg17[%c0_164, %c0_165], %215 {strides = array<i32>} : memref<2x1xf32, #tpu.memory_space<vmem>>, vector<2x1xf32>,
    return
  }
}

</mosaic_0001>

<llo_original>
// kernel: tpu_custom_call.1
$region0: #{tpu_custom_call.1}
  #allocation0 [shape = 'u32[]', space=smem, size = 0x4, offset = 0x4, fixed_abs, tag = 'smem constant byte address 0x4 - core index']
  #allocation1 [shape = 'u32[144,128]{1,0:T(1,128)}', space=vmem, size = 0x12000, scoped, tag = 'internal scratch']
  #allocation2 [shape = 'bf16[32,896]{1,0:T(16,128)(2,1)}', space=vmem, size = 0xe000, scoped, tag = 'scratch operand']
  #allocation3 [shape = 'f32[1,1]{1,0:T(1,128)S(1)}', space=vmem, size = 0x200, scoped, tag = 'scoped memory for tpu_custom_call.1']
  %s0 = inlined_call_operand.vmem [shape: bf16[16,896], index: 0, kind: input, shape index: {}]
  %s1 = inlined_call_operand.vmem [shape: f32[1,648], index: 1, kind: input, shape index: {}]
  %s2 = inlined_call_operand.vmem [shape: f32[2,648], index: 2, kind: input, shape index: {}]
  %s3 = inlined_call_operand.vmem [shape: bf16[3,32,48], index: 3, kind: input, shape index: {}]
  %s4 = inlined_call_operand.vmem [shape: f32[32,1], index: 4, kind: input, shape index: {}]
  %s5 = inlined_call_operand.vmem [shape: f32[32,1], index: 5, kind: input, shape index: {}]
  %s6 = inlined_call_operand.vmem [shape: f32[32,1], index: 6, kind: input, shape index: {}]
  %s7 = inlined_call_operand.vmem [shape: bf16[3,32,96], index: 7, kind: input, shape index: {}]
  %s8 = inlined_call_operand.vmem [shape: f32[32,1], index: 8, kind: input, shape index: {}]
  %s9 = inlined_call_operand.vmem [shape: f32[32,1], index: 9, kind: input, shape index: {}]
  %s10 = inlined_call_operand.vmem [shape: f32[32,1], index: 10, kind: input, shape index: {}]
  %s11 = inlined_call_operand.vmem [shape: bf16[3,32,96], index: 11, kind: input, shape index: {}]
  %s12 = inlined_call_operand.vmem [shape: f32[32,1], index: 12, kind: input, shape index: {}]
  %s13 = inlined_call_operand.vmem [shape: f32[32,1], index: 13, kind: input, shape index: {}]
  %s14 = inlined_call_operand.vmem [shape: f32[32,1], index: 14, kind: input, shape index: {}]
  %s15 = inlined_call_operand.vmem [shape: bf16[3,1,96], index: 15, kind: input, shape index: {}]
  %s16 = inlined_call_operand.<no memory space> [shape: f32[1,1], index: 16, kind: input, shape index: {}]
  %s17 = inlined_call_operand.vmem [shape: f32[2,1], index: 17, kind: output, shape index: {}]
  %s18 = sld [smem:[#allocation0]]
  $region78: #{tpu_custom_call.1} parent=0
    _
  %s20 = ssub.s32 1, %s18
  %s21 = scalar_select 0, %s20, %s18
  %v22 = vstv %s16
  %23 = vst [vmem:[#allocation3] sm:$0x1] %v22
  // Predicated region
  $region2: #{tpu_custom_call.1} parent=0 // pred_check
    _
  $region3: #{tpu_custom_call.1} parent=0 // pred_check_branch
    %25 = sbr.rel (0) target = $region5
  $region4: #{tpu_custom_call.1} parent=0 // pred_region
    _
  $region5: #{tpu_custom_call.1} parent=0 // pred_fallthru
    _
  // Predicated region
  $region6: #{tpu_custom_call.1} parent=0 // pred_check
    _
  $region7: #{tpu_custom_call.1} parent=0 // pred_check_branch
    %27 = sbr.rel (0) target = $region9
  $region8: #{tpu_custom_call.1} parent=0 // pred_region
    _
  $region9: #{tpu_custom_call.1} parent=0 // pred_fallthru
    _
  // Predicated region
  $region10: #{tpu_custom_call.1} parent=0 // pred_check
    _
  $region11: #{tpu_custom_call.1} parent=0 // pred_check_branch
    %29 = sbr.rel (0) target = $region13
  $region12: #{tpu_custom_call.1} parent=0 // pred_region
    _
  $region13: #{tpu_custom_call.1} parent=0 // pred_fallthru
    _
  // Predicated region
  $region14: #{tpu_custom_call.1} parent=0 // pred_check
    _
  $region15: #{tpu_custom_call.1} parent=0 // pred_check_branch
    %31 = sbr.rel (0) target = $region17
  $region16: #{tpu_custom_call.1} parent=0 // pred_region
    _
  $region17: #{tpu_custom_call.1} parent=0 // pred_fallthru
    _
  // Predicated region
  $region18: #{tpu_custom_call.1} parent=0 // pred_check
    _
  $region19: #{tpu_custom_call.1} parent=0 // pred_check_branch
    %33 = sbr.rel (0) target = $region21
  $region20: #{tpu_custom_call.1} parent=0 // pred_region
    _
  $region21: #{tpu_custom_call.1} parent=0 // pred_fallthru
    _
  // Predicated region
  $region22: #{tpu_custom_call.1} parent=0 // pred_check
    _
  $region23: #{tpu_custom_call.1} parent=0 // pred_check_branch
    %35 = sbr.rel (0) target = $region25
  $region24: #{tpu_custom_call.1} parent=0 // pred_region
    _
  $region25: #{tpu_custom_call.1} parent=0 // pred_fallthru
    _
  // Predicated region
  $region26: #{tpu_custom_call.1} parent=0 // pred_check
    _
  $region27: #{tpu_custom_call.1} parent=0 // pred_check_branch
    %37 = sbr.rel (0) target = $region29
  $region28: #{tpu_custom_call.1} parent=0 // pred_region
    _
  $region29: #{tpu_custom_call.1} parent=0 // pred_fallthru
    _
  // Predicated region
  $region30: #{tpu_custom_call.1} parent=0 // pred_check
    _
  $region31: #{tpu_custom_call.1} parent=0 // pred_check_branch
    %39 = sbr.rel (0) target = $region33
  $region32: #{tpu_custom_call.1} parent=0 // pred_region
    _
  $region33: #{tpu_custom_call.1} parent=0 // pred_fallthru
    _
  // Predicated region
  $region34: #{tpu_custom_call.1} parent=0 // pred_check
    _
  $region35: #{tpu_custom_call.1} parent=0 // pred_check_branch
    %41 = sbr.rel (0) target = $region37
  $region36: #{tpu_custom_call.1} parent=0 // pred_region
    _
  $region37: #{tpu_custom_call.1} parent=0 // pred_fallthru
    _
  // Predicated region
  $region38: #{tpu_custom_call.1} parent=0 // pred_check
    _
  $region39: #{tpu_custom_call.1} parent=0 // pred_check_branch
    %43 = sbr.rel (0) target = $region41
  $region40: #{tpu_custom_call.1} parent=0 // pred_region
    _
  $region41: #{tpu_custom_call.1} parent=0 // pred_fallthru
    _
  // Predicated region
  $region42: #{tpu_custom_call.1} parent=0 // pred_check
    _
  $region43: #{tpu_custom_call.1} parent=0 // pred_check_branch
    %45 = sbr.rel (0) target = $region45
  $region44: #{tpu_custom_call.1} parent=0 // pred_region
    _
  $region45: #{tpu_custom_call.1} parent=0 // pred_fallthru
    _
  // Predicated region
  $region46: #{tpu_custom_call.1} parent=0 // pred_check
    _
  $region47: #{tpu_custom_call.1} parent=0 // pred_check_branch
    %47 = sbr.rel (0) target = $region49
  $region48: #{tpu_custom_call.1} parent=0 // pred_region
    _
  $region49: #{tpu_custom_call.1} parent=0 // pred_fallthru
    _
  // Predicated region
  $region50: #{tpu_custom_call.1} parent=0 // pred_check
    _
  $region51: #{tpu_custom_call.1} parent=0 // pred_check_branch
    %49 = sbr.rel (0) target = $region53
  $region52: #{tpu_custom_call.1} parent=0 // pred_region
    _
  $region53: #{tpu_custom_call.1} parent=0 // pred_fallthru
    _
  // Predicated region
  $region54: #{tpu_custom_call.1} parent=0 // pred_check
    _
  $region55: #{tpu_custom_call.1} parent=0 // pred_check_branch
    %51 = sbr.rel (0) target = $region57
  $region56: #{tpu_custom_call.1} parent=0 // pred_region
    _
  $region57: #{tpu_custom_call.1} parent=0 // pred_fallthru
    _
  // Predicated region
  $region58: #{tpu_custom_call.1} parent=0 // pred_check
    _
  $region59: #{tpu_custom_call.1} parent=0 // pred_check_branch
    %53 = sbr.rel (0) target = $region61
  $region60: #{tpu_custom_call.1} parent=0 // pred_region
    _
  $region61: #{tpu_custom_call.1} parent=0 // pred_fallthru
    _
  // Predicated region
  $region62: #{tpu_custom_call.1} parent=0 // pred_check
    _
  $region63: #{tpu_custom_call.1} parent=0 // pred_check_branch
    %55 = sbr.rel (0) target = $region65
  $region64: #{tpu_custom_call.1} parent=0 // pred_region
    _
  $region65: #{tpu_custom_call.1} parent=0 // pred_fallthru
    _
  // Predicated region
  $region66: #{tpu_custom_call.1} parent=0 // pred_check
    _
  $region67: #{tpu_custom_call.1} parent=0 // pred_check_branch
    %57 = sbr.rel (0) target = $region69
  $region68: #{tpu_custom_call.1} parent=0 // pred_region
    _
  $region69: #{tpu_custom_call.1} parent=0 // pred_fallthru
    _
  %v59 = vld [vmem:[%s1] sm:$0x3f]
  %60 = vst [vmem:[#allocation2] sm:$0xff] 0
  %61 = vst [vmem:[#allocation2 + $0x38] sm:$0xff] 0
  %vm62 = vcmask 1047616
  %63 = vst.msk [vmem:[#allocation2 + $0x30] sm:$0xff] %vm62, 0
  %64 = vst.msk [vmem:[#allocation2 + $0x68] sm:$0xff] %vm62, 0
  %v65 = vld [vmem:[%s0] sm:$0xff]
  %v66 = vld [vmem:[%s0 + $0x8] sm:$0xff]
  %v67 = vld [vmem:[%s0 + $0x10] sm:$0xff]
  %v68 = vld [vmem:[%s0 + $0x1c] sm:$0xff]
  %v69 = vld [vmem:[%s0 + $0x24] sm:$0xff]
  %v70 = vld [vmem:[%s0 + $0x2c] sm:$0xff]
  %v77 = vunpack.c.l.b16 %v65
  %v78 = vunpack.c.h.b16 %v65
  %v79 = vunpack.c.l.b16 %v66
  %v80 = vunpack.c.h.b16 %v66
  %v81 = vunpack.c.l.b16 %v67
  %v82 = vunpack.c.h.b16 %v67
  %v83 = vunpack.c.l.b16 %v68
  %v84 = vunpack.c.h.b16 %v68
  %v85 = vunpack.c.l.b16 %v69
  %v86 = vunpack.c.h.b16 %v69
  %v87 = vunpack.c.l.b16 %v70
  %v88 = vunpack.c.h.b16 %v70
  %v89 = vpack.c.b16 %v83, %v77
  %v90 = vpack.c.b16 %v84, %v78
  %v91 = vpack.c.b16 %v85, %v79
  %v92 = vpack.c.b16 %v86, %v80
  %v93 = vpack.c.b16 %v87, %v81
  %v94 = vpack.c.b16 %v88, %v82
  %95 = vrot.lane.b32.xlu0 %v89, 127
  %v96 = vpop.permute.xlu0 %95
  %97 = vrot.lane.b32.xlu0 %v90, 127
  %v98 = vpop.permute.xlu0 %97
  %99 = vrot.lane.b32.xlu0 %v91, 127
  %v100 = vpop.permute.xlu0 %99
  %101 = vrot.lane.b32.xlu0 %v92, 127
  %v102 = vpop.permute.xlu0 %101
  %103 = vrot.lane.b32.xlu0 %v93, 127
  %v104 = vpop.permute.xlu0 %103
  %105 = vrot.lane.b32.xlu0 %v94, 127
  %v106 = vpop.permute.xlu0 %105
  %vm107 = vcmask 1039360
  %v108 = vsel %vm107, %v96, %v98
  %v109 = vsel %vm107, %v98, %v100
  %v110 = vsel %vm107, %v100, %v102
  %v111 = vsel %vm107, %v102, %v104
  %v112 = vsel %vm107, %v104, %v106
  %113 = vrot.lane.b32.xlu0 %v89, 126
  %v114 = vpop.permute.xlu0 %113
  %115 = vrot.lane.b32.xlu0 %v90, 126
  %v116 = vpop.permute.xlu0 %115
  %117 = vrot.lane.b32.xlu0 %v91, 126
  %v118 = vpop.permute.xlu0 %117
  %119 = vrot.lane.b32.xlu0 %v92, 126
  %v120 = vpop.permute.xlu0 %119
  %121 = vrot.lane.b32.xlu0 %v93, 126
  %v122 = vpop.permute.xlu0 %121
  %123 = vrot.lane.b32.xlu0 %v94, 126
  %v124 = vpop.permute.xlu0 %123
  %vm125 = vcmask 1031168
  %v126 = vsel %vm125, %v114, %v116
  %v127 = vsel %vm125, %v116, %v118
  %v128 = vsel %vm125, %v118, %v120
  %v129 = vsel %vm125, %v120, %v122
  %v130 = vsel %vm125, %v122, %v124
  %v131 = vld [vmem:[%s3] sm:$0xf]
  %v132 = vld [vmem:[%s3 + $0x4] sm:$0xf]
  %v133 = vld [vmem:[%s3 + $0x8] sm:$0xf]
  %v134 = vld [vmem:[%s3 + $0xc] sm:$0xf]
  %v135 = vld [vmem:[%s0] sm:$0xff]
  %v136 = vld [vmem:[%s0 + $0x8] sm:$0xff]
  %v137 = vld [vmem:[%s0 + $0x10] sm:$0xff]
  %v138 = vld [vmem:[%s0 + $0x18] sm:$0xf]
  %v139 = vld [vmem:[%s0 + $0x1c] sm:$0xff]
  %v140 = vld [vmem:[%s0 + $0x24] sm:$0xff]
  %v141 = vld [vmem:[%s0 + $0x2c] sm:$0xff]
  %v142 = vld [vmem:[%s0 + $0x34] sm:$0xf]
  %v143 = vld [vmem:[%s0 + $0x4] sm:$0xff]
  %v144 = vld [vmem:[%s0 + $0xc] sm:$0xff]
  %v145 = vld [vmem:[%s0 + $0x14] sm:$0xff]
  %v146 = vld [vmem:[%s0 + $0x20] sm:$0xff]
  %v147 = vld [vmem:[%s0 + $0x28] sm:$0xff]
  %v148 = vld [vmem:[%s0 + $0x30] sm:$0xff]
  %v157 = vunpack.c.l.b16 %v135
  %v158 = vunpack.c.h.b16 %v135
  %v159 = vunpack.c.l.b16 %v136
  %v160 = vunpack.c.h.b16 %v136
  %v161 = vunpack.c.l.b16 %v137
  %v162 = vunpack.c.h.b16 %v137
  %v163 = vunpack.c.l.b16 %v138
  %v164 = vunpack.c.l.b16 %v139
  %v165 = vunpack.c.h.b16 %v139
  %v166 = vunpack.c.l.b16 %v140
  %v167 = vunpack.c.h.b16 %v140
  %v168 = vunpack.c.l.b16 %v141
  %v169 = vunpack.c.h.b16 %v141
  %v170 = vunpack.c.l.b16 %v142
  %v171 = vpack.c.b16 %v164, %v157
  %v172 = vpack.c.b16 %v165, %v158
  %v173 = vpack.c.b16 %v166, %v159
  %v174 = vpack.c.b16 %v167, %v160
  %v175 = vpack.c.b16 %v168, %v161
  %v176 = vpack.c.b16 %v169, %v162
  %v177 = vpack.c.b16 %v170, %v163
  %v184 = vunpack.c.l.b16 %v143
  %v185 = vunpack.c.h.b16 %v143
  %v186 = vunpack.c.l.b16 %v144
  %v187 = vunpack.c.h.b16 %v144
  %v188 = vunpack.c.l.b16 %v145
  %v189 = vunpack.c.h.b16 %v145
  %v190 = vunpack.c.l.b16 %v146
  %v191 = vunpack.c.h.b16 %v146
  %v192 = vunpack.c.l.b16 %v147
  %v193 = vunpack.c.h.b16 %v147
  %v194 = vunpack.c.l.b16 %v148
  %v195 = vunpack.c.h.b16 %v148
  %v196 = vpack.c.b16 %v190, %v184
  %v197 = vpack.c.b16 %v191, %v185
  %v198 = vpack.c.b16 %v192, %v186
  %v199 = vpack.c.b16 %v193, %v187
  %v200 = vpack.c.b16 %v194, %v188
  %v201 = vpack.c.b16 %v195, %v189
  %202 = vrot.lane.b32.xlu0 %v196, 127
  %v203 = vpop.permute.xlu0 %202
  %204 = vrot.lane.b32.xlu0 %v197, 127
  %v205 = vpop.permute.xlu0 %204
  %206 = vrot.lane.b32.xlu0 %v198, 127
  %v207 = vpop.permute.xlu0 %206
  %208 = vrot.lane.b32.xlu0 %v199, 127
  %v209 = vpop.permute.xlu0 %208
  %210 = vrot.lane.b32.xlu0 %v200, 127
  %v211 = vpop.permute.xlu0 %210
  %212 = vrot.lane.b32.xlu0 %v201, 127
  %v213 = vpop.permute.xlu0 %212
  %v214 = vsel %vm107, %v203, %v205
  %v215 = vsel %vm107, %v205, %v207
  %v216 = vsel %vm107, %v207, %v209
  %v217 = vsel %vm107, %v209, %v211
  %v218 = vsel %vm107, %v211, %v213
  %219 = vrot.lane.b32.xlu0 %v196, 126
  %v220 = vpop.permute.xlu0 %219
  %221 = vrot.lane.b32.xlu0 %v197, 126
  %v222 = vpop.permute.xlu0 %221
  %223 = vrot.lane.b32.xlu0 %v198, 126
  %v224 = vpop.permute.xlu0 %223
  %225 = vrot.lane.b32.xlu0 %v199, 126
  %v226 = vpop.permute.xlu0 %225
  %227 = vrot.lane.b32.xlu0 %v200, 126
  %v228 = vpop.permute.xlu0 %227
  %229 = vrot.lane.b32.xlu0 %v201, 126
  %v230 = vpop.permute.xlu0 %229
  %v231 = vsel %vm125, %v220, %v222
  %v232 = vsel %vm125, %v222, %v224
  %v233 = vsel %vm125, %v224, %v226
  %v234 = vsel %vm125, %v226, %v228
  %v235 = vsel %vm125, %v228, %v230
  %s236 = scalar_lea.vmem %s3, 16
  %v237 = vld [vmem:[%s236] sm:$0xf]
  %v238 = vld [vmem:[%s236 + $0x4] sm:$0xf]
  %v239 = vld [vmem:[%s236 + $0x8] sm:$0xf]
  %v240 = vld [vmem:[%s236 + $0xc] sm:$0xf]
  %v245 = vunpack.c.l.b16 %v237
  %v246 = vunpack.c.l.b16 %v238
  %v247 = vunpack.c.l.b16 %v239
  %v248 = vunpack.c.l.b16 %v240
  %v249 = vpack.c.b16 %v246, %v245
  %v250 = vpack.c.b16 %v248, %v247
  %251 = vrot.lane.b32.xlu0 %v171, 1
  %v252 = vpop.permute.xlu0 %251
  %253 = vrot.lane.b32.xlu0 %v172, 1
  %v254 = vpop.permute.xlu0 %253
  %255 = vrot.lane.b32.xlu0 %v173, 1
  %v256 = vpop.permute.xlu0 %255
  %257 = vrot.lane.b32.xlu0 %v174, 1
  %v258 = vpop.permute.xlu0 %257
  %259 = vrot.lane.b32.xlu0 %v175, 1
  %v260 = vpop.permute.xlu0 %259
  %261 = vrot.lane.b32.xlu0 %v176, 1
  %v262 = vpop.permute.xlu0 %261
  %263 = vrot.lane.b32.xlu0 %v177, 1
  %v264 = vpop.permute.xlu0 %263
  %265 = vrot.lane.b32.xlu0 %v203, 1
  %v266 = vpop.permute.xlu0 %265
  %267 = vrot.lane.b32.xlu0 %v214, 1
  %v268 = vpop.permute.xlu0 %267
  %269 = vrot.lane.b32.xlu0 %v215, 1
  %v270 = vpop.permute.xlu0 %269
  %271 = vrot.lane.b32.xlu0 %v216, 1
  %v272 = vpop.permute.xlu0 %271
  %273 = vrot.lane.b32.xlu0 %v217, 1
  %v274 = vpop.permute.xlu0 %273
  %275 = vrot.lane.b32.xlu0 %v218, 1
  %v276 = vpop.permute.xlu0 %275
  %277 = vrot.lane.b32.xlu0 %v213, 1
  %v278 = vpop.permute.xlu0 %277
  %279 = vrot.lane.b32.xlu0 %v220, 1
  %v280 = vpop.permute.xlu0 %279
  %281 = vrot.lane.b32.xlu0 %v231, 1
  %v282 = vpop.permute.xlu0 %281
  %283 = vrot.lane.b32.xlu0 %v232, 1
  %v284 = vpop.permute.xlu0 %283
  %285 = vrot.lane.b32.xlu0 %v233, 1
  %v286 = vpop.permute.xlu0 %285
  %287 = vrot.lane.b32.xlu0 %v234, 1
  %v288 = vpop.permute.xlu0 %287
  %289 = vrot.lane.b32.xlu0 %v235, 1
  %v290 = vpop.permute.xlu0 %289
  %291 = vrot.lane.b32.xlu0 %v230, 1
  %v292 = vpop.permute.xlu0 %291
  %vm293 = vcmask 7168
  %v294 = vsel %vm293, %v252, %v254
  %v295 = vsel %vm293, %v254, %v256
  %v296 = vsel %vm293, %v256, %v258
  %v297 = vsel %vm293, %v258, %v260
  %v298 = vsel %vm293, %v260, %v262
  %v299 = vsel %vm293, %v262, %v264
  %v300 = vsel %vm293, %v266, %v268
  %v301 = vsel %vm293, %v268, %v270
  %v302 = vsel %vm293, %v270, %v272
  %v303 = vsel %vm293, %v272, %v274
  %v304 = vsel %vm293, %v274, %v276
  %v305 = vsel %vm293, %v276, %v278
  %v306 = vsel %vm293, %v280, %v282
  %v307 = vsel %vm293, %v282, %v284
  %v308 = vsel %vm293, %v284, %v286
  %v309 = vsel %vm293, %v286, %v288
  %v310 = vsel %vm293, %v288, %v290
  %v311 = vsel %vm293, %v290, %v292
  %vm330 = vcmask 392192
  %v332 = vsel %vm330, %v249, 0
  %v335 = vsel %vm330, %v250, 0
  %337 = vmatprep.subr.bf16.mxu0 %v295
  %338 = vmatpush1.bf16.msra.mxu0 %v294
  %339 = vmatprep.subr.bf16.mxu0 %v301
  %340 = vmatpush1.bf16.msra.mxu0 %v300
  %341 = vmatprep.subr.bf16.mxu0 %v307
  %342 = vmatpush1.bf16.msra.mxu0 %v306
  %343 = vmatprep.subr.bf16.mxu0 0
  %344 = vmatpush1.bf16.msra.mxu0 0
  %345 = vmatprep.subr.bf16.mxu0 0
  %346 = vmatpush1.bf16.msra.mxu0 0
  %347 = vmatprep.subr.bf16.mxu0 0
  %348 = vmatpush1.bf16.msra.mxu0 0
  %349 = vmatprep.subr.bf16.mxu0 0
  %350 = vmatpush1.bf16.msra.mxu0 0
  %351 = vmatprep.subr.bf16.mxu0 0
  %352 = vmatpush1.bf16.msra.mxu0 0
  %353 = vmatprep.subr.bf16.mxu0 0
  %354 = vmatpush1.bf16.msra.mxu0 0
  %355 = vmatprep.subr.bf16.mxu0 0
  %356 = vmatpush1.bf16.msra.mxu0 0
  %357 = vmatprep.subr.bf16.mxu0 0
  %358 = vmatpush1.bf16.msra.mxu0 0
  %359 = vmatprep.subr.bf16.mxu0 0
  %360 = vmatpush1.bf16.msra.mxu0 0
  %361 = vmatprep.subr.bf16.mxu0 0
  %362 = vmatpush1.bf16.msra.mxu0 0
  %363 = vmatprep.subr.bf16.mxu0 0
  %364 = vmatpush1.bf16.msra.mxu0 0
  %365 = vmatprep.subr.bf16.mxu0 0
  %366 = vmatpush1.bf16.msra.mxu0 0
  %367 = vmatprep.subr.bf16.mxu0 0
  %368 = vmatpush1.bf16.msra.mxu0 0
  %369 = vmatprep.mubr.bf16.mxu0 0
  %370 = vmatmul.mubr.bf16.gmra.mrb[0].mxu0 %v332
  %v371 = vpop.f32.mrb[0].mxu0
  %v372 = vadd.f32 0.0, %v371
  %v373 = vpop.f32.mrb[0].mxu0
  %v374 = vadd.f32 0.0, %v373
  %v375 = vpop.f32.mrb[0].mxu0
  %v376 = vadd.f32 0.0, %v375
  %v377 = vpop.f32.mrb[0].mxu0
  %v378 = vadd.f32 0.0, %v377
  %379 = vmatprep.mubr.bf16.mxu0 0
  %380 = vmatmul.mubr.bf16.gmra.mrb[0].mxu0 %v335
  %v381 = vpop.f32.mrb[0].mxu0
  %v382 = vadd.f32 0.0, %v381
  %v383 = vpop.f32.mrb[0].mxu0
  %v384 = vadd.f32 0.0, %v383
  %v385 = vpop.f32.mrb[0].mxu0
  %v386 = vadd.f32 0.0, %v385
  %v387 = vpop.f32.mrb[0].mxu0
  %v388 = vadd.f32 0.0, %v387
  %389 = vdwg.mxu0
  %390 = vmatprep.subr.bf16.mxu0 %v297
  %391 = vmatpush1.bf16.msra.mxu0 %v296
  %392 = vmatprep.subr.bf16.mxu0 %v303
  %393 = vmatpush1.bf16.msra.mxu0 %v302
  %394 = vmatprep.subr.bf16.mxu0 %v309
  %395 = vmatpush1.bf16.msra.mxu0 %v308
  %396 = vmatprep.subr.bf16.mxu0 0
  %397 = vmatpush1.bf16.msra.mxu0 0
  %398 = vmatprep.subr.bf16.mxu0 0
  %399 = vmatpush1.bf16.msra.mxu0 0
  %400 = vmatprep.subr.bf16.mxu0 0
  %401 = vmatpush1.bf16.msra.mxu0 0
  %402 = vmatprep.subr.bf16.mxu0 0
  %403 = vmatpush1.bf16.msra.mxu0 0
  %404 = vmatprep.subr.bf16.mxu0 0
  %405 = vmatpush1.bf16.msra.mxu0 0
  %406 = vmatprep.subr.bf16.mxu0 0
  %407 = vmatpush1.bf16.msra.mxu0 0
  %408 = vmatprep.subr.bf16.mxu0 0
  %409 = vmatpush1.bf16.msra.mxu0 0
  %410 = vmatprep.subr.bf16.mxu0 0
  %411 = vmatpush1.bf16.msra.mxu0 0
  %412 = vmatprep.subr.bf16.mxu0 0
  %413 = vmatpush1.bf16.msra.mxu0 0
  %414 = vmatprep.subr.bf16.mxu0 0
  %415 = vmatpush1.bf16.msra.mxu0 0
  %416 = vmatprep.subr.bf16.mxu0 0
  %417 = vmatpush1.bf16.msra.mxu0 0
  %418 = vmatprep.subr.bf16.mxu0 0
  %419 = vmatpush1.bf16.msra.mxu0 0
  %420 = vmatprep.subr.bf16.mxu0 0
  %421 = vmatpush1.bf16.msra.mxu0 0
  %422 = vmatprep.mubr.bf16.mxu0 0
  %423 = vmatmul.mubr.bf16.gmra.mrb[0].mxu0 %v332
  %v424 = vpop.f32.mrb[0].mxu0
  %v425 = vadd.f32 0.0, %v424
  %v426 = vpop.f32.mrb[0].mxu0
  %v427 = vadd.f32 0.0, %v426
  %v428 = vpop.f32.mrb[0].mxu0
  %v429 = vadd.f32 0.0, %v428
  %v430 = vpop.f32.mrb[0].mxu0
  %v431 = vadd.f32 0.0, %v430
  %432 = vmatprep.mubr.bf16.mxu0 0
  %433 = vmatmul.mubr.bf16.gmra.mrb[0].mxu0 %v335
  %v434 = vpop.f32.mrb[0].mxu0
  %v435 = vadd.f32 0.0, %v434
  %v436 = vpop.f32.mrb[0].mxu0
  %v437 = vadd.f32 0.0, %v436
  %v438 = vpop.f32.mrb[0].mxu0
  %v439 = vadd.f32 0.0, %v438
  %v440 = vpop.f32.mrb[0].mxu0
  %v441 = vadd.f32 0.0, %v440
  %442 = vdwg.mxu0
  %443 = vmatprep.subr.bf16.mxu0 %v299
  %444 = vmatpush1.bf16.msra.mxu0 %v298
  %445 = vmatprep.subr.bf16.mxu0 %v305
  %446 = vmatpush1.bf16.msra.mxu0 %v304
  %447 = vmatprep.subr.bf16.mxu0 %v311
  %448 = vmatpush1.bf16.msra.mxu0 %v310
  %449 = vmatprep.subr.bf16.mxu0 0
  %450 = vmatpush1.bf16.msra.mxu0 0
  %451 = vmatprep.subr.bf16.mxu0 0
  %452 = vmatpush1.bf16.msra.mxu0 0
  %453 = vmatprep.subr.bf16.mxu0 0
  %454 = vmatpush1.bf16.msra.mxu0 0
  %455 = vmatprep.subr.bf16.mxu0 0
  %456 = vmatpush1.bf16.msra.mxu0 0
  %457 = vmatprep.subr.bf16.mxu0 0
  %458 = vmatpush1.bf16.msra.mxu0 0
  %459 = vmatprep.subr.bf16.mxu0 0
  %460 = vmatpush1.bf16.msra.mxu0 0
  %461 = vmatprep.subr.bf16.mxu0 0
  %462 = vmatpush1.bf16.msra.mxu0 0
  %463 = vmatprep.subr.bf16.mxu0 0
  %464 = vmatpush1.bf16.msra.mxu0 0
  %465 = vmatprep.subr.bf16.mxu0 0
  %466 = vmatpush1.bf16.msra.mxu0 0
  %467 = vmatprep.subr.bf16.mxu0 0
  %468 = vmatpush1.bf16.msra.mxu0 0
  %469 = vmatprep.subr.bf16.mxu0 0
  %470 = vmatpush1.bf16.msra.mxu0 0
  %471 = vmatprep.subr.bf16.mxu0 0
  %472 = vmatpush1.bf16.msra.mxu0 0
  %473 = vmatprep.subr.bf16.mxu0 0
  %474 = vmatpush1.bf16.msra.mxu0 0
  %475 = vmatprep.mubr.bf16.mxu0 0
  %476 = vmatmul.mubr.bf16.gmra.mrb[0].mxu0 %v332
  %v477 = vpop.f32.mrb[0].mxu0
  %v478 = vadd.f32 0.0, %v477
  %v479 = vpop.f32.mrb[0].mxu0
  %v480 = vadd.f32 0.0, %v479
  %v481 = vpop.f32.mrb[0].mxu0
  %v482 = vadd.f32 0.0, %v481
  %v483 = vpop.f32.mrb[0].mxu0
  %v484 = vadd.f32 0.0, %v483
  %485 = vmatprep.mubr.bf16.mxu0 0
  %486 = vmatmul.mubr.bf16.gmra.mrb[0].mxu0 %v335
  %v487 = vpop.f32.mrb[0].mxu0
  %v488 = vadd.f32 0.0, %v487
  %v489 = vpop.f32.mrb[0].mxu0
  %v490 = vadd.f32 0.0, %v489
  %v491 = vpop.f32.mrb[0].mxu0
  %v492 = vadd.f32 0.0, %v491
  %v493 = vpop.f32.mrb[0].mxu0
  %v494 = vadd.f32 0.0, %v493
  %495 = vdwg.mxu0
  %v500 = vunpack.c.l.b16 %v131
  %v501 = vunpack.c.l.b16 %v132
  %v502 = vunpack.c.l.b16 %v133
  %v503 = vunpack.c.l.b16 %v134
  %v504 = vpack.c.b16 %v501, %v500
  %v505 = vpack.c.b16 %v503, %v502
  %506 = vrot.lane.b32.xlu0 %v89, 19
  %v507 = vpop.permute.xlu0 %506
  %508 = vrot.lane.b32.xlu0 %v90, 19
  %v509 = vpop.permute.xlu0 %508
  %510 = vrot.lane.b32.xlu0 %v91, 19
  %v511 = vpop.permute.xlu0 %510
  %512 = vrot.lane.b32.xlu0 %v92, 19
  %v513 = vpop.permute.xlu0 %512
  %514 = vrot.lane.b32.xlu0 %v93, 19
  %v515 = vpop.permute.xlu0 %514
  %516 = vrot.lane.b32.xlu0 %v94, 19
  %v517 = vpop.permute.xlu0 %516
  %518 = vrot.lane.b32.xlu0 %v108, 19
  %v519 = vpop.permute.xlu0 %518
  %520 = vrot.lane.b32.xlu0 %v109, 19
  %v521 = vpop.permute.xlu0 %520
  %522 = vrot.lane.b32.xlu0 %v110, 19
  %v523 = vpop.permute.xlu0 %522
  %524 = vrot.lane.b32.xlu0 %v111, 19
  %v525 = vpop.permute.xlu0 %524
  %526 = vrot.lane.b32.xlu0 %v112, 19
  %v527 = vpop.permute.xlu0 %526
  %528 = vrot.lane.b32.xlu0 %v106, 19
  %v529 = vpop.permute.xlu0 %528
  %530 = vrot.lane.b32.xlu0 %v126, 19
  %v531 = vpop.permute.xlu0 %530
  %532 = vrot.lane.b32.xlu0 %v127, 19
  %v533 = vpop.permute.xlu0 %532
  %534 = vrot.lane.b32.xlu0 %v128, 19
  %v535 = vpop.permute.xlu0 %534
  %536 = vrot.lane.b32.xlu0 %v129, 19
  %v537 = vpop.permute.xlu0 %536
  %538 = vrot.lane.b32.xlu0 %v130, 19
  %v539 = vpop.permute.xlu0 %538
  %540 = vrot.lane.b32.xlu0 %v124, 19
  %v541 = vpop.permute.xlu0 %540
  %vm542 = vcmask 154624
  %v543 = vsel %vm542, %v507, %v509
  %v544 = vsel %vm542, %v509, %v511
  %v545 = vsel %vm542, %v511, %v513
  %v546 = vsel %vm542, %v513, %v515
  %v547 = vsel %vm542, %v515, %v517
  %v548 = vsel %vm542, %v519, %v521
  %v549 = vsel %vm542, %v521, %v523
  %v550 = vsel %vm542, %v523, %v525
  %v551 = vsel %vm542, %v525, %v527
  %v552 = vsel %vm542, %v527, %v529
  %v553 = vsel %vm542, %v531, %v533
  %v554 = vsel %vm542, %v533, %v535
  %v555 = vsel %vm542, %v535, %v537
  %v556 = vsel %vm542, %v537, %v539
  %v557 = vsel %vm542, %v539, %v541
  %v577 = vsel %vm330, %v504, 0
  %v580 = vsel %vm330, %v505, 0
  %582 = vmatprep.subr.bf16.mxu0 %v544
  %583 = vmatpush1.bf16.msra.mxu0 %v543
  %584 = vmatprep.subr.bf16.mxu0 %v549
  %585 = vmatpush1.bf16.msra.mxu0 %v548
  %586 = vmatprep.subr.bf16.mxu0 %v554
  %587 = vmatpush1.bf16.msra.mxu0 %v553
  %588 = vmatprep.subr.bf16.mxu0 0
  %589 = vmatpush1.bf16.msra.mxu0 0
  %590 = vmatprep.subr.bf16.mxu0 0
  %591 = vmatpush1.bf16.msra.mxu0 0
  %592 = vmatprep.subr.bf16.mxu0 0
  %593 = vmatpush1.bf16.msra.mxu0 0
  %594 = vmatprep.subr.bf16.mxu0 0
  %595 = vmatpush1.bf16.msra.mxu0 0
  %596 = vmatprep.subr.bf16.mxu0 0
  %597 = vmatpush1.bf16.msra.mxu0 0
  %598 = vmatprep.subr.bf16.mxu0 0
  %599 = vmatpush1.bf16.msra.mxu0 0
  %600 = vmatprep.subr.bf16.mxu0 0
  %601 = vmatpush1.bf16.msra.mxu0 0
  %602 = vmatprep.subr.bf16.mxu0 0
  %603 = vmatpush1.bf16.msra.mxu0 0
  %604 = vmatprep.subr.bf16.mxu0 0
  %605 = vmatpush1.bf16.msra.mxu0 0
  %606 = vmatprep.subr.bf16.mxu0 0
  %607 = vmatpush1.bf16.msra.mxu0 0
  %608 = vmatprep.subr.bf16.mxu0 0
  %609 = vmatpush1.bf16.msra.mxu0 0
  %610 = vmatprep.subr.bf16.mxu0 0
  %611 = vmatpush1.bf16.msra.mxu0 0
  %612 = vmatprep.subr.bf16.mxu0 0
  %613 = vmatpush1.bf16.msra.mxu0 0
  %614 = vmatprep.mubr.bf16.mxu0 0
  %615 = vmatmul.mubr.bf16.gmra.mrb[0].mxu0 %v577
  %v616 = vpop.f32.mrb[0].mxu0
  %v617 = vadd.f32 %v372, %v616
  %v618 = vpop.f32.mrb[0].mxu0
  %v619 = vadd.f32 %v374, %v618
  %v620 = vpop.f32.mrb[0].mxu0
  %v621 = vadd.f32 %v376, %v620
  %v622 = vpop.f32.mrb[0].mxu0
  %v623 = vadd.f32 %v378, %v622
  %624 = vmatprep.mubr.bf16.mxu0 0
  %625 = vmatmul.mubr.bf16.gmra.mrb[0].mxu0 %v580
  %v626 = vpop.f32.mrb[0].mxu0
  %v627 = vadd.f32 %v382, %v626
  %v628 = vpop.f32.mrb[0].mxu0
  %v629 = vadd.f32 %v384, %v628
  %v630 = vpop.f32.mrb[0].mxu0
  %v631 = vadd.f32 %v386, %v630
  %v632 = vpop.f32.mrb[0].mxu0
  %v633 = vadd.f32 %v388, %v632
  %634 = vdwg.mxu0
  %635 = vmatprep.subr.bf16.mxu0 %v546
  %636 = vmatpush1.bf16.msra.mxu0 %v545
  %637 = vmatprep.subr.bf16.mxu0 %v551
  %638 = vmatpush1.bf16.msra.mxu0 %v550
  %639 = vmatprep.subr.bf16.mxu0 %v556
  %640 = vmatpush1.bf16.msra.mxu0 %v555
  %641 = vmatprep.subr.bf16.mxu0 0
  %642 = vmatpush1.bf16.msra.mxu0 0
  %643 = vmatprep.subr.bf16.mxu0 0
  %644 = vmatpush1.bf16.msra.mxu0 0
  %645 = vmatprep.subr.bf16.mxu0 0
  %646 = vmatpush1.bf16.msra.mxu0 0
  %647 = vmatprep.subr.bf16.mxu0 0
  %648 = vmatpush1.bf16.msra.mxu0 0
  %649 = vmatprep.subr.bf16.mxu0 0
  %650 = vmatpush1.bf16.msra.mxu0 0
  %651 = vmatprep.subr.bf16.mxu0 0
  %652 = vmatpush1.bf16.msra.mxu0 0
  %653 = vmatprep.subr.bf16.mxu0 0
  %654 = vmatpush1.bf16.msra.mxu0 0
  %655 = vmatprep.subr.bf16.mxu0 0
  %656 = vmatpush1.bf16.msra.mxu0 0
  %657 = vmatprep.subr.bf16.mxu0 0
  %658 = vmatpush1.bf16.msra.mxu0 0
  %659 = vmatprep.subr.bf16.mxu0 0
  %660 = vmatpush1.bf16.msra.mxu0 0
  %661 = vmatprep.subr.bf16.mxu0 0
  %662 = vmatpush1.bf16.msra.mxu0 0
  %663 = vmatprep.subr.bf16.mxu0 0
  %664 = vmatpush1.bf16.msra.mxu0 0
  %665 = vmatprep.subr.bf16.mxu0 0
  %666 = vmatpush1.bf16.msra.mxu0 0
  %667 = vmatprep.mubr.bf16.mxu0 0
  %668 = vmatmul.mubr.bf16.gmra.mrb[0].mxu0 %v577
  %v669 = vpop.f32.mrb[0].mxu0
  %v670 = vadd.f32 %v425, %v669
  %v671 = vpop.f32.mrb[0].mxu0
  %v672 = vadd.f32 %v427, %v671
  %v673 = vpop.f32.mrb[0].mxu0
  %v674 = vadd.f32 %v429, %v673
  %v675 = vpop.f32.mrb[0].mxu0
  %v676 = vadd.f32 %v431, %v675
  %677 = vmatprep.mubr.bf16.mxu0 0
  %678 = vmatmul.mubr.bf16.gmra.mrb[0].mxu0 %v580
  %v679 = vpop.f32.mrb[0].mxu0
  %v680 = vadd.f32 %v435, %v679
  %v681 = vpop.f32.mrb[0].mxu0
  %v682 = vadd.f32 %v437, %v681
  %v683 = vpop.f32.mrb[0].mxu0
  %v684 = vadd.f32 %v439, %v683
  %v685 = vpop.f32.mrb[0].mxu0
  %v686 = vadd.f32 %v441, %v685
  %687 = vdwg.mxu0
  %688 = vmatprep.subr.bf16.mxu0 %v517
  %689 = vmatpush1.bf16.msra.mxu0 %v547
  %690 = vmatprep.subr.bf16.mxu0 %v529
  %691 = vmatpush1.bf16.msra.mxu0 %v552
  %692 = vmatprep.subr.bf16.mxu0 %v541
  %693 = vmatpush1.bf16.msra.mxu0 %v557
  %694 = vmatprep.subr.bf16.mxu0 0
  %695 = vmatpush1.bf16.msra.mxu0 0
  %696 = vmatprep.subr.bf16.mxu0 0
  %697 = vmatpush1.bf16.msra.mxu0 0
  %698 = vmatprep.subr.bf16.mxu0 0
  %699 = vmatpush1.bf16.msra.mxu0 0
  %700 = vmatprep.subr.bf16.mxu0 0
  %701 = vmatpush1.bf16.msra.mxu0 0
  %702 = vmatprep.subr.bf16.mxu0 0
  %703 = vmatpush1.bf16.msra.mxu0 0
  %704 = vmatprep.subr.bf16.mxu0 0
  %705 = vmatpush1.bf16.msra.mxu0 0
  %706 = vmatprep.subr.bf16.mxu0 0
  %707 = vmatpush1.bf16.msra.mxu0 0
  %708 = vmatprep.subr.bf16.mxu0 0
  %709 = vmatpush1.bf16.msra.mxu0 0
  %710 = vmatprep.subr.bf16.mxu0 0
  %711 = vmatpush1.bf16.msra.mxu0 0
  %712 = vmatprep.subr.bf16.mxu0 0
  %713 = vmatpush1.bf16.msra.mxu0 0
  %714 = vmatprep.subr.bf16.mxu0 0
  %715 = vmatpush1.bf16.msra.mxu0 0
  %716 = vmatprep.subr.bf16.mxu0 0
  %717 = vmatpush1.bf16.msra.mxu0 0
  %718 = vmatprep.subr.bf16.mxu0 0
  %719 = vmatpush1.bf16.msra.mxu0 0
  %720 = vmatprep.mubr.bf16.mxu0 0
  %721 = vmatmul.mubr.bf16.gmra.mrb[0].mxu0 %v577
  %v722 = vpop.f32.mrb[0].mxu0
  %v723 = vadd.f32 %v478, %v722
  %v724 = vpop.f32.mrb[0].mxu0
  %v725 = vadd.f32 %v480, %v724
  %v726 = vpop.f32.mrb[0].mxu0
  %v727 = vadd.f32 %v482, %v726
  %v728 = vpop.f32.mrb[0].mxu0
  %v729 = vadd.f32 %v484, %v728
  %730 = vmatprep.mubr.bf16.mxu0 0
  %731 = vmatmul.mubr.bf16.gmra.mrb[0].mxu0 %v580
  %v732 = vpop.f32.mrb[0].mxu0
  %v733 = vadd.f32 %v488, %v732
  %v734 = vpop.f32.mrb[0].mxu0
  %v735 = vadd.f32 %v490, %v734
  %v736 = vpop.f32.mrb[0].mxu0
  %v737 = vadd.f32 %v492, %v736
  %v738 = vpop.f32.mrb[0].mxu0
  %v739 = vadd.f32 %v494, %v738
  %740 = vdwg.mxu0
  %s741 = scalar_lea.vmem %s3, 32
  %v742 = vld [vmem:[%s741] sm:$0xf]
  %v743 = vld [vmem:[%s741 + $0x4] sm:$0xf]
  %v744 = vld [vmem:[%s741 + $0x8] sm:$0xf]
  %v745 = vld [vmem:[%s741 + $0xc] sm:$0xf]
  %v750 = vunpack.c.l.b16 %v742
  %v751 = vunpack.c.l.b16 %v743
  %v752 = vunpack.c.l.b16 %v744
  %v753 = vunpack.c.l.b16 %v745
  %v754 = vpack.c.b16 %v751, %v750
  %v755 = vpack.c.b16 %v753, %v752
  %756 = vrot.lane.b32.xlu0 %v196, 111
  %v757 = vpop.permute.xlu0 %756
  %758 = vrot.lane.b32.xlu0 %v197, 111
  %v759 = vpop.permute.xlu0 %758
  %760 = vrot.lane.b32.xlu0 %v198, 111
  %v761 = vpop.permute.xlu0 %760
  %762 = vrot.lane.b32.xlu0 %v199, 111
  %v763 = vpop.permute.xlu0 %762
  %764 = vrot.lane.b32.xlu0 %v200, 111
  %v765 = vpop.permute.xlu0 %764
  %766 = vrot.lane.b32.xlu0 %v201, 111
  %v767 = vpop.permute.xlu0 %766
  %768 = vrot.lane.b32.xlu0 %v214, 111
  %v769 = vpop.permute.xlu0 %768
  %770 = vrot.lane.b32.xlu0 %v215, 111
  %v771 = vpop.permute.xlu0 %770
  %772 = vrot.lane.b32.xlu0 %v216, 111
  %v773 = vpop.permute.xlu0 %772
  %774 = vrot.lane.b32.xlu0 %v217, 111
  %v775 = vpop.permute.xlu0 %774
  %776 = vrot.lane.b32.xlu0 %v218, 111
  %v777 = vpop.permute.xlu0 %776
  %778 = vrot.lane.b32.xlu0 %v213, 111
  %v779 = vpop.permute.xlu0 %778
  %780 = vrot.lane.b32.xlu0 %v231, 111
  %v781 = vpop.permute.xlu0 %780
  %782 = vrot.lane.b32.xlu0 %v232, 111
  %v783 = vpop.permute.xlu0 %782
  %784 = vrot.lane.b32.xlu0 %v233, 111
  %v785 = vpop.permute.xlu0 %784
  %786 = vrot.lane.b32.xlu0 %v234, 111
  %v787 = vpop.permute.xlu0 %786
  %788 = vrot.lane.b32.xlu0 %v235, 111
  %v789 = vpop.permute.xlu0 %788
  %790 = vrot.lane.b32.xlu0 %v230, 111
  %v791 = vpop.permute.xlu0 %790
  %vm792 = vcmask 908288
  %v793 = vsel %vm792, %v757, %v759
  %v794 = vsel %vm792, %v759, %v761
  %v795 = vsel %vm792, %v761, %v763
  %v796 = vsel %vm792, %v763, %v765
  %v797 = vsel %vm792, %v765, %v767
  %v798 = vsel %vm792, %v769, %v771
  %v799 = vsel %vm792, %v771, %v773
  %v800 = vsel %vm792, %v773, %v775
  %v801 = vsel %vm792, %v775, %v777
  %v802 = vsel %vm792, %v777, %v779
  %v803 = vsel %vm792, %v781, %v783
  %v804 = vsel %vm792, %v783, %v785
  %v805 = vsel %vm792, %v785, %v787
  %v806 = vsel %vm792, %v787, %v789
  %v807 = vsel %vm792, %v789, %v791
  %v827 = vsel %vm330, %v754, 0
  %v830 = vsel %vm330, %v755, 0
  %832 = vmatprep.subr.bf16.mxu0 %v794
  %833 = vmatpush1.bf16.msra.mxu0 %v793
  %834 = vmatprep.subr.bf16.mxu0 %v799
  %835 = vmatpush1.bf16.msra.mxu0 %v798
  %836 = vmatprep.subr.bf16.mxu0 %v804
  %837 = vmatpush1.bf16.msra.mxu0 %v803
  %838 = vmatprep.subr.bf16.mxu0 0
  %839 = vmatpush1.bf16.msra.mxu0 0
  %840 = vmatprep.subr.bf16.mxu0 0
  %841 = vmatpush1.bf16.msra.mxu0 0
  %842 = vmatprep.subr.bf16.mxu0 0
  %843 = vmatpush1.bf16.msra.mxu0 0
  %844 = vmatprep.subr.bf16.mxu0 0
  %845 = vmatpush1.bf16.msra.mxu0 0
  %846 = vmatprep.subr.bf16.mxu0 0
  %847 = vmatpush1.bf16.msra.mxu0 0
  %848 = vmatprep.subr.bf16.mxu0 0
  %849 = vmatpush1.bf16.msra.mxu0 0
  %850 = vmatprep.subr.bf16.mxu0 0
  %851 = vmatpush1.bf16.msra.mxu0 0
  %852 = vmatprep.subr.bf16.mxu0 0
  %853 = vmatpush1.bf16.msra.mxu0 0
  %854 = vmatprep.subr.bf16.mxu0 0
  %855 = vmatpush1.bf16.msra.mxu0 0
  %856 = vmatprep.subr.bf16.mxu0 0
  %857 = vmatpush1.bf16.msra.mxu0 0
  %858 = vmatprep.subr.bf16.mxu0 0
  %859 = vmatpush1.bf16.msra.mxu0 0
  %860 = vmatprep.subr.bf16.mxu0 0
  %861 = vmatpush1.bf16.msra.mxu0 0
  %862 = vmatprep.subr.bf16.mxu0 0
  %863 = vmatpush1.bf16.msra.mxu0 0
  %864 = vmatprep.mubr.bf16.mxu0 0
  %865 = vmatmul.mubr.bf16.gmra.mrb[0].mxu0 %v827
  %v866 = vpop.f32.mrb[0].mxu0
  %v867 = vadd.f32 0.0, %v866
  %v868 = vpop.f32.mrb[0].mxu0
  %v869 = vadd.f32 0.0, %v868
  %v870 = vpop.f32.mrb[0].mxu0
  %v871 = vadd.f32 0.0, %v870
  %v872 = vpop.f32.mrb[0].mxu0
  %v873 = vadd.f32 0.0, %v872
  %874 = vmatprep.mubr.bf16.mxu0 0
  %875 = vmatmul.mubr.bf16.gmra.mrb[0].mxu0 %v830
  %v876 = vpop.f32.mrb[0].mxu0
  %v877 = vadd.f32 0.0, %v876
  %v878 = vpop.f32.mrb[0].mxu0
  %v879 = vadd.f32 0.0, %v878
  %v880 = vpop.f32.mrb[0].mxu0
  %v881 = vadd.f32 0.0, %v880
  %v882 = vpop.f32.mrb[0].mxu0
  %v883 = vadd.f32 0.0, %v882
  %884 = vdwg.mxu0
  %885 = vmatprep.subr.bf16.mxu0 %v796
  %886 = vmatpush1.bf16.msra.mxu0 %v795
  %887 = vmatprep.subr.bf16.mxu0 %v801
  %888 = vmatpush1.bf16.msra.mxu0 %v800
  %889 = vmatprep.subr.bf16.mxu0 %v806
  %890 = vmatpush1.bf16.msra.mxu0 %v805
  %891 = vmatprep.subr.bf16.mxu0 0
  %892 = vmatpush1.bf16.msra.mxu0 0
  %893 = vmatprep.subr.bf16.mxu0 0
  %894 = vmatpush1.bf16.msra.mxu0 0
  %895 = vmatprep.subr.bf16.mxu0 0
  %896 = vmatpush1.bf16.msra.mxu0 0
  %897 = vmatprep.subr.bf16.mxu0 0
  %898 = vmatpush1.bf16.msra.mxu0 0
  %899 = vmatprep.subr.bf16.mxu0 0
  %900 = vmatpush1.bf16.msra.mxu0 0
  %901 = vmatprep.subr.bf16.mxu0 0
  %902 = vmatpush1.bf16.msra.mxu0 0
  %903 = vmatprep.subr.bf16.mxu0 0
  %904 = vmatpush1.bf16.msra.mxu0 0
  %905 = vmatprep.subr.bf16.mxu0 0
  %906 = vmatpush1.bf16.msra.mxu0 0
  %907 = vmatprep.subr.bf16.mxu0 0
  %908 = vmatpush1.bf16.msra.mxu0 0
  %909 = vmatprep.subr.bf16.mxu0 0
  %910 = vmatpush1.bf16.msra.mxu0 0
  %911 = vmatprep.subr.bf16.mxu0 0
  %912 = vmatpush1.bf16.msra.mxu0 0
  %913 = vmatprep.subr.bf16.mxu0 0
  %914 = vmatpush1.bf16.msra.mxu0 0
  %915 = vmatprep.subr.bf16.mxu0 0
  %916 = vmatpush1.bf16.msra.mxu0 0
  %917 = vmatprep.mubr.bf16.mxu0 0
  %918 = vmatmul.mubr.bf16.gmra.mrb[0].mxu0 %v827
  %v919 = vpop.f32.mrb[0].mxu0
  %v920 = vadd.f32 0.0, %v919
  %v921 = vpop.f32.mrb[0].mxu0
  %v922 = vadd.f32 0.0, %v921
  %v923 = vpop.f32.mrb[0].mxu0
  %v924 = vadd.f32 0.0, %v923
  %v925 = vpop.f32.mrb[0].mxu0
  %v926 = vadd.f32 0.0, %v925
  %927 = vmatprep.mubr.bf16.mxu0 0
  %928 = vmatmul.mubr.bf16.gmra.mrb[0].mxu0 %v830
  %v929 = vpop.f32.mrb[0].mxu0
  %v930 = vadd.f32 0.0, %v929
  %v931 = vpop.f32.mrb[0].mxu0
  %v932 = vadd.f32 0.0, %v931
  %v933 = vpop.f32.mrb[0].mxu0
  %v934 = vadd.f32 0.0, %v933
  %v935 = vpop.f32.mrb[0].mxu0
  %v936 = vadd.f32 0.0, %v935
  %937 = vdwg.mxu0
  %938 = vmatprep.subr.bf16.mxu0 %v767
  %939 = vmatpush1.bf16.msra.mxu0 %v797
  %940 = vmatprep.subr.bf16.mxu0 %v779
  %941 = vmatpush1.bf16.msra.mxu0 %v802
  %942 = vmatprep.subr.bf16.mxu0 %v791
  %943 = vmatpush1.bf16.msra.mxu0 %v807
  %944 = vmatprep.subr.bf16.mxu0 0
  %945 = vmatpush1.bf16.msra.mxu0 0
  %946 = vmatprep.subr.bf16.mxu0 0
  %947 = vmatpush1.bf16.msra.mxu0 0
  %948 = vmatprep.subr.bf16.mxu0 0
  %949 = vmatpush1.bf16.msra.mxu0 0
  %950 = vmatprep.subr.bf16.mxu0 0
  %951 = vmatpush1.bf16.msra.mxu0 0
  %952 = vmatprep.subr.bf16.mxu0 0
  %953 = vmatpush1.bf16.msra.mxu0 0
  %954 = vmatprep.subr.bf16.mxu0 0
  %955 = vmatpush1.bf16.msra.mxu0 0
  %956 = vmatprep.subr.bf16.mxu0 0
  %957 = vmatpush1.bf16.msra.mxu0 0
  %958 = vmatprep.subr.bf16.mxu0 0
  %959 = vmatpush1.bf16.msra.mxu0 0
  %960 = vmatprep.subr.bf16.mxu0 0
  %961 = vmatpush1.bf16.msra.mxu0 0
  %962 = vmatprep.subr.bf16.mxu0 0
  %963 = vmatpush1.bf16.msra.mxu0 0
  %964 = vmatprep.subr.bf16.mxu0 0
  %965 = vmatpush1.bf16.msra.mxu0 0
  %966 = vmatprep.subr.bf16.mxu0 0
  %967 = vmatpush1.bf16.msra.mxu0 0
  %968 = vmatprep.subr.bf16.mxu0 0
  %969 = vmatpush1.bf16.msra.mxu0 0
  %970 = vmatprep.mubr.bf16.mxu0 0
  %971 = vmatmul.mubr.bf16.gmra.mrb[0].mxu0 %v827
  %v972 = vpop.f32.mrb[0].mxu0
  %v973 = vadd.f32 0.0, %v972
  %v974 = vpop.f32.mrb[0].mxu0
  %v975 = vadd.f32 0.0, %v974
  %v976 = vpop.f32.mrb[0].mxu0
  %v977 = vadd.f32 0.0, %v976
  %v978 = vpop.f32.mrb[0].mxu0
  %v979 = vadd.f32 0.0, %v978
  %980 = vmatprep.mubr.bf16.mxu0 0
  %981 = vmatmul.mubr.bf16.gmra.mrb[0].mxu0 %v830
  %v982 = vpop.f32.mrb[0].mxu0
  %v983 = vadd.f32 0.0, %v982
  %v984 = vpop.f32.mrb[0].mxu0
  %v985 = vadd.f32 0.0, %v984
  %v986 = vpop.f32.mrb[0].mxu0
  %v987 = vadd.f32 0.0, %v986
  %v988 = vpop.f32.mrb[0].mxu0
  %v989 = vadd.f32 0.0, %v988
  %990 = vdwg.mxu0
  %v991 = vadd.f32 %v617, %v867
  %v992 = vadd.f32 %v619, %v869
  %v993 = vadd.f32 %v670, %v920
  %v994 = vadd.f32 %v672, %v922
  %v995 = vadd.f32 %v723, %v973
  %v996 = vadd.f32 %v725, %v975
  %v997 = vadd.f32 %v621, %v871
  %v998 = vadd.f32 %v623, %v873
  %v999 = vadd.f32 %v674, %v924
  %v1000 = vadd.f32 %v676, %v926
  %v1001 = vadd.f32 %v727, %v977
  %v1002 = vadd.f32 %v729, %v979
  %v1003 = vadd.f32 %v627, %v877
  %v1004 = vadd.f32 %v629, %v879
  %v1005 = vadd.f32 %v680, %v930
  %v1006 = vadd.f32 %v682, %v932
  %v1007 = vadd.f32 %v733, %v983
  %v1008 = vadd.f32 %v735, %v985
  %v1009 = vadd.f32 %v631, %v881
  %v1010 = vadd.f32 %v633, %v883
  %v1011 = vadd.f32 %v684, %v934
  %v1012 = vadd.f32 %v686, %v936
  %v1013 = vadd.f32 %v737, %v987
  %v1014 = vadd.f32 %v739, %v989
  %v1015 = vld [vmem:[%s4] sm:$0xff]
  %v1016 = vld [vmem:[%s4 + $0x8] sm:$0xff]
  %v1017 = vld [vmem:[%s4 + $0x10] sm:$0xff]
  %v1018 = vld [vmem:[%s4 + $0x18] sm:$0xff]
  %1020 = vset.pattern.permute.xlu0 0
  %1021 = vperm.xlu0 %1020, %v1015
  %v1022 = vpop.permute.xlu0 %1021
  %1025 = vset.pattern.permute.xlu0 0
  %1026 = vperm.xlu0 %1025, %v1016
  %v1027 = vpop.permute.xlu0 %1026
  %1030 = vset.pattern.permute.xlu0 0
  %1031 = vperm.xlu0 %1030, %v1017
  %v1032 = vpop.permute.xlu0 %1031
  %1035 = vset.pattern.permute.xlu0 0
  %1036 = vperm.xlu0 %1035, %v1018
  %v1037 = vpop.permute.xlu0 %1036
  %v1039 = vadd.f32 %v991, %v1022
  %v1040 = vadd.f32 %v992, %v1022
  %v1041 = vadd.f32 %v993, %v1022
  %v1042 = vadd.f32 %v994, %v1022
  %v1043 = vadd.f32 %v995, %v1022
  %v1044 = vadd.f32 %v996, %v1022
  %v1045 = vadd.f32 %v997, %v1027
  %v1046 = vadd.f32 %v998, %v1027
  %v1047 = vadd.f32 %v999, %v1027
  %v1048 = vadd.f32 %v1000, %v1027
  %v1049 = vadd.f32 %v1001, %v1027
  %v1050 = vadd.f32 %v1002, %v1027
  %v1051 = vadd.f32 %v1003, %v1032
  %v1052 = vadd.f32 %v1004, %v1032
  %v1053 = vadd.f32 %v1005, %v1032
  %v1054 = vadd.f32 %v1006, %v1032
  %v1055 = vadd.f32 %v1007, %v1032
  %v1056 = vadd.f32 %v1008, %v1032
  %v1057 = vadd.f32 %v1009, %v1037
  %v1058 = vadd.f32 %v1010, %v1037
  %v1059 = vadd.f32 %v1011, %v1037
  %v1060 = vadd.f32 %v1012, %v1037
  %v1061 = vadd.f32 %v1013, %v1037
  %v1062 = vadd.f32 %v1014, %v1037
  %vm1063 = vcmp.ge.f32.partialorder %v1039, 0.0
  %vm1064 = vcmp.ge.f32.partialorder %v1040, 0.0
  %vm1065 = vcmp.ge.f32.partialorder %v1041, 0.0
  %vm1066 = vcmp.ge.f32.partialorder %v1042, 0.0
  %vm1067 = vcmp.ge.f32.partialorder %v1043, 0.0
  %vm1068 = vcmp.ge.f32.partialorder %v1044, 0.0
  %vm1069 = vcmp.ge.f32.partialorder %v1045, 0.0
  %vm1070 = vcmp.ge.f32.partialorder %v1046, 0.0
  %vm1071 = vcmp.ge.f32.partialorder %v1047, 0.0
  %vm1072 = vcmp.ge.f32.partialorder %v1048, 0.0
  %vm1073 = vcmp.ge.f32.partialorder %v1049, 0.0
  %vm1074 = vcmp.ge.f32.partialorder %v1050, 0.0
  %vm1075 = vcmp.ge.f32.partialorder %v1051, 0.0
  %vm1076 = vcmp.ge.f32.partialorder %v1052, 0.0
  %vm1077 = vcmp.ge.f32.partialorder %v1053, 0.0
  %vm1078 = vcmp.ge.f32.partialorder %v1054, 0.0
  %vm1079 = vcmp.ge.f32.partialorder %v1055, 0.0
  %vm1080 = vcmp.ge.f32.partialorder %v1056, 0.0
  %vm1081 = vcmp.ge.f32.partialorder %v1057, 0.0
  %vm1082 = vcmp.ge.f32.partialorder %v1058, 0.0
  %vm1083 = vcmp.ge.f32.partialorder %v1059, 0.0
  %vm1084 = vcmp.ge.f32.partialorder %v1060, 0.0
  %vm1085 = vcmp.ge.f32.partialorder %v1061, 0.0
  %vm1086 = vcmp.ge.f32.partialorder %v1062, 0.0
  %v1087 = vmul.f32 %v1039, 0.01
  %v1088 = vmul.f32 %v1040, 0.01
  %v1089 = vmul.f32 %v1041, 0.01
  %v1090 = vmul.f32 %v1042, 0.01
  %v1091 = vmul.f32 %v1043, 0.01
  %v1092 = vmul.f32 %v1044, 0.01
  %v1093 = vmul.f32 %v1045, 0.01
  %v1094 = vmul.f32 %v1046, 0.01
  %v1095 = vmul.f32 %v1047, 0.01
  %v1096 = vmul.f32 %v1048, 0.01
  %v1097 = vmul.f32 %v1049, 0.01
  %v1098 = vmul.f32 %v1050, 0.01
  %v1099 = vmul.f32 %v1051, 0.01
  %v1100 = vmul.f32 %v1052, 0.01
  %v1101 = vmul.f32 %v1053, 0.01
  %v1102 = vmul.f32 %v1054, 0.01
  %v1103 = vmul.f32 %v1055, 0.01
  %v1104 = vmul.f32 %v1056, 0.01
  %v1105 = vmul.f32 %v1057, 0.01
  %v1106 = vmul.f32 %v1058, 0.01
  %v1107 = vmul.f32 %v1059, 0.01
  %v1108 = vmul.f32 %v1060, 0.01
  %v1109 = vmul.f32 %v1061, 0.01
  %v1110 = vmul.f32 %v1062, 0.01
  %v1111 = vsel %vm1063, %v1039, %v1087
  %v1112 = vsel %vm1064, %v1040, %v1088
  %v1113 = vsel %vm1065, %v1041, %v1089
  %v1114 = vsel %vm1066, %v1042, %v1090
  %v1115 = vsel %vm1067, %v1043, %v1091
  %v1116 = vsel %vm1068, %v1044, %v1092
  %v1117 = vsel %vm1069, %v1045, %v1093
  %v1118 = vsel %vm1070, %v1046, %v1094
  %v1119 = vsel %vm1071, %v1047, %v1095
  %v1120 = vsel %vm1072, %v1048, %v1096
  %v1121 = vsel %vm1073, %v1049, %v1097
  %v1122 = vsel %vm1074, %v1050, %v1098
  %v1123 = vsel %vm1075, %v1051, %v1099
  %v1124 = vsel %vm1076, %v1052, %v1100
  %v1125 = vsel %vm1077, %v1053, %v1101
  %v1126 = vsel %vm1078, %v1054, %v1102
  %v1127 = vsel %vm1079, %v1055, %v1103
  %v1128 = vsel %vm1080, %v1056, %v1104
  %v1129 = vsel %vm1081, %v1057, %v1105
  %v1130 = vsel %vm1082, %v1058, %v1106
  %v1131 = vsel %vm1083, %v1059, %v1107
  %v1132 = vsel %vm1084, %v1060, %v1108
  %v1133 = vsel %vm1085, %v1061, %v1109
  %v1134 = vsel %vm1086, %v1062, %v1110
  %v1136 = vlaneseq
  %v1137 = vshrl.u32 %v1136, 7
  %v1138 = vsub.s32 0, %v1137
  %v1139 = vrot.slane %v59, %v1138
  %v1140 = vlaneseq
  %v1141 = vshrl.u32 %v1140, 7
  %v1142 = vsub.s32 1, %v1141
  %v1143 = vrot.slane %v59, %v1142
  %v1144 = vlaneseq
  %v1145 = vshrl.u32 %v1144, 7
  %v1146 = vsub.s32 2, %v1145
  %v1147 = vrot.slane %v59, %v1146
  %v1148 = vlaneseq
  %v1149 = vshrl.u32 %v1148, 7
  %v1150 = vsub.s32 3, %v1149
  %v1151 = vrot.slane %v59, %v1150
  %v1152 = vlaneseq
  %v1153 = vshrl.u32 %v1152, 7
  %v1154 = vsub.s32 4, %v1153
  %v1155 = vrot.slane %v59, %v1154
  %v1156 = vlaneseq
  %v1157 = vshrl.u32 %v1156, 7
  %v1158 = vsub.s32 5, %v1157
  %v1159 = vrot.slane %v59, %v1158
  %v1166 = vmul.f32 %v1111, %v1139
  %v1167 = vmul.f32 %v1112, %v1143
  %v1168 = vmul.f32 %v1113, %v1147
  %v1169 = vmul.f32 %v1114, %v1151
  %v1170 = vmul.f32 %v1115, %v1155
  %v1171 = vmul.f32 %v1116, %v1159
  %v1172 = vmul.f32 %v1117, %v1139
  %v1173 = vmul.f32 %v1118, %v1143
  %v1174 = vmul.f32 %v1119, %v1147
  %v1175 = vmul.f32 %v1120, %v1151
  %v1176 = vmul.f32 %v1121, %v1155
  %v1177 = vmul.f32 %v1122, %v1159
  %v1178 = vmul.f32 %v1123, %v1139
  %v1179 = vmul.f32 %v1124, %v1143
  %v1180 = vmul.f32 %v1125, %v1147
  %v1181 = vmul.f32 %v1126, %v1151
  %v1182 = vmul.f32 %v1127, %v1155
  %v1183 = vmul.f32 %v1128, %v1159
  %v1184 = vmul.f32 %v1129, %v1139
  %v1185 = vmul.f32 %v1130, %v1143
  %v1186 = vmul.f32 %v1131, %v1147
  %v1187 = vmul.f32 %v1132, %v1151
  %v1188 = vmul.f32 %v1133, %v1155
  %v1189 = vmul.f32 %v1134, %v1159
  %v1190 = vadd.f32 %v1166, %v1167
  %v1191 = vadd.f32 %v1190, %v1168
  %v1192 = vadd.f32 %v1191, %v1169
  %v1193 = vadd.f32 %v1192, %v1170
  %vm1194 = vcmask 64512
  %v1195 = vsel %vm1194, %v1171, 0.0
  %v1196 = vadd.f32 %v1193, %v1195
  %1197 = vadd.xlane.f32.xlu0 %v1196
  %v1198 = vpop.xlane.xlu0 %1197
  %v1199 = vadd.f32 %v1172, %v1173
  %v1200 = vadd.f32 %v1199, %v1174
  %v1201 = vadd.f32 %v1200, %v1175
  %v1202 = vadd.f32 %v1201, %v1176
  %v1203 = vsel %vm1194, %v1177, 0.0
  %v1204 = vadd.f32 %v1202, %v1203
  %1205 = vadd.xlane.f32.xlu0 %v1204
  %v1206 = vpop.xlane.xlu0 %1205
  %v1207 = vadd.f32 %v1178, %v1179
  %v1208 = vadd.f32 %v1207, %v1180
  %v1209 = vadd.f32 %v1208, %v1181
  %v1210 = vadd.f32 %v1209, %v1182
  %v1211 = vsel %vm1194, %v1183, 0.0
  %v1212 = vadd.f32 %v1210, %v1211
  %1213 = vadd.xlane.f32.xlu0 %v1212
  %v1214 = vpop.xlane.xlu0 %1213
  %v1215 = vadd.f32 %v1184, %v1185
  %v1216 = vadd.f32 %v1215, %v1186
  %v1217 = vadd.f32 %v1216, %v1187
  %v1218 = vadd.f32 %v1217, %v1188
  %v1219 = vsel %vm1194, %v1189, 0.0
  %v1220 = vadd.f32 %v1218, %v1219
  %1221 = vadd.xlane.f32.xlu0 %v1220
  %v1222 = vpop.xlane.xlu0 %1221
  %v1223 = vmul.f32 %v1198, 0.001953125
  %v1224 = vmul.f32 %v1206, 0.001953125
  %v1225 = vmul.f32 %v1214, 0.001953125
  %v1226 = vmul.f32 %v1222, 0.001953125
  %v1227 = vmul.f32 %v1166, %v1166
  %v1228 = vmul.f32 %v1167, %v1167
  %v1229 = vmul.f32 %v1168, %v1168
  %v1230 = vmul.f32 %v1169, %v1169
  %v1231 = vmul.f32 %v1170, %v1170
  %v1232 = vmul.f32 %v1171, %v1171
  %v1233 = vmul.f32 %v1172, %v1172
  %v1234 = vmul.f32 %v1173, %v1173
  %v1235 = vmul.f32 %v1174, %v1174
  %v1236 = vmul.f32 %v1175, %v1175
  %v1237 = vmul.f32 %v1176, %v1176
  %v1238 = vmul.f32 %v1177, %v1177
  %v1239 = vmul.f32 %v1178, %v1178
  %v1240 = vmul.f32 %v1179, %v1179
  %v1241 = vmul.f32 %v1180, %v1180
  %v1242 = vmul.f32 %v1181, %v1181
  %v1243 = vmul.f32 %v1182, %v1182
  %v1244 = vmul.f32 %v1183, %v1183
  %v1245 = vmul.f32 %v1184, %v1184
  %v1246 = vmul.f32 %v1185, %v1185
  %v1247 = vmul.f32 %v1186, %v1186
  %v1248 = vmul.f32 %v1187, %v1187
  %v1249 = vmul.f32 %v1188, %v1188
  %v1250 = vmul.f32 %v1189, %v1189
  %v1251 = vadd.f32 %v1227, %v1228
  %v1252 = vadd.f32 %v1251, %v1229
  %v1253 = vadd.f32 %v1252, %v1230
  %v1254 = vadd.f32 %v1253, %v1231
  %v1255 = vsel %vm1194, %v1232, 0.0
  %v1256 = vadd.f32 %v1254, %v1255
  %1257 = vadd.xlane.f32.xlu0 %v1256
  %v1258 = vpop.xlane.xlu0 %1257
  %v1259 = vadd.f32 %v1233, %v1234
  %v1260 = vadd.f32 %v1259, %v1235
  %v1261 = vadd.f32 %v1260, %v1236
  %v1262 = vadd.f32 %v1261, %v1237
  %v1263 = vsel %vm1194, %v1238, 0.0
  %v1264 = vadd.f32 %v1262, %v1263
  %1265 = vadd.xlane.f32.xlu0 %v1264
  %v1266 = vpop.xlane.xlu0 %1265
  %v1267 = vadd.f32 %v1239, %v1240
  %v1268 = vadd.f32 %v1267, %v1241
  %v1269 = vadd.f32 %v1268, %v1242
  %v1270 = vadd.f32 %v1269, %v1243
  %v1271 = vsel %vm1194, %v1244, 0.0
  %v1272 = vadd.f32 %v1270, %v1271
  %1273 = vadd.xlane.f32.xlu0 %v1272
  %v1274 = vpop.xlane.xlu0 %1273
  %v1275 = vadd.f32 %v1245, %v1246
  %v1276 = vadd.f32 %v1275, %v1247
  %v1277 = vadd.f32 %v1276, %v1248
  %v1278 = vadd.f32 %v1277, %v1249
  %v1279 = vsel %vm1194, %v1250, 0.0
  %v1280 = vadd.f32 %v1278, %v1279
  %1281 = vadd.xlane.f32.xlu0 %v1280
  %v1282 = vpop.xlane.xlu0 %1281
  %v1283 = vmul.f32 %v1258, 0.001953125
  %v1284 = vmul.f32 %v1266, 0.001953125
  %v1285 = vmul.f32 %v1274, 0.001953125
  %v1286 = vmul.f32 %v1282, 0.001953125
  %v1287 = vmul.f32 %v1223, %v1223
  %v1288 = vmul.f32 %v1224, %v1224
  %v1289 = vmul.f32 %v1225, %v1225
  %v1290 = vmul.f32 %v1226, %v1226
  %v1291 = vsub.f32 %v1283, %v1287
  %v1292 = vsub.f32 %v1284, %v1288
  %v1293 = vsub.f32 %v1285, %v1289
  %v1294 = vsub.f32 %v1286, %v1290
  %v1295 = vld [vmem:[%s5] sm:$0xff]
  %v1296 = vld [vmem:[%s5 + $0x8] sm:$0xff]
  %v1297 = vld [vmem:[%s5 + $0x10] sm:$0xff]
  %v1298 = vld [vmem:[%s5 + $0x18] sm:$0xff]
  %v1299 = vadd.f32 %v1291, 1e-05
  %v1300 = vadd.f32 %v1292, 1e-05
  %v1301 = vadd.f32 %v1293, 1e-05
  %v1302 = vadd.f32 %v1294, 1e-05
  %v1303 = vrsqrt.pop %v1299
  %v1304 = vrsqrt.pop %v1300
  %v1305 = vrsqrt.pop %v1301
  %v1306 = vrsqrt.pop %v1302
  %v1307 = vmul.f32 %v1295, %v1303
  %v1308 = vmul.f32 %v1296, %v1304
  %v1309 = vmul.f32 %v1297, %v1305
  %v1310 = vmul.f32 %v1298, %v1306
  %v1311 = vld [vmem:[%s6] sm:$0xff]
  %v1312 = vld [vmem:[%s6 + $0x8] sm:$0xff]
  %v1313 = vld [vmem:[%s6 + $0x10] sm:$0xff]
  %v1314 = vld [vmem:[%s6 + $0x18] sm:$0xff]
  %v1315 = vmul.f32 %v1223, %v1307
  %v1316 = vmul.f32 %v1224, %v1308
  %v1317 = vmul.f32 %v1225, %v1309
  %v1318 = vmul.f32 %v1226, %v1310
  %v1319 = vsub.f32 %v1311, %v1315
  %v1320 = vsub.f32 %v1312, %v1316
  %v1321 = vsub.f32 %v1313, %v1317
  %v1322 = vsub.f32 %v1314, %v1318
  %1324 = vset.pattern.permute.xlu0 0
  %1325 = vperm.xlu0 %1324, %v1307
  %v1326 = vpop.permute.xlu0 %1325
  %1329 = vset.pattern.permute.xlu0 0
  %1330 = vperm.xlu0 %1329, %v1308
  %v1331 = vpop.permute.xlu0 %1330
  %1334 = vset.pattern.permute.xlu0 0
  %1335 = vperm.xlu0 %1334, %v1309
  %v1336 = vpop.permute.xlu0 %1335
  %1339 = vset.pattern.permute.xlu0 0
  %1340 = vperm.xlu0 %1339, %v1310
  %v1341 = vpop.permute.xlu0 %1340
  %v1343 = vmul.f32 %v1166, %v1326
  %v1344 = vmul.f32 %v1167, %v1326
  %v1345 = vmul.f32 %v1168, %v1326
  %v1346 = vmul.f32 %v1169, %v1326
  %v1347 = vmul.f32 %v1170, %v1326
  %v1348 = vmul.f32 %v1171, %v1326
  %v1349 = vmul.f32 %v1172, %v1331
  %v1350 = vmul.f32 %v1173, %v1331
  %v1351 = vmul.f32 %v1174, %v1331
  %v1352 = vmul.f32 %v1175, %v1331
  %v1353 = vmul.f32 %v1176, %v1331
  %v1354 = vmul.f32 %v1177, %v1331
  %v1355 = vmul.f32 %v1178, %v1336
  %v1356 = vmul.f32 %v1179, %v1336
  %v1357 = vmul.f32 %v1180, %v1336
  %v1358 = vmul.f32 %v1181, %v1336
  %v1359 = vmul.f32 %v1182, %v1336
  %v1360 = vmul.f32 %v1183, %v1336
  %v1361 = vmul.f32 %v1184, %v1341
  %v1362 = vmul.f32 %v1185, %v1341
  %v1363 = vmul.f32 %v1186, %v1341
  %v1364 = vmul.f32 %v1187, %v1341
  %v1365 = vmul.f32 %v1188, %v1341
  %v1366 = vmul.f32 %v1189, %v1341
  %1368 = vset.pattern.permute.xlu0 0
  %1369 = vperm.xlu0 %1368, %v1319
  %v1370 = vpop.permute.xlu0 %1369
  %1373 = vset.pattern.permute.xlu0 0
  %1374 = vperm.xlu0 %1373, %v1320
  %v1375 = vpop.permute.xlu0 %1374
  %1378 = vset.pattern.permute.xlu0 0
  %1379 = vperm.xlu0 %1378, %v1321
  %v1380 = vpop.permute.xlu0 %1379
  %1383 = vset.pattern.permute.xlu0 0
  %1384 = vperm.xlu0 %1383, %v1322
  %v1385 = vpop.permute.xlu0 %1384
  %v1387 = vmul.f32 %v1370, %v1139
  %v1388 = vmul.f32 %v1370, %v1143
  %v1389 = vmul.f32 %v1370, %v1147
  %v1390 = vmul.f32 %v1370, %v1151
  %v1391 = vmul.f32 %v1370, %v1155
  %v1392 = vmul.f32 %v1370, %v1159
  %v1393 = vmul.f32 %v1375, %v1139
  %v1394 = vmul.f32 %v1375, %v1143
  %v1395 = vmul.f32 %v1375, %v1147
  %v1396 = vmul.f32 %v1375, %v1151
  %v1397 = vmul.f32 %v1375, %v1155
  %v1398 = vmul.f32 %v1375, %v1159
  %v1399 = vmul.f32 %v1380, %v1139
  %v1400 = vmul.f32 %v1380, %v1143
  %v1401 = vmul.f32 %v1380, %v1147
  %v1402 = vmul.f32 %v1380, %v1151
  %v1403 = vmul.f32 %v1380, %v1155
  %v1404 = vmul.f32 %v1380, %v1159
  %v1405 = vmul.f32 %v1385, %v1139
  %v1406 = vmul.f32 %v1385, %v1143
  %v1407 = vmul.f32 %v1385, %v1147
  %v1408 = vmul.f32 %v1385, %v1151
  %v1409 = vmul.f32 %v1385, %v1155
  %v1410 = vmul.f32 %v1385, %v1159
  %v1411 = vadd.f32 %v1343, %v1387
  %v1412 = vadd.f32 %v1344, %v1388
  %v1413 = vadd.f32 %v1345, %v1389
  %v1414 = vadd.f32 %v1346, %v1390
  %v1415 = vadd.f32 %v1347, %v1391
  %v1416 = vadd.f32 %v1348, %v1392
  %v1417 = vadd.f32 %v1349, %v1393
  %v1418 = vadd.f32 %v1350, %v1394
  %v1419 = vadd.f32 %v1351, %v1395
  %v1420 = vadd.f32 %v1352, %v1396
  %v1421 = vadd.f32 %v1353, %v1397
  %v1422 = vadd.f32 %v1354, %v1398
  %v1423 = vadd.f32 %v1355, %v1399
  %v1424 = vadd.f32 %v1356, %v1400
  %v1425 = vadd.f32 %v1357, %v1401
  %v1426 = vadd.f32 %v1358, %v1402
  %v1427 = vadd.f32 %v1359, %v1403
  %v1428 = vadd.f32 %v1360, %v1404
  %v1429 = vadd.f32 %v1361, %v1405
  %v1430 = vadd.f32 %v1362, %v1406
  %v1431 = vadd.f32 %v1363, %v1407
  %v1432 = vadd.f32 %v1364, %v1408
  %v1433 = vadd.f32 %v1365, %v1409
  %v1434 = vadd.f32 %v1366, %v1410
  %v1435 = vpack.c.bf16 %v1417, %v1411
  %v1436 = vpack.c.bf16 %v1418, %v1412
  %v1437 = vpack.c.bf16 %v1419, %v1413
  %v1438 = vpack.c.bf16 %v1420, %v1414
  %v1439 = vpack.c.bf16 %v1421, %v1415
  %v1440 = vpack.c.bf16 %v1422, %v1416
  %v1441 = vpack.c.bf16 %v1429, %v1423
  %v1442 = vpack.c.bf16 %v1430, %v1424
  %v1443 = vpack.c.bf16 %v1431, %v1425
  %v1444 = vpack.c.bf16 %v1432, %v1426
  %v1445 = vpack.c.bf16 %v1433, %v1427
  %v1446 = vpack.c.bf16 %v1434, %v1428
  %1447 = vst [vmem:[#allocation2 + $0x8] sm:$0xff] %v1435
  %1448 = vst [vmem:[#allocation2 + $0x10] sm:$0xff] %v1436
  %1449 = vst [vmem:[#allocation2 + $0x18] sm:$0xff] %v1437
  %1450 = vst [vmem:[#allocation2 + $0x20] sm:$0xff] %v1438
  %1451 = vst [vmem:[#allocation2 + $0x28] sm:$0xff] %v1439
  %1452 = vst.msk [vmem:[#allocation2 + $0x30] sm:$0xff] %vm1194, %v1440
  %1453 = vst [vmem:[#allocation2 + $0x40] sm:$0xff] %v1441
  %1454 = vst [vmem:[#allocation2 + $0x48] sm:$0xff] %v1442
  %1455 = vst [vmem:[#allocation2 + $0x50] sm:$0xff] %v1443
  %1456 = vst [vmem:[#allocation2 + $0x58] sm:$0xff] %v1444
  %1457 = vst [vmem:[#allocation2 + $0x60] sm:$0xff] %v1445
  %1458 = vst.msk [vmem:[#allocation2 + $0x68] sm:$0xff] %vm1194, %v1446
  %v1459 = vld [vmem:[#allocation2] sm:$0xff]
  %v1460 = vld [vmem:[#allocation2 + $0x8] sm:$0xff]
  %v1461 = vld [vmem:[#allocation2 + $0x10] sm:$0xff]
  %v1462 = vld [vmem:[#allocation2 + $0x18] sm:$0xff]
  %v1463 = vld [vmem:[#allocation2 + $0x20] sm:$0xff]
  %v1464 = vld [vmem:[#allocation2 + $0x28] sm:$0xff]
  %v1465 = vld [vmem:[#allocation2 + $0x38] sm:$0xff]
  %v1466 = vld [vmem:[#allocation2 + $0x40] sm:$0xff]
  %v1467 = vld [vmem:[#allocation2 + $0x48] sm:$0xff]
  %v1468 = vld [vmem:[#allocation2 + $0x50] sm:$0xff]
  %v1469 = vld [vmem:[#allocation2 + $0x58] sm:$0xff]
  %v1470 = vld [vmem:[#allocation2 + $0x60] sm:$0xff]
  %1483 = vrot.lane.b32.xlu0 %v1459, 127
  %v1484 = vpop.permute.xlu0 %1483
  %1485 = vrot.lane.b32.xlu0 %v1460, 127
  %v1486 = vpop.permute.xlu0 %1485
  %1487 = vrot.lane.b32.xlu0 %v1461, 127
  %v1488 = vpop.permute.xlu0 %1487
  %1489 = vrot.lane.b32.xlu0 %v1462, 127
  %v1490 = vpop.permute.xlu0 %1489
  %1491 = vrot.lane.b32.xlu0 %v1463, 127
  %v1492 = vpop.permute.xlu0 %1491
  %1493 = vrot.lane.b32.xlu0 %v1464, 127
  %v1494 = vpop.permute.xlu0 %1493
  %1495 = vrot.lane.b32.xlu0 %v1465, 127
  %v1496 = vpop.permute.xlu0 %1495
  %1497 = vrot.lane.b32.xlu0 %v1466, 127
  %v1498 = vpop.permute.xlu0 %1497
  %1499 = vrot.lane.b32.xlu0 %v1467, 127
  %v1500 = vpop.permute.xlu0 %1499
  %1501 = vrot.lane.b32.xlu0 %v1468, 127
  %v1502 = vpop.permute.xlu0 %1501
  %1503 = vrot.lane.b32.xlu0 %v1469, 127
  %v1504 = vpop.permute.xlu0 %1503
  %1505 = vrot.lane.b32.xlu0 %v1470, 127
  %v1506 = vpop.permute.xlu0 %1505
  %v1507 = vsel %vm107, %v1484, %v1486
  %v1508 = vsel %vm107, %v1486, %v1488
  %v1509 = vsel %vm107, %v1488, %v1490
  %v1510 = vsel %vm107, %v1490, %v1492
  %v1511 = vsel %vm107, %v1492, %v1494
  %v1512 = vsel %vm107, %v1496, %v1498
  %v1513 = vsel %vm107, %v1498, %v1500
  %v1514 = vsel %vm107, %v1500, %v1502
  %v1515 = vsel %vm107, %v1502, %v1504
  %v1516 = vsel %vm107, %v1504, %v1506
  %1517 = vrot.lane.b32.xlu0 %v1459, 126
  %v1518 = vpop.permute.xlu0 %1517
  %1519 = vrot.lane.b32.xlu0 %v1460, 126
  %v1520 = vpop.permute.xlu0 %1519
  %1521 = vrot.lane.b32.xlu0 %v1461, 126
  %v1522 = vpop.permute.xlu0 %1521
  %1523 = vrot.lane.b32.xlu0 %v1462, 126
  %v1524 = vpop.permute.xlu0 %1523
  %1525 = vrot.lane.b32.xlu0 %v1463, 126
  %v1526 = vpop.permute.xlu0 %1525
  %1527 = vrot.lane.b32.xlu0 %v1464, 126
  %v1528 = vpop.permute.xlu0 %1527
  %1529 = vrot.lane.b32.xlu0 %v1465, 126
  %v1530 = vpop.permute.xlu0 %1529
  %1531 = vrot.lane.b32.xlu0 %v1466, 126
  %v1532 = vpop.permute.xlu0 %1531
  %1533 = vrot.lane.b32.xlu0 %v1467, 126
  %v1534 = vpop.permute.xlu0 %1533
  %1535 = vrot.lane.b32.xlu0 %v1468, 126
  %v1536 = vpop.permute.xlu0 %1535
  %1537 = vrot.lane.b32.xlu0 %v1469, 126
  %v1538 = vpop.permute.xlu0 %1537
  %1539 = vrot.lane.b32.xlu0 %v1470, 126
  %v1540 = vpop.permute.xlu0 %1539
  %v1541 = vsel %vm125, %v1518, %v1520
  %v1542 = vsel %vm125, %v1520, %v1522
  %v1543 = vsel %vm125, %v1522, %v1524
  %v1544 = vsel %vm125, %v1524, %v1526
  %v1545 = vsel %vm125, %v1526, %v1528
  %v1546 = vsel %vm125, %v1530, %v1532
  %v1547 = vsel %vm125, %v1532, %v1534
  %v1548 = vsel %vm125, %v1534, %v1536
  %v1549 = vsel %vm125, %v1536, %v1538
  %v1550 = vsel %vm125, %v1538, %v1540
  %v1551 = vld [vmem:[%s7] sm:$0xf]
  %v1552 = vld [vmem:[%s7 + $0x4] sm:$0xf]
  %v1553 = vld [vmem:[%s7 + $0x8] sm:$0xf]
  %v1554 = vld [vmem:[%s7 + $0xc] sm:$0xf]
  %v1555 = vld [vmem:[#allocation2] sm:$0xff]
  %v1556 = vld [vmem:[#allocation2 + $0x8] sm:$0xff]
  %v1557 = vld [vmem:[#allocation2 + $0x10] sm:$0xff]
  %v1558 = vld [vmem:[#allocation2 + $0x18] sm:$0xff]
  %v1559 = vld [vmem:[#allocation2 + $0x20] sm:$0xff]
  %v1560 = vld [vmem:[#allocation2 + $0x28] sm:$0xff]
  %v1561 = vld [vmem:[#allocation2 + $0x30] sm:$0xff]
  %v1562 = vld [vmem:[#allocation2 + $0x38] sm:$0xff]
  %v1563 = vld [vmem:[#allocation2 + $0x40] sm:$0xff]
  %v1564 = vld [vmem:[#allocation2 + $0x48] sm:$0xff]
  %v1565 = vld [vmem:[#allocation2 + $0x50] sm:$0xff]
  %v1566 = vld [vmem:[#allocation2 + $0x58] sm:$0xff]
  %v1567 = vld [vmem:[#allocation2 + $0x60] sm:$0xff]
  %v1568 = vld [vmem:[#allocation2 + $0x68] sm:$0xff]
  %1581 = vrot.lane.b32.xlu0 %v1556, 127
  %v1582 = vpop.permute.xlu0 %1581
  %1583 = vrot.lane.b32.xlu0 %v1557, 127
  %v1584 = vpop.permute.xlu0 %1583
  %1585 = vrot.lane.b32.xlu0 %v1558, 127
  %v1586 = vpop.permute.xlu0 %1585
  %1587 = vrot.lane.b32.xlu0 %v1559, 127
  %v1588 = vpop.permute.xlu0 %1587
  %1589 = vrot.lane.b32.xlu0 %v1560, 127
  %v1590 = vpop.permute.xlu0 %1589
  %1591 = vrot.lane.b32.xlu0 %v1561, 127
  %v1592 = vpop.permute.xlu0 %1591
  %1593 = vrot.lane.b32.xlu0 %v1563, 127
  %v1594 = vpop.permute.xlu0 %1593
  %1595 = vrot.lane.b32.xlu0 %v1564, 127
  %v1596 = vpop.permute.xlu0 %1595
  %1597 = vrot.lane.b32.xlu0 %v1565, 127
  %v1598 = vpop.permute.xlu0 %1597
  %1599 = vrot.lane.b32.xlu0 %v1566, 127
  %v1600 = vpop.permute.xlu0 %1599
  %1601 = vrot.lane.b32.xlu0 %v1567, 127
  %v1602 = vpop.permute.xlu0 %1601
  %1603 = vrot.lane.b32.xlu0 %v1568, 127
  %v1604 = vpop.permute.xlu0 %1603
  %v1605 = vsel %vm107, %v1582, %v1584
  %v1606 = vsel %vm107, %v1584, %v1586
  %v1607 = vsel %vm107, %v1586, %v1588
  %v1608 = vsel %vm107, %v1588, %v1590
  %v1609 = vsel %vm107, %v1590, %v1592
  %v1610 = vsel %vm107, %v1594, %v1596
  %v1611 = vsel %vm107, %v1596, %v1598
  %v1612 = vsel %vm107, %v1598, %v1600
  %v1613 = vsel %vm107, %v1600, %v1602
  %v1614 = vsel %vm107, %v1602, %v1604
  %1615 = vrot.lane.b32.xlu0 %v1556, 126
  %v1616 = vpop.permute.xlu0 %1615
  %1617 = vrot.lane.b32.xlu0 %v1557, 126
  %v1618 = vpop.permute.xlu0 %1617
  %1619 = vrot.lane.b32.xlu0 %v1558, 126
  %v1620 = vpop.permute.xlu0 %1619
  %1621 = vrot.lane.b32.xlu0 %v1559, 126
  %v1622 = vpop.permute.xlu0 %1621
  %1623 = vrot.lane.b32.xlu0 %v1560, 126
  %v1624 = vpop.permute.xlu0 %1623
  %1625 = vrot.lane.b32.xlu0 %v1561, 126
  %v1626 = vpop.permute.xlu0 %1625
  %1627 = vrot.lane.b32.xlu0 %v1563, 126
  %v1628 = vpop.permute.xlu0 %1627
  %1629 = vrot.lane.b32.xlu0 %v1564, 126
  %v1630 = vpop.permute.xlu0 %1629
  %1631 = vrot.lane.b32.xlu0 %v1565, 126
  %v1632 = vpop.permute.xlu0 %1631
  %1633 = vrot.lane.b32.xlu0 %v1566, 126
  %v1634 = vpop.permute.xlu0 %1633
  %1635 = vrot.lane.b32.xlu0 %v1567, 126
  %v1636 = vpop.permute.xlu0 %1635
  %1637 = vrot.lane.b32.xlu0 %v1568, 126
  %v1638 = vpop.permute.xlu0 %1637
  %v1639 = vsel %vm125, %v1616, %v1618
  %v1640 = vsel %vm125, %v1618, %v1620
  %v1641 = vsel %vm125, %v1620, %v1622
  %v1642 = vsel %vm125, %v1622, %v1624
  %v1643 = vsel %vm125, %v1624, %v1626
  %v1644 = vsel %vm125, %v1628, %v1630
  %v1645 = vsel %vm125, %v1630, %v1632
  %v1646 = vsel %vm125, %v1632, %v1634
  %v1647 = vsel %vm125, %v1634, %v1636
  %v1648 = vsel %vm125, %v1636, %v1638
  %s1649 = scalar_lea.vmem %s7, 16
  %v1650 = vld [vmem:[%s1649] sm:$0xf]
  %v1651 = vld [vmem:[%s1649 + $0x4] sm:$0xf]
  %v1652 = vld [vmem:[%s1649 + $0x8] sm:$0xf]
  %v1653 = vld [vmem:[%s1649 + $0xc] sm:$0xf]
  %v1658 = vunpack.c.l.b16 %v1650
  %v1659 = vunpack.c.l.b16 %v1651
  %v1660 = vunpack.c.l.b16 %v1652
  %v1661 = vunpack.c.l.b16 %v1653
  %v1662 = vpack.c.b16 %v1659, %v1658
  %v1663 = vpack.c.b16 %v1661, %v1660
  %1666 = vrot.lane.b32.xlu0 %v1555, 1
  %v1667 = vpop.permute.xlu0 %1666
  %1668 = vrot.lane.b32.xlu0 %v1556, 1
  %v1669 = vpop.permute.xlu0 %1668
  %1670 = vrot.lane.b32.xlu0 %v1557, 1
  %v1671 = vpop.permute.xlu0 %1670
  %1672 = vrot.lane.b32.xlu0 %v1558, 1
  %v1673 = vpop.permute.xlu0 %1672
  %1674 = vrot.lane.b32.xlu0 %v1559, 1
  %v1675 = vpop.permute.xlu0 %1674
  %1676 = vrot.lane.b32.xlu0 %v1560, 1
  %v1677 = vpop.permute.xlu0 %1676
  %1678 = vrot.lane.b32.xlu0 %v1561, 1
  %v1679 = vpop.permute.xlu0 %1678
  %1680 = vrot.lane.b32.xlu0 %v1562, 1
  %v1681 = vpop.permute.xlu0 %1680
  %1682 = vrot.lane.b32.xlu0 %v1563, 1
  %v1683 = vpop.permute.xlu0 %1682
  %1684 = vrot.lane.b32.xlu0 %v1564, 1
  %v1685 = vpop.permute.xlu0 %1684
  %1686 = vrot.lane.b32.xlu0 %v1565, 1
  %v1687 = vpop.permute.xlu0 %1686
  %1688 = vrot.lane.b32.xlu0 %v1566, 1
  %v1689 = vpop.permute.xlu0 %1688
  %1690 = vrot.lane.b32.xlu0 %v1567, 1
  %v1691 = vpop.permute.xlu0 %1690
  %1692 = vrot.lane.b32.xlu0 %v1568, 1
  %v1693 = vpop.permute.xlu0 %1692
  %1694 = vrot.lane.b32.xlu0 %v1582, 1
  %v1695 = vpop.permute.xlu0 %1694
  %1696 = vrot.lane.b32.xlu0 %v1605, 1
  %v1697 = vpop.permute.xlu0 %1696
  %1698 = vrot.lane.b32.xlu0 %v1606, 1
  %v1699 = vpop.permute.xlu0 %1698
  %1700 = vrot.lane.b32.xlu0 %v1607, 1
  %v1701 = vpop.permute.xlu0 %1700
  %1702 = vrot.lane.b32.xlu0 %v1608, 1
  %v1703 = vpop.permute.xlu0 %1702
  %1704 = vrot.lane.b32.xlu0 %v1609, 1
  %v1705 = vpop.permute.xlu0 %1704
  %1706 = vrot.lane.b32.xlu0 %v1592, 1
  %v1707 = vpop.permute.xlu0 %1706
  %1708 = vrot.lane.b32.xlu0 %v1594, 1
  %v1709 = vpop.permute.xlu0 %1708
  %1710 = vrot.lane.b32.xlu0 %v1610, 1
  %v1711 = vpop.permute.xlu0 %1710
  %1712 = vrot.lane.b32.xlu0 %v1611, 1
  %v1713 = vpop.permute.xlu0 %1712
  %1714 = vrot.lane.b32.xlu0 %v1612, 1
  %v1715 = vpop.permute.xlu0 %1714
  %1716 = vrot.lane.b32.xlu0 %v1613, 1
  %v1717 = vpop.permute.xlu0 %1716
  %1718 = vrot.lane.b32.xlu0 %v1614, 1
  %v1719 = vpop.permute.xlu0 %1718
  %1720 = vrot.lane.b32.xlu0 %v1604, 1
  %v1721 = vpop.permute.xlu0 %1720
  %1722 = vrot.lane.b32.xlu0 %v1616, 1
  %v1723 = vpop.permute.xlu0 %1722
  %1724 = vrot.lane.b32.xlu0 %v1639, 1
  %v1725 = vpop.permute.xlu0 %1724
  %1726 = vrot.lane.b32.xlu0 %v1640, 1
  %v1727 = vpop.permute.xlu0 %1726
  %1728 = vrot.lane.b32.xlu0 %v1641, 1
  %v1729 = vpop.permute.xlu0 %1728
  %1730 = vrot.lane.b32.xlu0 %v1642, 1
  %v1731 = vpop.permute.xlu0 %1730
  %1732 = vrot.lane.b32.xlu0 %v1643, 1
  %v1733 = vpop.permute.xlu0 %1732
  %1734 = vrot.lane.b32.xlu0 %v1626, 1
  %v1735 = vpop.permute.xlu0 %1734
  %1736 = vrot.lane.b32.xlu0 %v1628, 1
  %v1737 = vpop.permute.xlu0 %1736
  %1738 = vrot.lane.b32.xlu0 %v1644, 1
  %v1739 = vpop.permute.xlu0 %1738
  %1740 = vrot.lane.b32.xlu0 %v1645, 1
  %v1741 = vpop.permute.xlu0 %1740
  %1742 = vrot.lane.b32.xlu0 %v1646, 1
  %v1743 = vpop.permute.xlu0 %1742
  %1744 = vrot.lane.b32.xlu0 %v1647, 1
  %v1745 = vpop.permute.xlu0 %1744
  %1746 = vrot.lane.b32.xlu0 %v1648, 1
  %v1747 = vpop.permute.xlu0 %1746
  %1748 = vrot.lane.b32.xlu0 %v1638, 1
  %v1749 = vpop.permute.xlu0 %1748
  %v1750 = vsel %vm293, %v1667, %v1669
  %v1751 = vsel %vm293, %v1669, %v1671
  %v1752 = vsel %vm293, %v1671, %v1673
  %v1753 = vsel %vm293, %v1673, %v1675
  %v1754 = vsel %vm293, %v1675, %v1677
  %v1755 = vsel %vm293, %v1677, %v1679
  %v1756 = vsel %vm293, %v1681, %v1683
  %v1757 = vsel %vm293, %v1683, %v1685
  %v1758 = vsel %vm293, %v1685, %v1687
  %v1759 = vsel %vm293, %v1687, %v1689
  %v1760 = vsel %vm293, %v1689, %v1691
  %v1761 = vsel %vm293, %v1691, %v1693
  %v1762 = vsel %vm293, %v1695, %v1697
  %v1763 = vsel %vm293, %v1697, %v1699
  %v1764 = vsel %vm293, %v1699, %v1701
  %v1765 = vsel %vm293, %v1701, %v1703
  %v1766 = vsel %vm293, %v1703, %v1705
  %v1767 = vsel %vm293, %v1705, %v1707
  %v1768 = vsel %vm293, %v1709, %v1711
  %v1769 = vsel %vm293, %v1711, %v1713
  %v1770 = vsel %vm293, %v1713, %v1715
  %v1771 = vsel %vm293, %v1715, %v1717
  %v1772 = vsel %vm293, %v1717, %v1719
  %v1773 = vsel %vm293, %v1719, %v1721
  %v1774 = vsel %vm293, %v1723, %v1725
  %v1775 = vsel %vm293, %v1725, %v1727
  %v1776 = vsel %vm293, %v1727, %v1729
  %v1777 = vsel %vm293, %v1729, %v1731
  %v1778 = vsel %vm293, %v1731, %v1733
  %v1779 = vsel %vm293, %v1733, %v1735
  %v1780 = vsel %vm293, %v1737, %v1739
  %v1781 = vsel %vm293, %v1739, %v1741
  %v1782 = vsel %vm293, %v1741, %v1743
  %v1783 = vsel %vm293, %v1743, %v1745
  %v1784 = vsel %vm293, %v1745, %v1747
  %v1785 = vsel %vm293, %v1747, %v1749
  %vm1822 = vcmask 785408
  %v1824 = vsel %vm1822, %v1662, 0
  %v1827 = vsel %vm1822, %v1663, 0
  %1829 = vmatprep.subr.bf16.mxu0 %v1751
  %1830 = vmatpush1.bf16.msra.mxu0 %v1750
  %1831 = vmatprep.subr.bf16.mxu0 %v1757
  %1832 = vmatpush1.bf16.msra.mxu0 %v1756
  %1833 = vmatprep.subr.bf16.mxu0 %v1763
  %1834 = vmatpush1.bf16.msra.mxu0 %v1762
  %1835 = vmatprep.subr.bf16.mxu0 %v1769
  %1836 = vmatpush1.bf16.msra.mxu0 %v1768
  %1837 = vmatprep.subr.bf16.mxu0 %v1775
  %1838 = vmatpush1.bf16.msra.mxu0 %v1774
  %1839 = vmatprep.subr.bf16.mxu0 %v1781
  %1840 = vmatpush1.bf16.msra.mxu0 %v1780
  %1841 = vmatprep.subr.bf16.mxu0 0
  %1842 = vmatpush1.bf16.msra.mxu0 0
  %1843 = vmatprep.subr.bf16.mxu0 0
  %1844 = vmatpush1.bf16.msra.mxu0 0
  %1845 = vmatprep.subr.bf16.mxu0 0
  %1846 = vmatpush1.bf16.msra.mxu0 0
  %1847 = vmatprep.subr.bf16.mxu0 0
  %1848 = vmatpush1.bf16.msra.mxu0 0
  %1849 = vmatprep.subr.bf16.mxu0 0
  %1850 = vmatpush1.bf16.msra.mxu0 0
  %1851 = vmatprep.subr.bf16.mxu0 0
  %1852 = vmatpush1.bf16.msra.mxu0 0
  %1853 = vmatprep.subr.bf16.mxu0 0
  %1854 = vmatpush1.bf16.msra.mxu0 0
  %1855 = vmatprep.subr.bf16.mxu0 0
  %1856 = vmatpush1.bf16.msra.mxu0 0
  %1857 = vmatprep.subr.bf16.mxu0 0
  %1858 = vmatpush1.bf16.msra.mxu0 0
  %1859 = vmatprep.subr.bf16.mxu0 0
  %1860 = vmatpush1.bf16.msra.mxu0 0
  %1861 = vmatprep.mubr.bf16.mxu0 0
  %1862 = vmatmul.mubr.bf16.gmra.mrb[0].mxu0 %v1824
  %v1863 = vpop.f32.mrb[0].mxu0
  %v1864 = vadd.f32 0.0, %v1863
  %v1865 = vpop.f32.mrb[0].mxu0
  %v1866 = vadd.f32 0.0, %v1865
  %v1867 = vpop.f32.mrb[0].mxu0
  %v1868 = vadd.f32 0.0, %v1867
  %v1869 = vpop.f32.mrb[0].mxu0
  %v1870 = vadd.f32 0.0, %v1869
  %1871 = vmatprep.mubr.bf16.mxu0 0
  %1872 = vmatmul.mubr.bf16.gmra.mrb[0].mxu0 %v1827
  %v1873 = vpop.f32.mrb[0].mxu0
  %v1874 = vadd.f32 0.0, %v1873
  %v1875 = vpop.f32.mrb[0].mxu0
  %v1876 = vadd.f32 0.0, %v1875
  %v1877 = vpop.f32.mrb[0].mxu0
  %v1878 = vadd.f32 0.0, %v1877
  %v1879 = vpop.f32.mrb[0].mxu0
  %v1880 = vadd.f32 0.0, %v1879
  %1881 = vdwg.mxu0
  %1882 = vmatprep.subr.bf16.mxu0 %v1753
  %1883 = vmatpush1.bf16.msra.mxu0 %v1752
  %1884 = vmatprep.subr.bf16.mxu0 %v1759
  %1885 = vmatpush1.bf16.msra.mxu0 %v1758
  %1886 = vmatprep.subr.bf16.mxu0 %v1765
  %1887 = vmatpush1.bf16.msra.mxu0 %v1764
  %1888 = vmatprep.subr.bf16.mxu0 %v1771
  %1889 = vmatpush1.bf16.msra.mxu0 %v1770
  %1890 = vmatprep.subr.bf16.mxu0 %v1777
  %1891 = vmatpush1.bf16.msra.mxu0 %v1776
  %1892 = vmatprep.subr.bf16.mxu0 %v1783
  %1893 = vmatpush1.bf16.msra.mxu0 %v1782
  %1894 = vmatprep.subr.bf16.mxu0 0
  %1895 = vmatpush1.bf16.msra.mxu0 0
  %1896 = vmatprep.subr.bf16.mxu0 0
  %1897 = vmatpush1.bf16.msra.mxu0 0
  %1898 = vmatprep.subr.bf16.mxu0 0
  %1899 = vmatpush1.bf16.msra.mxu0 0
  %1900 = vmatprep.subr.bf16.mxu0 0
  %1901 = vmatpush1.bf16.msra.mxu0 0
  %1902 = vmatprep.subr.bf16.mxu0 0
  %1903 = vmatpush1.bf16.msra.mxu0 0
  %1904 = vmatprep.subr.bf16.mxu0 0
  %1905 = vmatpush1.bf16.msra.mxu0 0
  %1906 = vmatprep.subr.bf16.mxu0 0
  %1907 = vmatpush1.bf16.msra.mxu0 0
  %1908 = vmatprep.subr.bf16.mxu0 0
  %1909 = vmatpush1.bf16.msra.mxu0 0
  %1910 = vmatprep.subr.bf16.mxu0 0
  %1911 = vmatpush1.bf16.msra.mxu0 0
  %1912 = vmatprep.subr.bf16.mxu0 0
  %1913 = vmatpush1.bf16.msra.mxu0 0
  %1914 = vmatprep.mubr.bf16.mxu0 0
  %1915 = vmatmul.mubr.bf16.gmra.mrb[0].mxu0 %v1824
  %v1916 = vpop.f32.mrb[0].mxu0
  %v1917 = vadd.f32 0.0, %v1916
  %v1918 = vpop.f32.mrb[0].mxu0
  %v1919 = vadd.f32 0.0, %v1918
  %v1920 = vpop.f32.mrb[0].mxu0
  %v1921 = vadd.f32 0.0, %v1920
  %v1922 = vpop.f32.mrb[0].mxu0
  %v1923 = vadd.f32 0.0, %v1922
  %1924 = vmatprep.mubr.bf16.mxu0 0
  %1925 = vmatmul.mubr.bf16.gmra.mrb[0].mxu0 %v1827
  %v1926 = vpop.f32.mrb[0].mxu0
  %v1927 = vadd.f32 0.0, %v1926
  %v1928 = vpop.f32.mrb[0].mxu0
  %v1929 = vadd.f32 0.0, %v1928
  %v1930 = vpop.f32.mrb[0].mxu0
  %v1931 = vadd.f32 0.0, %v1930
  %v1932 = vpop.f32.mrb[0].mxu0
  %v1933 = vadd.f32 0.0, %v1932
  %1934 = vdwg.mxu0
  %1935 = vmatprep.subr.bf16.mxu0 %v1755
  %1936 = vmatpush1.bf16.msra.mxu0 %v1754
  %1937 = vmatprep.subr.bf16.mxu0 %v1761
  %1938 = vmatpush1.bf16.msra.mxu0 %v1760
  %1939 = vmatprep.subr.bf16.mxu0 %v1767
  %1940 = vmatpush1.bf16.msra.mxu0 %v1766
  %1941 = vmatprep.subr.bf16.mxu0 %v1773
  %1942 = vmatpush1.bf16.msra.mxu0 %v1772
  %1943 = vmatprep.subr.bf16.mxu0 %v1779
  %1944 = vmatpush1.bf16.msra.mxu0 %v1778
  %1945 = vmatprep.subr.bf16.mxu0 %v1785
  %1946 = vmatpush1.bf16.msra.mxu0 %v1784
  %1947 = vmatprep.subr.bf16.mxu0 0
  %1948 = vmatpush1.bf16.msra.mxu0 0
  %1949 = vmatprep.subr.bf16.mxu0 0
  %1950 = vmatpush1.bf16.msra.mxu0 0
  %1951 = vmatprep.subr.bf16.mxu0 0
  %1952 = vmatpush1.bf16.msra.mxu0 0
  %1953 = vmatprep.subr.bf16.mxu0 0
  %1954 = vmatpush1.bf16.msra.mxu0 0
  %1955 = vmatprep.subr.bf16.mxu0 0
  %1956 = vmatpush1.bf16.msra.mxu0 0
  %1957 = vmatprep.subr.bf16.mxu0 0
  %1958 = vmatpush1.bf16.msra.mxu0 0
  %1959 = vmatprep.subr.bf16.mxu0 0
  %1960 = vmatpush1.bf16.msra.mxu0 0
  %1961 = vmatprep.subr.bf16.mxu0 0
  %1962 = vmatpush1.bf16.msra.mxu0 0
  %1963 = vmatprep.subr.bf16.mxu0 0
  %1964 = vmatpush1.bf16.msra.mxu0 0
  %1965 = vmatprep.subr.bf16.mxu0 0
  %1966 = vmatpush1.bf16.msra.mxu0 0
  %1967 = vmatprep.mubr.bf16.mxu0 0
  %1968 = vmatmul.mubr.bf16.gmra.mrb[0].mxu0 %v1824
  %v1969 = vpop.f32.mrb[0].mxu0
  %v1970 = vadd.f32 0.0, %v1969
  %v1971 = vpop.f32.mrb[0].mxu0
  %v1972 = vadd.f32 0.0, %v1971
  %v1973 = vpop.f32.mrb[0].mxu0
  %v1974 = vadd.f32 0.0, %v1973
  %v1975 = vpop.f32.mrb[0].mxu0
  %v1976 = vadd.f32 0.0, %v1975
  %1977 = vmatprep.mubr.bf16.mxu0 0
  %1978 = vmatmul.mubr.bf16.gmra.mrb[0].mxu0 %v1827
  %v1979 = vpop.f32.mrb[0].mxu0
  %v1980 = vadd.f32 0.0, %v1979
  %v1981 = vpop.f32.mrb[0].mxu0
  %v1982 = vadd.f32 0.0, %v1981
  %v1983 = vpop.f32.mrb[0].mxu0
  %v1984 = vadd.f32 0.0, %v1983
  %v1985 = vpop.f32.mrb[0].mxu0
  %v1986 = vadd.f32 0.0, %v1985
  %1987 = vdwg.mxu0
  %v1992 = vunpack.c.l.b16 %v1551
  %v1993 = vunpack.c.l.b16 %v1552
  %v1994 = vunpack.c.l.b16 %v1553
  %v1995 = vunpack.c.l.b16 %v1554
  %v1996 = vpack.c.b16 %v1993, %v1992
  %v1997 = vpack.c.b16 %v1995, %v1994
  %1998 = vrot.lane.b32.xlu0 %v1459, 19
  %v1999 = vpop.permute.xlu0 %1998
  %2000 = vrot.lane.b32.xlu0 %v1460, 19
  %v2001 = vpop.permute.xlu0 %2000
  %2002 = vrot.lane.b32.xlu0 %v1461, 19
  %v2003 = vpop.permute.xlu0 %2002
  %2004 = vrot.lane.b32.xlu0 %v1462, 19
  %v2005 = vpop.permute.xlu0 %2004
  %2006 = vrot.lane.b32.xlu0 %v1463, 19
  %v2007 = vpop.permute.xlu0 %2006
  %2008 = vrot.lane.b32.xlu0 %v1464, 19
  %v2009 = vpop.permute.xlu0 %2008
  %2010 = vrot.lane.b32.xlu0 %v1465, 19
  %v2011 = vpop.permute.xlu0 %2010
  %2012 = vrot.lane.b32.xlu0 %v1466, 19
  %v2013 = vpop.permute.xlu0 %2012
  %2014 = vrot.lane.b32.xlu0 %v1467, 19
  %v2015 = vpop.permute.xlu0 %2014
  %2016 = vrot.lane.b32.xlu0 %v1468, 19
  %v2017 = vpop.permute.xlu0 %2016
  %2018 = vrot.lane.b32.xlu0 %v1469, 19
  %v2019 = vpop.permute.xlu0 %2018
  %2020 = vrot.lane.b32.xlu0 %v1470, 19
  %v2021 = vpop.permute.xlu0 %2020
  %2022 = vrot.lane.b32.xlu0 %v1507, 19
  %v2023 = vpop.permute.xlu0 %2022
  %2024 = vrot.lane.b32.xlu0 %v1508, 19
  %v2025 = vpop.permute.xlu0 %2024
  %2026 = vrot.lane.b32.xlu0 %v1509, 19
  %v2027 = vpop.permute.xlu0 %2026
  %2028 = vrot.lane.b32.xlu0 %v1510, 19
  %v2029 = vpop.permute.xlu0 %2028
  %2030 = vrot.lane.b32.xlu0 %v1511, 19
  %v2031 = vpop.permute.xlu0 %2030
  %2032 = vrot.lane.b32.xlu0 %v1494, 19
  %v2033 = vpop.permute.xlu0 %2032
  %2034 = vrot.lane.b32.xlu0 %v1512, 19
  %v2035 = vpop.permute.xlu0 %2034
  %2036 = vrot.lane.b32.xlu0 %v1513, 19
  %v2037 = vpop.permute.xlu0 %2036
  %2038 = vrot.lane.b32.xlu0 %v1514, 19
  %v2039 = vpop.permute.xlu0 %2038
  %2040 = vrot.lane.b32.xlu0 %v1515, 19
  %v2041 = vpop.permute.xlu0 %2040
  %2042 = vrot.lane.b32.xlu0 %v1516, 19
  %v2043 = vpop.permute.xlu0 %2042
  %2044 = vrot.lane.b32.xlu0 %v1506, 19
  %v2045 = vpop.permute.xlu0 %2044
  %2046 = vrot.lane.b32.xlu0 %v1541, 19
  %v2047 = vpop.permute.xlu0 %2046
  %2048 = vrot.lane.b32.xlu0 %v1542, 19
  %v2049 = vpop.permute.xlu0 %2048
  %2050 = vrot.lane.b32.xlu0 %v1543, 19
  %v2051 = vpop.permute.xlu0 %2050
  %2052 = vrot.lane.b32.xlu0 %v1544, 19
  %v2053 = vpop.permute.xlu0 %2052
  %2054 = vrot.lane.b32.xlu0 %v1545, 19
  %v2055 = vpop.permute.xlu0 %2054
  %2056 = vrot.lane.b32.xlu0 %v1528, 19
  %v2057 = vpop.permute.xlu0 %2056
  %2058 = vrot.lane.b32.xlu0 %v1546, 19
  %v2059 = vpop.permute.xlu0 %2058
  %2060 = vrot.lane.b32.xlu0 %v1547, 19
  %v2061 = vpop.permute.xlu0 %2060
  %2062 = vrot.lane.b32.xlu0 %v1548, 19
  %v2063 = vpop.permute.xlu0 %2062
  %2064 = vrot.lane.b32.xlu0 %v1549, 19
  %v2065 = vpop.permute.xlu0 %2064
  %2066 = vrot.lane.b32.xlu0 %v1550, 19
  %v2067 = vpop.permute.xlu0 %2066
  %2068 = vrot.lane.b32.xlu0 %v1540, 19
  %v2069 = vpop.permute.xlu0 %2068
  %v2070 = vsel %vm542, %v1999, %v2001
  %v2071 = vsel %vm542, %v2001, %v2003
  %v2072 = vsel %vm542, %v2003, %v2005
  %v2073 = vsel %vm542, %v2005, %v2007
  %v2074 = vsel %vm542, %v2007, %v2009
  %v2075 = vsel %vm542, %v2011, %v2013
  %v2076 = vsel %vm542, %v2013, %v2015
  %v2077 = vsel %vm542, %v2015, %v2017
  %v2078 = vsel %vm542, %v2017, %v2019
  %v2079 = vsel %vm542, %v2019, %v2021
  %v2080 = vsel %vm542, %v2023, %v2025
  %v2081 = vsel %vm542, %v2025, %v2027
  %v2082 = vsel %vm542, %v2027, %v2029
  %v2083 = vsel %vm542, %v2029, %v2031
  %v2084 = vsel %vm542, %v2031, %v2033
  %v2085 = vsel %vm542, %v2035, %v2037
  %v2086 = vsel %vm542, %v2037, %v2039
  %v2087 = vsel %vm542, %v2039, %v2041
  %v2088 = vsel %vm542, %v2041, %v2043
  %v2089 = vsel %vm542, %v2043, %v2045
  %v2090 = vsel %vm542, %v2047, %v2049
  %v2091 = vsel %vm542, %v2049, %v2051
  %v2092 = vsel %vm542, %v2051, %v2053
  %v2093 = vsel %vm542, %v2053, %v2055
  %v2094 = vsel %vm542, %v2055, %v2057
  %v2095 = vsel %vm542, %v2059, %v2061
  %v2096 = vsel %vm542, %v2061, %v2063
  %v2097 = vsel %vm542, %v2063, %v2065
  %v2098 = vsel %vm542, %v2065, %v2067
  %v2099 = vsel %vm542, %v2067, %v2069
  %v2137 = vsel %vm1822, %v1996, 0
  %v2140 = vsel %vm1822, %v1997, 0
  %2142 = vmatprep.subr.bf16.mxu0 %v2071
  %2143 = vmatpush1.bf16.msra.mxu0 %v2070
  %2144 = vmatprep.subr.bf16.mxu0 %v2076
  %2145 = vmatpush1.bf16.msra.mxu0 %v2075
  %2146 = vmatprep.subr.bf16.mxu0 %v2081
  %2147 = vmatpush1.bf16.msra.mxu0 %v2080
  %2148 = vmatprep.subr.bf16.mxu0 %v2086
  %2149 = vmatpush1.bf16.msra.mxu0 %v2085
  %2150 = vmatprep.subr.bf16.mxu0 %v2091
  %2151 = vmatpush1.bf16.msra.mxu0 %v2090
  %2152 = vmatprep.subr.bf16.mxu0 %v2096
  %2153 = vmatpush1.bf16.msra.mxu0 %v2095
  %2154 = vmatprep.subr.bf16.mxu0 0
  %2155 = vmatpush1.bf16.msra.mxu0 0
  %2156 = vmatprep.subr.bf16.mxu0 0
  %2157 = vmatpush1.bf16.msra.mxu0 0
  %2158 = vmatprep.subr.bf16.mxu0 0
  %2159 = vmatpush1.bf16.msra.mxu0 0
  %2160 = vmatprep.subr.bf16.mxu0 0
  %2161 = vmatpush1.bf16.msra.mxu0 0
  %2162 = vmatprep.subr.bf16.mxu0 0
  %2163 = vmatpush1.bf16.msra.mxu0 0
  %2164 = vmatprep.subr.bf16.mxu0 0
  %2165 = vmatpush1.bf16.msra.mxu0 0
  %2166 = vmatprep.subr.bf16.mxu0 0
  %2167 = vmatpush1.bf16.msra.mxu0 0
  %2168 = vmatprep.subr.bf16.mxu0 0
  %2169 = vmatpush1.bf16.msra.mxu0 0
  %2170 = vmatprep.subr.bf16.mxu0 0
  %2171 = vmatpush1.bf16.msra.mxu0 0
  %2172 = vmatprep.subr.bf16.mxu0 0
  %2173 = vmatpush1.bf16.msra.mxu0 0
  %2174 = vmatprep.mubr.bf16.mxu0 0
  %2175 = vmatmul.mubr.bf16.gmra.mrb[0].mxu0 %v2137
  %v2176 = vpop.f32.mrb[0].mxu0
  %v2177 = vadd.f32 %v1864, %v2176
  %v2178 = vpop.f32.mrb[0].mxu0
  %v2179 = vadd.f32 %v1866, %v2178
  %v2180 = vpop.f32.mrb[0].mxu0
  %v2181 = vadd.f32 %v1868, %v2180
  %v2182 = vpop.f32.mrb[0].mxu0
  %v2183 = vadd.f32 %v1870, %v2182
  %2184 = vmatprep.mubr.bf16.mxu0 0
  %2185 = vmatmul.mubr.bf16.gmra.mrb[0].mxu0 %v2140
  %v2186 = vpop.f32.mrb[0].mxu0
  %v2187 = vadd.f32 %v1874, %v2186
  %v2188 = vpop.f32.mrb[0].mxu0
  %v2189 = vadd.f32 %v1876, %v2188
  %v2190 = vpop.f32.mrb[0].mxu0
  %v2191 = vadd.f32 %v1878, %v2190
  %v2192 = vpop.f32.mrb[0].mxu0
  %v2193 = vadd.f32 %v1880, %v2192
  %2194 = vdwg.mxu0
  %2195 = vmatprep.subr.bf16.mxu0 %v2073
  %2196 = vmatpush1.bf16.msra.mxu0 %v2072
  %2197 = vmatprep.subr.bf16.mxu0 %v2078
  %2198 = vmatpush1.bf16.msra.mxu0 %v2077
  %2199 = vmatprep.subr.bf16.mxu0 %v2083
  %2200 = vmatpush1.bf16.msra.mxu0 %v2082
  %2201 = vmatprep.subr.bf16.mxu0 %v2088
  %2202 = vmatpush1.bf16.msra.mxu0 %v2087
  %2203 = vmatprep.subr.bf16.mxu0 %v2093
  %2204 = vmatpush1.bf16.msra.mxu0 %v2092
  %2205 = vmatprep.subr.bf16.mxu0 %v2098
  %2206 = vmatpush1.bf16.msra.mxu0 %v2097
  %2207 = vmatprep.subr.bf16.mxu0 0
  %2208 = vmatpush1.bf16.msra.mxu0 0
  %2209 = vmatprep.subr.bf16.mxu0 0
  %2210 = vmatpush1.bf16.msra.mxu0 0
  %2211 = vmatprep.subr.bf16.mxu0 0
  %2212 = vmatpush1.bf16.msra.mxu0 0
  %2213 = vmatprep.subr.bf16.mxu0 0
  %2214 = vmatpush1.bf16.msra.mxu0 0
  %2215 = vmatprep.subr.bf16.mxu0 0
  %2216 = vmatpush1.bf16.msra.mxu0 0
  %2217 = vmatprep.subr.bf16.mxu0 0
  %2218 = vmatpush1.bf16.msra.mxu0 0
  %2219 = vmatprep.subr.bf16.mxu0 0
  %2220 = vmatpush1.bf16.msra.mxu0 0
  %2221 = vmatprep.subr.bf16.mxu0 0
  %2222 = vmatpush1.bf16.msra.mxu0 0
  %2223 = vmatprep.subr.bf16.mxu0 0
  %2224 = vmatpush1.bf16.msra.mxu0 0
  %2225 = vmatprep.subr.bf16.mxu0 0
  %2226 = vmatpush1.bf16.msra.mxu0 0
  %2227 = vmatprep.mubr.bf16.mxu0 0
  %2228 = vmatmul.mubr.bf16.gmra.mrb[0].mxu0 %v2137
  %v2229 = vpop.f32.mrb[0].mxu0
  %v2230 = vadd.f32 %v1917, %v2229
  %v2231 = vpop.f32.mrb[0].mxu0
  %v2232 = vadd.f32 %v1919, %v2231
  %v2233 = vpop.f32.mrb[0].mxu0
  %v2234 = vadd.f32 %v1921, %v2233
  %v2235 = vpop.f32.mrb[0].mxu0
  %v2236 = vadd.f32 %v1923, %v2235
  %2237 = vmatprep.mubr.bf16.mxu0 0
  %2238 = vmatmul.mubr.bf16.gmra.mrb[0].mxu0 %v2140
  %v2239 = vpop.f32.mrb[0].mxu0
  %v2240 = vadd.f32 %v1927, %v2239
  %v2241 = vpop.f32.mrb[0].mxu0
  %v2242 = vadd.f32 %v1929, %v2241
  %v2243 = vpop.f32.mrb[0].mxu0
  %v2244 = vadd.f32 %v1931, %v2243
  %v2245 = vpop.f32.mrb[0].mxu0
  %v2246 = vadd.f32 %v1933, %v2245
  %2247 = vdwg.mxu0
  %2248 = vmatprep.subr.bf16.mxu0 %v2009
  %2249 = vmatpush1.bf16.msra.mxu0 %v2074
  %2250 = vmatprep.subr.bf16.mxu0 %v2021
  %2251 = vmatpush1.bf16.msra.mxu0 %v2079
  %2252 = vmatprep.subr.bf16.mxu0 %v2033
  %2253 = vmatpush1.bf16.msra.mxu0 %v2084
  %2254 = vmatprep.subr.bf16.mxu0 %v2045
  %2255 = vmatpush1.bf16.msra.mxu0 %v2089
  %2256 = vmatprep.subr.bf16.mxu0 %v2057
  %2257 = vmatpush1.bf16.msra.mxu0 %v2094
  %2258 = vmatprep.subr.bf16.mxu0 %v2069
  %2259 = vmatpush1.bf16.msra.mxu0 %v2099
  %2260 = vmatprep.subr.bf16.mxu0 0
  %2261 = vmatpush1.bf16.msra.mxu0 0
  %2262 = vmatprep.subr.bf16.mxu0 0
  %2263 = vmatpush1.bf16.msra.mxu0 0
  %2264 = vmatprep.subr.bf16.mxu0 0
  %2265 = vmatpush1.bf16.msra.mxu0 0
  %2266 = vmatprep.subr.bf16.mxu0 0
  %2267 = vmatpush1.bf16.msra.mxu0 0
  %2268 = vmatprep.subr.bf16.mxu0 0
  %2269 = vmatpush1.bf16.msra.mxu0 0
  %2270 = vmatprep.subr.bf16.mxu0 0
  %2271 = vmatpush1.bf16.msra.mxu0 0
  %2272 = vmatprep.subr.bf16.mxu0 0
  %2273 = vmatpush1.bf16.msra.mxu0 0
  %2274 = vmatprep.subr.bf16.mxu0 0
  %2275 = vmatpush1.bf16.msra.mxu0 0
  %2276 = vmatprep.subr.bf16.mxu0 0
  %2277 = vmatpush1.bf16.msra.mxu0 0
  %2278 = vmatprep.subr.bf16.mxu0 0
  %2279 = vmatpush1.bf16.msra.mxu0 0
  %2280 = vmatprep.mubr.bf16.mxu0 0
  %2281 = vmatmul.mubr.bf16.gmra.mrb[0].mxu0 %v2137
  %v2282 = vpop.f32.mrb[0].mxu0
  %v2283 = vadd.f32 %v1970, %v2282
  %v2284 = vpop.f32.mrb[0].mxu0
  %v2285 = vadd.f32 %v1972, %v2284
  %v2286 = vpop.f32.mrb[0].mxu0
  %v2287 = vadd.f32 %v1974, %v2286
  %v2288 = vpop.f32.mrb[0].mxu0
  %v2289 = vadd.f32 %v1976, %v2288
  %2290 = vmatprep.mubr.bf16.mxu0 0
  %2291 = vmatmul.mubr.bf16.gmra.mrb[0].mxu0 %v2140
  %v2292 = vpop.f32.mrb[0].mxu0
  %v2293 = vadd.f32 %v1980, %v2292
  %v2294 = vpop.f32.mrb[0].mxu0
  %v2295 = vadd.f32 %v1982, %v2294
  %v2296 = vpop.f32.mrb[0].mxu0
  %v2297 = vadd.f32 %v1984, %v2296
  %v2298 = vpop.f32.mrb[0].mxu0
  %v2299 = vadd.f32 %v1986, %v2298
  %2300 = vdwg.mxu0
  %s2301 = scalar_lea.vmem %s7, 32
  %v2302 = vld [vmem:[%s2301] sm:$0xf]
  %v2303 = vld [vmem:[%s2301 + $0x4] sm:$0xf]
  %v2304 = vld [vmem:[%s2301 + $0x8] sm:$0xf]
  %v2305 = vld [vmem:[%s2301 + $0xc] sm:$0xf]
  %v2310 = vunpack.c.l.b16 %v2302
  %v2311 = vunpack.c.l.b16 %v2303
  %v2312 = vunpack.c.l.b16 %v2304
  %v2313 = vunpack.c.l.b16 %v2305
  %v2314 = vpack.c.b16 %v2311, %v2310
  %v2315 = vpack.c.b16 %v2313, %v2312
  %2316 = vrot.lane.b32.xlu0 %v1556, 111
  %v2317 = vpop.permute.xlu0 %2316
  %2318 = vrot.lane.b32.xlu0 %v1557, 111
  %v2319 = vpop.permute.xlu0 %2318
  %2320 = vrot.lane.b32.xlu0 %v1558, 111
  %v2321 = vpop.permute.xlu0 %2320
  %2322 = vrot.lane.b32.xlu0 %v1559, 111
  %v2323 = vpop.permute.xlu0 %2322
  %2324 = vrot.lane.b32.xlu0 %v1560, 111
  %v2325 = vpop.permute.xlu0 %2324
  %2326 = vrot.lane.b32.xlu0 %v1561, 111
  %v2327 = vpop.permute.xlu0 %2326
  %2328 = vrot.lane.b32.xlu0 %v1563, 111
  %v2329 = vpop.permute.xlu0 %2328
  %2330 = vrot.lane.b32.xlu0 %v1564, 111
  %v2331 = vpop.permute.xlu0 %2330
  %2332 = vrot.lane.b32.xlu0 %v1565, 111
  %v2333 = vpop.permute.xlu0 %2332
  %2334 = vrot.lane.b32.xlu0 %v1566, 111
  %v2335 = vpop.permute.xlu0 %2334
  %2336 = vrot.lane.b32.xlu0 %v1567, 111
  %v2337 = vpop.permute.xlu0 %2336
  %2338 = vrot.lane.b32.xlu0 %v1568, 111
  %v2339 = vpop.permute.xlu0 %2338
  %2340 = vrot.lane.b32.xlu0 %v1605, 111
  %v2341 = vpop.permute.xlu0 %2340
  %2342 = vrot.lane.b32.xlu0 %v1606, 111
  %v2343 = vpop.permute.xlu0 %2342
  %2344 = vrot.lane.b32.xlu0 %v1607, 111
  %v2345 = vpop.permute.xlu0 %2344
  %2346 = vrot.lane.b32.xlu0 %v1608, 111
  %v2347 = vpop.permute.xlu0 %2346
  %2348 = vrot.lane.b32.xlu0 %v1609, 111
  %v2349 = vpop.permute.xlu0 %2348
  %2350 = vrot.lane.b32.xlu0 %v1592, 111
  %v2351 = vpop.permute.xlu0 %2350
  %2352 = vrot.lane.b32.xlu0 %v1610, 111
  %v2353 = vpop.permute.xlu0 %2352
  %2354 = vrot.lane.b32.xlu0 %v1611, 111
  %v2355 = vpop.permute.xlu0 %2354
  %2356 = vrot.lane.b32.xlu0 %v1612, 111
  %v2357 = vpop.permute.xlu0 %2356
  %2358 = vrot.lane.b32.xlu0 %v1613, 111
  %v2359 = vpop.permute.xlu0 %2358
  %2360 = vrot.lane.b32.xlu0 %v1614, 111
  %v2361 = vpop.permute.xlu0 %2360
  %2362 = vrot.lane.b32.xlu0 %v1604, 111
  %v2363 = vpop.permute.xlu0 %2362
  %2364 = vrot.lane.b32.xlu0 %v1639, 111
  %v2365 = vpop.permute.xlu0 %2364
  %2366 = vrot.lane.b32.xlu0 %v1640, 111
  %v2367 = vpop.permute.xlu0 %2366
  %2368 = vrot.lane.b32.xlu0 %v1641, 111
  %v2369 = vpop.permute.xlu0 %2368
  %2370 = vrot.lane.b32.xlu0 %v1642, 111
  %v2371 = vpop.permute.xlu0 %2370
  %2372 = vrot.lane.b32.xlu0 %v1643, 111
  %v2373 = vpop.permute.xlu0 %2372
  %2374 = vrot.lane.b32.xlu0 %v1626, 111
  %v2375 = vpop.permute.xlu0 %2374
  %2376 = vrot.lane.b32.xlu0 %v1644, 111
  %v2377 = vpop.permute.xlu0 %2376
  %2378 = vrot.lane.b32.xlu0 %v1645, 111
  %v2379 = vpop.permute.xlu0 %2378
  %2380 = vrot.lane.b32.xlu0 %v1646, 111
  %v2381 = vpop.permute.xlu0 %2380
  %2382 = vrot.lane.b32.xlu0 %v1647, 111
  %v2383 = vpop.permute.xlu0 %2382
  %2384 = vrot.lane.b32.xlu0 %v1648, 111
  %v2385 = vpop.permute.xlu0 %2384
  %2386 = vrot.lane.b32.xlu0 %v1638, 111
  %v2387 = vpop.permute.xlu0 %2386
  %v2388 = vsel %vm792, %v2317, %v2319
  %v2389 = vsel %vm792, %v2319, %v2321
  %v2390 = vsel %vm792, %v2321, %v2323
  %v2391 = vsel %vm792, %v2323, %v2325
  %v2392 = vsel %vm792, %v2325, %v2327
  %v2393 = vsel %vm792, %v2329, %v2331
  %v2394 = vsel %vm792, %v2331, %v2333
  %v2395 = vsel %vm792, %v2333, %v2335
  %v2396 = vsel %vm792, %v2335, %v2337
  %v2397 = vsel %vm792, %v2337, %v2339
  %v2398 = vsel %vm792, %v2341, %v2343
  %v2399 = vsel %vm792, %v2343, %v2345
  %v2400 = vsel %vm792, %v2345, %v2347
  %v2401 = vsel %vm792, %v2347, %v2349
  %v2402 = vsel %vm792, %v2349, %v2351
  %v2403 = vsel %vm792, %v2353, %v2355
  %v2404 = vsel %vm792, %v2355, %v2357
  %v2405 = vsel %vm792, %v2357, %v2359
  %v2406 = vsel %vm792, %v2359, %v2361
  %v2407 = vsel %vm792, %v2361, %v2363
  %v2408 = vsel %vm792, %v2365, %v2367
  %v2409 = vsel %vm792, %v2367, %v2369
  %v2410 = vsel %vm792, %v2369, %v2371
  %v2411 = vsel %vm792, %v2371, %v2373
  %v2412 = vsel %vm792, %v2373, %v2375
  %v2413 = vsel %vm792, %v2377, %v2379
  %v2414 = vsel %vm792, %v2379, %v2381
  %v2415 = vsel %vm792, %v2381, %v2383
  %v2416 = vsel %vm792, %v2383, %v2385
  %v2417 = vsel %vm792, %v2385, %v2387
  %v2455 = vsel %vm1822, %v2314, 0
  %v2458 = vsel %vm1822, %v2315, 0
  %2460 = vmatprep.subr.bf16.mxu0 %v2389
  %2461 = vmatpush1.bf16.msra.mxu0 %v2388
  %2462 = vmatprep.subr.bf16.mxu0 %v2394
  %2463 = vmatpush1.bf16.msra.mxu0 %v2393
  %2464 = vmatprep.subr.bf16.mxu0 %v2399
  %2465 = vmatpush1.bf16.msra.mxu0 %v2398
  %2466 = vmatprep.subr.bf16.mxu0 %v2404
  %2467 = vmatpush1.bf16.msra.mxu0 %v2403
  %2468 = vmatprep.subr.bf16.mxu0 %v2409
  %2469 = vmatpush1.bf16.msra.mxu0 %v2408
  %2470 = vmatprep.subr.bf16.mxu0 %v2414
  %2471 = vmatpush1.bf16.msra.mxu0 %v2413
  %2472 = vmatprep.subr.bf16.mxu0 0
  %2473 = vmatpush1.bf16.msra.mxu0 0
  %2474 = vmatprep.subr.bf16.mxu0 0
  %2475 = vmatpush1.bf16.msra.mxu0 0
  %2476 = vmatprep.subr.bf16.mxu0 0
  %2477 = vmatpush1.bf16.msra.mxu0 0
  %2478 = vmatprep.subr.bf16.mxu0 0
  %2479 = vmatpush1.bf16.msra.mxu0 0
  %2480 = vmatprep.subr.bf16.mxu0 0
  %2481 = vmatpush1.bf16.msra.mxu0 0
  %2482 = vmatprep.subr.bf16.mxu0 0
  %2483 = vmatpush1.bf16.msra.mxu0 0
  %2484 = vmatprep.subr.bf16.mxu0 0
  %2485 = vmatpush1.bf16.msra.mxu0 0
  %2486 = vmatprep.subr.bf16.mxu0 0
  %2487 = vmatpush1.bf16.msra.mxu0 0
  %2488 = vmatprep.subr.bf16.mxu0 0
  %2489 = vmatpush1.bf16.msra.mxu0 0
  %2490 = vmatprep.subr.bf16.mxu0 0
  %2491 = vmatpush1.bf16.msra.mxu0 0
  %2492 = vmatprep.mubr.bf16.mxu0 0
  %2493 = vmatmul.mubr.bf16.gmra.mrb[0].mxu0 %v2455
  %v2494 = vpop.f32.mrb[0].mxu0
  %v2495 = vadd.f32 0.0, %v2494
  %v2496 = vpop.f32.mrb[0].mxu0
  %v2497 = vadd.f32 0.0, %v2496
  %v2498 = vpop.f32.mrb[0].mxu0
  %v2499 = vadd.f32 0.0, %v2498
  %v2500 = vpop.f32.mrb[0].mxu0
  %v2501 = vadd.f32 0.0, %v2500
  %2502 = vmatprep.mubr.bf16.mxu0 0
  %2503 = vmatmul.mubr.bf16.gmra.mrb[0].mxu0 %v2458
  %v2504 = vpop.f32.mrb[0].mxu0
  %v2505 = vadd.f32 0.0, %v2504
  %v2506 = vpop.f32.mrb[0].mxu0
  %v2507 = vadd.f32 0.0, %v2506
  %v2508 = vpop.f32.mrb[0].mxu0
  %v2509 = vadd.f32 0.0, %v2508
  %v2510 = vpop.f32.mrb[0].mxu0
  %v2511 = vadd.f32 0.0, %v2510
  %2512 = vdwg.mxu0
  %2513 = vmatprep.subr.bf16.mxu0 %v2391
  %2514 = vmatpush1.bf16.msra.mxu0 %v2390
  %2515 = vmatprep.subr.bf16.mxu0 %v2396
  %2516 = vmatpush1.bf16.msra.mxu0 %v2395
  %2517 = vmatprep.subr.bf16.mxu0 %v2401
  %2518 = vmatpush1.bf16.msra.mxu0 %v2400
  %2519 = vmatprep.subr.bf16.mxu0 %v2406
  %2520 = vmatpush1.bf16.msra.mxu0 %v2405
  %2521 = vmatprep.subr.bf16.mxu0 %v2411
  %2522 = vmatpush1.bf16.msra.mxu0 %v2410
  %2523 = vmatprep.subr.bf16.mxu0 %v2416
  %2524 = vmatpush1.bf16.msra.mxu0 %v2415
  %2525 = vmatprep.subr.bf16.mxu0 0
  %2526 = vmatpush1.bf16.msra.mxu0 0
  %2527 = vmatprep.subr.bf16.mxu0 0
  %2528 = vmatpush1.bf16.msra.mxu0 0
  %2529 = vmatprep.subr.bf16.mxu0 0
  %2530 = vmatpush1.bf16.msra.mxu0 0
  %2531 = vmatprep.subr.bf16.mxu0 0
  %2532 = vmatpush1.bf16.msra.mxu0 0
  %2533 = vmatprep.subr.bf16.mxu0 0
  %2534 = vmatpush1.bf16.msra.mxu0 0
  %2535 = vmatprep.subr.bf16.mxu0 0
  %2536 = vmatpush1.bf16.msra.mxu0 0
  %2537 = vmatprep.subr.bf16.mxu0 0
  %2538 = vmatpush1.bf16.msra.mxu0 0
  %2539 = vmatprep.subr.bf16.mxu0 0
  %2540 = vmatpush1.bf16.msra.mxu0 0
  %2541 = vmatprep.subr.bf16.mxu0 0
  %2542 = vmatpush1.bf16.msra.mxu0 0
  %2543 = vmatprep.subr.bf16.mxu0 0
  %2544 = vmatpush1.bf16.msra.mxu0 0
  %2545 = vmatprep.mubr.bf16.mxu0 0
  %2546 = vmatmul.mubr.bf16.gmra.mrb[0].mxu0 %v2455
  %v2547 = vpop.f32.mrb[0].mxu0
  %v2548 = vadd.f32 0.0, %v2547
  %v2549 = vpop.f32.mrb[0].mxu0
  %v2550 = vadd.f32 0.0, %v2549
  %v2551 = vpop.f32.mrb[0].mxu0
  %v2552 = vadd.f32 0.0, %v2551
  %v2553 = vpop.f32.mrb[0].mxu0
  %v2554 = vadd.f32 0.0, %v2553
  %2555 = vmatprep.mubr.bf16.mxu0 0
  %2556 = vmatmul.mubr.bf16.gmra.mrb[0].mxu0 %v2458
  %v2557 = vpop.f32.mrb[0].mxu0
  %v2558 = vadd.f32 0.0, %v2557
  %v2559 = vpop.f32.mrb[0].mxu0
  %v2560 = vadd.f32 0.0, %v2559
  %v2561 = vpop.f32.mrb[0].mxu0
  %v2562 = vadd.f32 0.0, %v2561
  %v2563 = vpop.f32.mrb[0].mxu0
  %v2564 = vadd.f32 0.0, %v2563
  %2565 = vdwg.mxu0
  %2566 = vmatprep.subr.bf16.mxu0 %v2327
  %2567 = vmatpush1.bf16.msra.mxu0 %v2392
  %2568 = vmatprep.subr.bf16.mxu0 %v2339
  %2569 = vmatpush1.bf16.msra.mxu0 %v2397
  %2570 = vmatprep.subr.bf16.mxu0 %v2351
  %2571 = vmatpush1.bf16.msra.mxu0 %v2402
  %2572 = vmatprep.subr.bf16.mxu0 %v2363
  %2573 = vmatpush1.bf16.msra.mxu0 %v2407
  %2574 = vmatprep.subr.bf16.mxu0 %v2375
  %2575 = vmatpush1.bf16.msra.mxu0 %v2412
  %2576 = vmatprep.subr.bf16.mxu0 %v2387
  %2577 = vmatpush1.bf16.msra.mxu0 %v2417
  %2578 = vmatprep.subr.bf16.mxu0 0
  %2579 = vmatpush1.bf16.msra.mxu0 0
  %2580 = vmatprep.subr.bf16.mxu0 0
  %2581 = vmatpush1.bf16.msra.mxu0 0
  %2582 = vmatprep.subr.bf16.mxu0 0
  %2583 = vmatpush1.bf16.msra.mxu0 0
  %2584 = vmatprep.subr.bf16.mxu0 0
  %2585 = vmatpush1.bf16.msra.mxu0 0
  %2586 = vmatprep.subr.bf16.mxu0 0
  %2587 = vmatpush1.bf16.msra.mxu0 0
  %2588 = vmatprep.subr.bf16.mxu0 0
  %2589 = vmatpush1.bf16.msra.mxu0 0
  %2590 = vmatprep.subr.bf16.mxu0 0
  %2591 = vmatpush1.bf16.msra.mxu0 0
  %2592 = vmatprep.subr.bf16.mxu0 0
  %2593 = vmatpush1.bf16.msra.mxu0 0
  %2594 = vmatprep.subr.bf16.mxu0 0
  %2595 = vmatpush1.bf16.msra.mxu0 0
  %2596 = vmatprep.subr.bf16.mxu0 0
  %2597 = vmatpush1.bf16.msra.mxu0 0
  %2598 = vmatprep.mubr.bf16.mxu0 0
  %2599 = vmatmul.mubr.bf16.gmra.mrb[0].mxu0 %v2455
  %v2600 = vpop.f32.mrb[0].mxu0
  %v2601 = vadd.f32 0.0, %v2600
  %v2602 = vpop.f32.mrb[0].mxu0
  %v2603 = vadd.f32 0.0, %v2602
  %v2604 = vpop.f32.mrb[0].mxu0
  %v2605 = vadd.f32 0.0, %v2604
  %v2606 = vpop.f32.mrb[0].mxu0
  %v2607 = vadd.f32 0.0, %v2606
  %2608 = vmatprep.mubr.bf16.mxu0 0
  %2609 = vmatmul.mubr.bf16.gmra.mrb[0].mxu0 %v2458
  %v2610 = vpop.f32.mrb[0].mxu0
  %v2611 = vadd.f32 0.0, %v2610
  %v2612 = vpop.f32.mrb[0].mxu0
  %v2613 = vadd.f32 0.0, %v2612
  %v2614 = vpop.f32.mrb[0].mxu0
  %v2615 = vadd.f32 0.0, %v2614
  %v2616 = vpop.f32.mrb[0].mxu0
  %v2617 = vadd.f32 0.0, %v2616
  %2618 = vdwg.mxu0
  %v2619 = vadd.f32 %v2177, %v2495
  %v2620 = vadd.f32 %v2179, %v2497
  %v2621 = vadd.f32 %v2230, %v2548
  %v2622 = vadd.f32 %v2232, %v2550
  %v2623 = vadd.f32 %v2283, %v2601
  %v2624 = vadd.f32 %v2285, %v2603
  %v2625 = vadd.f32 %v2181, %v2499
  %v2626 = vadd.f32 %v2183, %v2501
  %v2627 = vadd.f32 %v2234, %v2552
  %v2628 = vadd.f32 %v2236, %v2554
  %v2629 = vadd.f32 %v2287, %v2605
  %v2630 = vadd.f32 %v2289, %v2607
  %v2631 = vadd.f32 %v2187, %v2505
  %v2632 = vadd.f32 %v2189, %v2507
  %v2633 = vadd.f32 %v2240, %v2558
  %v2634 = vadd.f32 %v2242, %v2560
  %v2635 = vadd.f32 %v2293, %v2611
  %v2636 = vadd.f32 %v2295, %v2613
  %v2637 = vadd.f32 %v2191, %v2509
  %v2638 = vadd.f32 %v2193, %v2511
  %v2639 = vadd.f32 %v2244, %v2562
  %v2640 = vadd.f32 %v2246, %v2564
  %v2641 = vadd.f32 %v2297, %v2615
  %v2642 = vadd.f32 %v2299, %v2617
  %v2643 = vld [vmem:[%s8] sm:$0xff]
  %v2644 = vld [vmem:[%s8 + $0x8] sm:$0xff]
  %v2645 = vld [vmem:[%s8 + $0x10] sm:$0xff]
  %v2646 = vld [vmem:[%s8 + $0x18] sm:$0xff]
  %2648 = vset.pattern.permute.xlu0 0
  %2649 = vperm.xlu0 %2648, %v2643
  %v2650 = vpop.permute.xlu0 %2649
  %2653 = vset.pattern.permute.xlu0 0
  %2654 = vperm.xlu0 %2653, %v2644
  %v2655 = vpop.permute.xlu0 %2654
  %2658 = vset.pattern.permute.xlu0 0
  %2659 = vperm.xlu0 %2658, %v2645
  %v2660 = vpop.permute.xlu0 %2659
  %2663 = vset.pattern.permute.xlu0 0
  %2664 = vperm.xlu0 %2663, %v2646
  %v2665 = vpop.permute.xlu0 %2664
  %v2667 = vadd.f32 %v2619, %v2650
  %v2668 = vadd.f32 %v2620, %v2650
  %v2669 = vadd.f32 %v2621, %v2650
  %v2670 = vadd.f32 %v2622, %v2650
  %v2671 = vadd.f32 %v2623, %v2650
  %v2672 = vadd.f32 %v2624, %v2650
  %v2673 = vadd.f32 %v2625, %v2655
  %v2674 = vadd.f32 %v2626, %v2655
  %v2675 = vadd.f32 %v2627, %v2655
  %v2676 = vadd.f32 %v2628, %v2655
  %v2677 = vadd.f32 %v2629, %v2655
  %v2678 = vadd.f32 %v2630, %v2655
  %v2679 = vadd.f32 %v2631, %v2660
  %v2680 = vadd.f32 %v2632, %v2660
  %v2681 = vadd.f32 %v2633, %v2660
  %v2682 = vadd.f32 %v2634, %v2660
  %v2683 = vadd.f32 %v2635, %v2660
  %v2684 = vadd.f32 %v2636, %v2660
  %v2685 = vadd.f32 %v2637, %v2665
  %v2686 = vadd.f32 %v2638, %v2665
  %v2687 = vadd.f32 %v2639, %v2665
  %v2688 = vadd.f32 %v2640, %v2665
  %v2689 = vadd.f32 %v2641, %v2665
  %v2690 = vadd.f32 %v2642, %v2665
  %vm2691 = vcmp.ge.f32.partialorder %v2667, 0.0
  %vm2692 = vcmp.ge.f32.partialorder %v2668, 0.0
  %vm2693 = vcmp.ge.f32.partialorder %v2669, 0.0
  %vm2694 = vcmp.ge.f32.partialorder %v2670, 0.0
  %vm2695 = vcmp.ge.f32.partialorder %v2671, 0.0
  %vm2696 = vcmp.ge.f32.partialorder %v2672, 0.0
  %vm2697 = vcmp.ge.f32.partialorder %v2673, 0.0
  %vm2698 = vcmp.ge.f32.partialorder %v2674, 0.0
  %vm2699 = vcmp.ge.f32.partialorder %v2675, 0.0
  %vm2700 = vcmp.ge.f32.partialorder %v2676, 0.0
  %vm2701 = vcmp.ge.f32.partialorder %v2677, 0.0
  %vm2702 = vcmp.ge.f32.partialorder %v2678, 0.0
  %vm2703 = vcmp.ge.f32.partialorder %v2679, 0.0
  %vm2704 = vcmp.ge.f32.partialorder %v2680, 0.0
  %vm2705 = vcmp.ge.f32.partialorder %v2681, 0.0
  %vm2706 = vcmp.ge.f32.partialorder %v2682, 0.0
  %vm2707 = vcmp.ge.f32.partialorder %v2683, 0.0
  %vm2708 = vcmp.ge.f32.partialorder %v2684, 0.0
  %vm2709 = vcmp.ge.f32.partialorder %v2685, 0.0
  %vm2710 = vcmp.ge.f32.partialorder %v2686, 0.0
  %vm2711 = vcmp.ge.f32.partialorder %v2687, 0.0
  %vm2712 = vcmp.ge.f32.partialorder %v2688, 0.0
  %vm2713 = vcmp.ge.f32.partialorder %v2689, 0.0
  %vm2714 = vcmp.ge.f32.partialorder %v2690, 0.0
  %v2715 = vmul.f32 %v2667, 0.01
  %v2716 = vmul.f32 %v2668, 0.01
  %v2717 = vmul.f32 %v2669, 0.01
  %v2718 = vmul.f32 %v2670, 0.01
  %v2719 = vmul.f32 %v2671, 0.01
  %v2720 = vmul.f32 %v2672, 0.01
  %v2721 = vmul.f32 %v2673, 0.01
  %v2722 = vmul.f32 %v2674, 0.01
  %v2723 = vmul.f32 %v2675, 0.01
  %v2724 = vmul.f32 %v2676, 0.01
  %v2725 = vmul.f32 %v2677, 0.01
  %v2726 = vmul.f32 %v2678, 0.01
  %v2727 = vmul.f32 %v2679, 0.01
  %v2728 = vmul.f32 %v2680, 0.01
  %v2729 = vmul.f32 %v2681, 0.01
  %v2730 = vmul.f32 %v2682, 0.01
  %v2731 = vmul.f32 %v2683, 0.01
  %v2732 = vmul.f32 %v2684, 0.01
  %v2733 = vmul.f32 %v2685, 0.01
  %v2734 = vmul.f32 %v2686, 0.01
  %v2735 = vmul.f32 %v2687, 0.01
  %v2736 = vmul.f32 %v2688, 0.01
  %v2737 = vmul.f32 %v2689, 0.01
  %v2738 = vmul.f32 %v2690, 0.01
  %v2739 = vsel %vm2691, %v2667, %v2715
  %v2740 = vsel %vm2692, %v2668, %v2716
  %v2741 = vsel %vm2693, %v2669, %v2717
  %v2742 = vsel %vm2694, %v2670, %v2718
  %v2743 = vsel %vm2695, %v2671, %v2719
  %v2744 = vsel %vm2696, %v2672, %v2720
  %v2745 = vsel %vm2697, %v2673, %v2721
  %v2746 = vsel %vm2698, %v2674, %v2722
  %v2747 = vsel %vm2699, %v2675, %v2723
  %v2748 = vsel %vm2700, %v2676, %v2724
  %v2749 = vsel %vm2701, %v2677, %v2725
  %v2750 = vsel %vm2702, %v2678, %v2726
  %v2751 = vsel %vm2703, %v2679, %v2727
  %v2752 = vsel %vm2704, %v2680, %v2728
  %v2753 = vsel %vm2705, %v2681, %v2729
  %v2754 = vsel %vm2706, %v2682, %v2730
  %v2755 = vsel %vm2707, %v2683, %v2731
  %v2756 = vsel %vm2708, %v2684, %v2732
  %v2757 = vsel %vm2709, %v2685, %v2733
  %v2758 = vsel %vm2710, %v2686, %v2734
  %v2759 = vsel %vm2711, %v2687, %v2735
  %v2760 = vsel %vm2712, %v2688, %v2736
  %v2761 = vsel %vm2713, %v2689, %v2737
  %v2762 = vsel %vm2714, %v2690, %v2738
  %v2763 = vmul.f32 %v2739, %v1139
  %v2764 = vmul.f32 %v2740, %v1143
  %v2765 = vmul.f32 %v2741, %v1147
  %v2766 = vmul.f32 %v2742, %v1151
  %v2767 = vmul.f32 %v2743, %v1155
  %v2768 = vmul.f32 %v2744, %v1159
  %v2769 = vmul.f32 %v2745, %v1139
  %v2770 = vmul.f32 %v2746, %v1143
  %v2771 = vmul.f32 %v2747, %v1147
  %v2772 = vmul.f32 %v2748, %v1151
  %v2773 = vmul.f32 %v2749, %v1155
  %v2774 = vmul.f32 %v2750, %v1159
  %v2775 = vmul.f32 %v2751, %v1139
  %v2776 = vmul.f32 %v2752, %v1143
  %v2777 = vmul.f32 %v2753, %v1147
  %v2778 = vmul.f32 %v2754, %v1151
  %v2779 = vmul.f32 %v2755, %v1155
  %v2780 = vmul.f32 %v2756, %v1159
  %v2781 = vmul.f32 %v2757, %v1139
  %v2782 = vmul.f32 %v2758, %v1143
  %v2783 = vmul.f32 %v2759, %v1147
  %v2784 = vmul.f32 %v2760, %v1151
  %v2785 = vmul.f32 %v2761, %v1155
  %v2786 = vmul.f32 %v2762, %v1159
  %v2787 = vadd.f32 %v2763, %v2764
  %v2788 = vadd.f32 %v2787, %v2765
  %v2789 = vadd.f32 %v2788, %v2766
  %v2790 = vadd.f32 %v2789, %v2767
  %v2791 = vsel %vm1194, %v2768, 0.0
  %v2792 = vadd.f32 %v2790, %v2791
  %2793 = vadd.xlane.f32.xlu0 %v2792
  %v2794 = vpop.xlane.xlu0 %2793
  %v2795 = vadd.f32 %v2769, %v2770
  %v2796 = vadd.f32 %v2795, %v2771
  %v2797 = vadd.f32 %v2796, %v2772
  %v2798 = vadd.f32 %v2797, %v2773
  %v2799 = vsel %vm1194, %v2774, 0.0
  %v2800 = vadd.f32 %v2798, %v2799
  %2801 = vadd.xlane.f32.xlu0 %v2800
  %v2802 = vpop.xlane.xlu0 %2801
  %v2803 = vadd.f32 %v2775, %v2776
  %v2804 = vadd.f32 %v2803, %v2777
  %v2805 = vadd.f32 %v2804, %v2778
  %v2806 = vadd.f32 %v2805, %v2779
  %v2807 = vsel %vm1194, %v2780, 0.0
  %v2808 = vadd.f32 %v2806, %v2807
  %2809 = vadd.xlane.f32.xlu0 %v2808
  %v2810 = vpop.xlane.xlu0 %2809
  %v2811 = vadd.f32 %v2781, %v2782
  %v2812 = vadd.f32 %v2811, %v2783
  %v2813 = vadd.f32 %v2812, %v2784
  %v2814 = vadd.f32 %v2813, %v2785
  %v2815 = vsel %vm1194, %v2786, 0.0
  %v2816 = vadd.f32 %v2814, %v2815
  %2817 = vadd.xlane.f32.xlu0 %v2816
  %v2818 = vpop.xlane.xlu0 %2817
  %v2819 = vmul.f32 %v2794, 0.001953125
  %v2820 = vmul.f32 %v2802, 0.001953125
  %v2821 = vmul.f32 %v2810, 0.001953125
  %v2822 = vmul.f32 %v2818, 0.001953125
  %v2823 = vmul.f32 %v2763, %v2763
  %v2824 = vmul.f32 %v2764, %v2764
  %v2825 = vmul.f32 %v2765, %v2765
  %v2826 = vmul.f32 %v2766, %v2766
  %v2827 = vmul.f32 %v2767, %v2767
  %v2828 = vmul.f32 %v2768, %v2768
  %v2829 = vmul.f32 %v2769, %v2769
  %v2830 = vmul.f32 %v2770, %v2770
  %v2831 = vmul.f32 %v2771, %v2771
  %v2832 = vmul.f32 %v2772, %v2772
  %v2833 = vmul.f32 %v2773, %v2773
  %v2834 = vmul.f32 %v2774, %v2774
  %v2835 = vmul.f32 %v2775, %v2775
  %v2836 = vmul.f32 %v2776, %v2776
  %v2837 = vmul.f32 %v2777, %v2777
  %v2838 = vmul.f32 %v2778, %v2778
  %v2839 = vmul.f32 %v2779, %v2779
  %v2840 = vmul.f32 %v2780, %v2780
  %v2841 = vmul.f32 %v2781, %v2781
  %v2842 = vmul.f32 %v2782, %v2782
  %v2843 = vmul.f32 %v2783, %v2783
  %v2844 = vmul.f32 %v2784, %v2784
  %v2845 = vmul.f32 %v2785, %v2785
  %v2846 = vmul.f32 %v2786, %v2786
  %v2847 = vadd.f32 %v2823, %v2824
  %v2848 = vadd.f32 %v2847, %v2825
  %v2849 = vadd.f32 %v2848, %v2826
  %v2850 = vadd.f32 %v2849, %v2827
  %v2851 = vsel %vm1194, %v2828, 0.0
  %v2852 = vadd.f32 %v2850, %v2851
  %2853 = vadd.xlane.f32.xlu0 %v2852
  %v2854 = vpop.xlane.xlu0 %2853
  %v2855 = vadd.f32 %v2829, %v2830
  %v2856 = vadd.f32 %v2855, %v2831
  %v2857 = vadd.f32 %v2856, %v2832
  %v2858 = vadd.f32 %v2857, %v2833
  %v2859 = vsel %vm1194, %v2834, 0.0
  %v2860 = vadd.f32 %v2858, %v2859
  %2861 = vadd.xlane.f32.xlu0 %v2860
  %v2862 = vpop.xlane.xlu0 %2861
  %v2863 = vadd.f32 %v2835, %v2836
  %v2864 = vadd.f32 %v2863, %v2837
  %v2865 = vadd.f32 %v2864, %v2838
  %v2866 = vadd.f32 %v2865, %v2839
  %v2867 = vsel %vm1194, %v2840, 0.0
  %v2868 = vadd.f32 %v2866, %v2867
  %2869 = vadd.xlane.f32.xlu0 %v2868
  %v2870 = vpop.xlane.xlu0 %2869
  %v2871 = vadd.f32 %v2841, %v2842
  %v2872 = vadd.f32 %v2871, %v2843
  %v2873 = vadd.f32 %v2872, %v2844
  %v2874 = vadd.f32 %v2873, %v2845
  %v2875 = vsel %vm1194, %v2846, 0.0
  %v2876 = vadd.f32 %v2874, %v2875
  %2877 = vadd.xlane.f32.xlu0 %v2876
  %v2878 = vpop.xlane.xlu0 %2877
  %v2879 = vmul.f32 %v2854, 0.001953125
  %v2880 = vmul.f32 %v2862, 0.001953125
  %v2881 = vmul.f32 %v2870, 0.001953125
  %v2882 = vmul.f32 %v2878, 0.001953125
  %v2883 = vmul.f32 %v2819, %v2819
  %v2884 = vmul.f32 %v2820, %v2820
  %v2885 = vmul.f32 %v2821, %v2821
  %v2886 = vmul.f32 %v2822, %v2822
  %v2887 = vsub.f32 %v2879, %v2883
  %v2888 = vsub.f32 %v2880, %v2884
  %v2889 = vsub.f32 %v2881, %v2885
  %v2890 = vsub.f32 %v2882, %v2886
  %v2891 = vld [vmem:[%s9] sm:$0xff]
  %v2892 = vld [vmem:[%s9 + $0x8] sm:$0xff]
  %v2893 = vld [vmem:[%s9 + $0x10] sm:$0xff]
  %v2894 = vld [vmem:[%s9 + $0x18] sm:$0xff]
  %v2895 = vadd.f32 %v2887, 1e-05
  %v2896 = vadd.f32 %v2888, 1e-05
  %v2897 = vadd.f32 %v2889, 1e-05
  %v2898 = vadd.f32 %v2890, 1e-05
  %v2899 = vrsqrt.pop %v2895
  %v2900 = vrsqrt.pop %v2896
  %v2901 = vrsqrt.pop %v2897
  %v2902 = vrsqrt.pop %v2898
  %v2903 = vmul.f32 %v2891, %v2899
  %v2904 = vmul.f32 %v2892, %v2900
  %v2905 = vmul.f32 %v2893, %v2901
  %v2906 = vmul.f32 %v2894, %v2902
  %v2907 = vld [vmem:[%s10] sm:$0xff]
  %v2908 = vld [vmem:[%s10 + $0x8] sm:$0xff]
  %v2909 = vld [vmem:[%s10 + $0x10] sm:$0xff]
  %v2910 = vld [vmem:[%s10 + $0x18] sm:$0xff]
  %v2911 = vmul.f32 %v2819, %v2903
  %v2912 = vmul.f32 %v2820, %v2904
  %v2913 = vmul.f32 %v2821, %v2905
  %v2914 = vmul.f32 %v2822, %v2906
  %v2915 = vsub.f32 %v2907, %v2911
  %v2916 = vsub.f32 %v2908, %v2912
  %v2917 = vsub.f32 %v2909, %v2913
  %v2918 = vsub.f32 %v2910, %v2914
  %2920 = vset.pattern.permute.xlu0 0
  %2921 = vperm.xlu0 %2920, %v2903
  %v2922 = vpop.permute.xlu0 %2921
  %2925 = vset.pattern.permute.xlu0 0
  %2926 = vperm.xlu0 %2925, %v2904
  %v2927 = vpop.permute.xlu0 %2926
  %2930 = vset.pattern.permute.xlu0 0
  %2931 = vperm.xlu0 %2930, %v2905
  %v2932 = vpop.permute.xlu0 %2931
  %2935 = vset.pattern.permute.xlu0 0
  %2936 = vperm.xlu0 %2935, %v2906
  %v2937 = vpop.permute.xlu0 %2936
  %v2939 = vmul.f32 %v2763, %v2922
  %v2940 = vmul.f32 %v2764, %v2922
  %v2941 = vmul.f32 %v2765, %v2922
  %v2942 = vmul.f32 %v2766, %v2922
  %v2943 = vmul.f32 %v2767, %v2922
  %v2944 = vmul.f32 %v2768, %v2922
  %v2945 = vmul.f32 %v2769, %v2927
  %v2946 = vmul.f32 %v2770, %v2927
  %v2947 = vmul.f32 %v2771, %v2927
  %v2948 = vmul.f32 %v2772, %v2927
  %v2949 = vmul.f32 %v2773, %v2927
  %v2950 = vmul.f32 %v2774, %v2927
  %v2951 = vmul.f32 %v2775, %v2932
  %v2952 = vmul.f32 %v2776, %v2932
  %v2953 = vmul.f32 %v2777, %v2932
  %v2954 = vmul.f32 %v2778, %v2932
  %v2955 = vmul.f32 %v2779, %v2932
  %v2956 = vmul.f32 %v2780, %v2932
  %v2957 = vmul.f32 %v2781, %v2937
  %v2958 = vmul.f32 %v2782, %v2937
  %v2959 = vmul.f32 %v2783, %v2937
  %v2960 = vmul.f32 %v2784, %v2937
  %v2961 = vmul.f32 %v2785, %v2937
  %v2962 = vmul.f32 %v2786, %v2937
  %2964 = vset.pattern.permute.xlu0 0
  %2965 = vperm.xlu0 %2964, %v2915
  %v2966 = vpop.permute.xlu0 %2965
  %2969 = vset.pattern.permute.xlu0 0
  %2970 = vperm.xlu0 %2969, %v2916
  %v2971 = vpop.permute.xlu0 %2970
  %2974 = vset.pattern.permute.xlu0 0
  %2975 = vperm.xlu0 %2974, %v2917
  %v2976 = vpop.permute.xlu0 %2975
  %2979 = vset.pattern.permute.xlu0 0
  %2980 = vperm.xlu0 %2979, %v2918
  %v2981 = vpop.permute.xlu0 %2980
  %v2983 = vmul.f32 %v2966, %v1139
  %v2984 = vmul.f32 %v2966, %v1143
  %v2985 = vmul.f32 %v2966, %v1147
  %v2986 = vmul.f32 %v2966, %v1151
  %v2987 = vmul.f32 %v2966, %v1155
  %v2988 = vmul.f32 %v2966, %v1159
  %v2989 = vmul.f32 %v2971, %v1139
  %v2990 = vmul.f32 %v2971, %v1143
  %v2991 = vmul.f32 %v2971, %v1147
  %v2992 = vmul.f32 %v2971, %v1151
  %v2993 = vmul.f32 %v2971, %v1155
  %v2994 = vmul.f32 %v2971, %v1159
  %v2995 = vmul.f32 %v2976, %v1139
  %v2996 = vmul.f32 %v2976, %v1143
  %v2997 = vmul.f32 %v2976, %v1147
  %v2998 = vmul.f32 %v2976, %v1151
  %v2999 = vmul.f32 %v2976, %v1155
  %v3000 = vmul.f32 %v2976, %v1159
  %v3001 = vmul.f32 %v2981, %v1139
  %v3002 = vmul.f32 %v2981, %v1143
  %v3003 = vmul.f32 %v2981, %v1147
  %v3004 = vmul.f32 %v2981, %v1151
  %v3005 = vmul.f32 %v2981, %v1155
  %v3006 = vmul.f32 %v2981, %v1159
  %v3007 = vadd.f32 %v2939, %v2983
  %v3008 = vadd.f32 %v2940, %v2984
  %v3009 = vadd.f32 %v2941, %v2985
  %v3010 = vadd.f32 %v2942, %v2986
  %v3011 = vadd.f32 %v2943, %v2987
  %v3012 = vadd.f32 %v2944, %v2988
  %v3013 = vadd.f32 %v2945, %v2989
  %v3014 = vadd.f32 %v2946, %v2990
  %v3015 = vadd.f32 %v2947, %v2991
  %v3016 = vadd.f32 %v2948, %v2992
  %v3017 = vadd.f32 %v2949, %v2993
  %v3018 = vadd.f32 %v2950, %v2994
  %v3019 = vadd.f32 %v2951, %v2995
  %v3020 = vadd.f32 %v2952, %v2996
  %v3021 = vadd.f32 %v2953, %v2997
  %v3022 = vadd.f32 %v2954, %v2998
  %v3023 = vadd.f32 %v2955, %v2999
  %v3024 = vadd.f32 %v2956, %v3000
  %v3025 = vadd.f32 %v2957, %v3001
  %v3026 = vadd.f32 %v2958, %v3002
  %v3027 = vadd.f32 %v2959, %v3003
  %v3028 = vadd.f32 %v2960, %v3004
  %v3029 = vadd.f32 %v2961, %v3005
  %v3030 = vadd.f32 %v2962, %v3006
  %v3031 = vpack.c.bf16 %v3013, %v3007
  %v3032 = vpack.c.bf16 %v3014, %v3008
  %v3033 = vpack.c.bf16 %v3015, %v3009
  %v3034 = vpack.c.bf16 %v3016, %v3010
  %v3035 = vpack.c.bf16 %v3017, %v3011
  %v3036 = vpack.c.bf16 %v3018, %v3012
  %v3037 = vpack.c.bf16 %v3025, %v3019
  %v3038 = vpack.c.bf16 %v3026, %v3020
  %v3039 = vpack.c.bf16 %v3027, %v3021
  %v3040 = vpack.c.bf16 %v3028, %v3022
  %v3041 = vpack.c.bf16 %v3029, %v3023
  %v3042 = vpack.c.bf16 %v3030, %v3024
  %3043 = vst [vmem:[#allocation2 + $0x8] sm:$0xff] %v3031
  %3044 = vst [vmem:[#allocation2 + $0x10] sm:$0xff] %v3032
  %3045 = vst [vmem:[#allocation2 + $0x18] sm:$0xff] %v3033
  %3046 = vst [vmem:[#allocation2 + $0x20] sm:$0xff] %v3034
  %3047 = vst [vmem:[#allocation2 + $0x28] sm:$0xff] %v3035
  %3048 = vst.msk [vmem:[#allocation2 + $0x30] sm:$0xff] %vm1194, %v3036
  %3049 = vst [vmem:[#allocation2 + $0x40] sm:$0xff] %v3037
  %3050 = vst [vmem:[#allocation2 + $0x48] sm:$0xff] %v3038
  %3051 = vst [vmem:[#allocation2 + $0x50] sm:$0xff] %v3039
  %3052 = vst [vmem:[#allocation2 + $0x58] sm:$0xff] %v3040
  %3053 = vst [vmem:[#allocation2 + $0x60] sm:$0xff] %v3041
  %3054 = vst.msk [vmem:[#allocation2 + $0x68] sm:$0xff] %vm1194, %v3042
  %v3055 = vld [vmem:[#allocation2] sm:$0xff]
  %v3056 = vld [vmem:[#allocation2 + $0x8] sm:$0xff]
  %v3057 = vld [vmem:[#allocation2 + $0x10] sm:$0xff]
  %v3058 = vld [vmem:[#allocation2 + $0x18] sm:$0xff]
  %v3059 = vld [vmem:[#allocation2 + $0x20] sm:$0xff]
  %v3060 = vld [vmem:[#allocation2 + $0x28] sm:$0xff]
  %v3061 = vld [vmem:[#allocation2 + $0x38] sm:$0xff]
  %v3062 = vld [vmem:[#allocation2 + $0x40] sm:$0xff]
  %v3063 = vld [vmem:[#allocation2 + $0x48] sm:$0xff]
  %v3064 = vld [vmem:[#allocation2 + $0x50] sm:$0xff]
  %v3065 = vld [vmem:[#allocation2 + $0x58] sm:$0xff]
  %v3066 = vld [vmem:[#allocation2 + $0x60] sm:$0xff]
  %3079 = vrot.lane.b32.xlu0 %v3055, 127
  %v3080 = vpop.permute.xlu0 %3079
  %3081 = vrot.lane.b32.xlu0 %v3056, 127
  %v3082 = vpop.permute.xlu0 %3081
  %3083 = vrot.lane.b32.xlu0 %v3057, 127
  %v3084 = vpop.permute.xlu0 %3083
  %3085 = vrot.lane.b32.xlu0 %v3058, 127
  %v3086 = vpop.permute.xlu0 %3085
  %3087 = vrot.lane.b32.xlu0 %v3059, 127
  %v3088 = vpop.permute.xlu0 %3087
  %3089 = vrot.lane.b32.xlu0 %v3060, 127
  %v3090 = vpop.permute.xlu0 %3089
  %3091 = vrot.lane.b32.xlu0 %v3061, 127
  %v3092 = vpop.permute.xlu0 %3091
  %3093 = vrot.lane.b32.xlu0 %v3062, 127
  %v3094 = vpop.permute.xlu0 %3093
  %3095 = vrot.lane.b32.xlu0 %v3063, 127
  %v3096 = vpop.permute.xlu0 %3095
  %3097 = vrot.lane.b32.xlu0 %v3064, 127
  %v3098 = vpop.permute.xlu0 %3097
  %3099 = vrot.lane.b32.xlu0 %v3065, 127
  %v3100 = vpop.permute.xlu0 %3099
  %3101 = vrot.lane.b32.xlu0 %v3066, 127
  %v3102 = vpop.permute.xlu0 %3101
  %v3103 = vsel %vm107, %v3080, %v3082
  %v3104 = vsel %vm107, %v3082, %v3084
  %v3105 = vsel %vm107, %v3084, %v3086
  %v3106 = vsel %vm107, %v3086, %v3088
  %v3107 = vsel %vm107, %v3088, %v3090
  %v3108 = vsel %vm107, %v3092, %v3094
  %v3109 = vsel %vm107, %v3094, %v3096
  %v3110 = vsel %vm107, %v3096, %v3098
  %v3111 = vsel %vm107, %v3098, %v3100
  %v3112 = vsel %vm107, %v3100, %v3102
  %3113 = vrot.lane.b32.xlu0 %v3055, 126
  %v3114 = vpop.permute.xlu0 %3113
  %3115 = vrot.lane.b32.xlu0 %v3056, 126
  %v3116 = vpop.permute.xlu0 %3115
  %3117 = vrot.lane.b32.xlu0 %v3057, 126
  %v3118 = vpop.permute.xlu0 %3117
  %3119 = vrot.lane.b32.xlu0 %v3058, 126
  %v3120 = vpop.permute.xlu0 %3119
  %3121 = vrot.lane.b32.xlu0 %v3059, 126
  %v3122 = vpop.permute.xlu0 %3121
  %3123 = vrot.lane.b32.xlu0 %v3060, 126
  %v3124 = vpop.permute.xlu0 %3123
  %3125 = vrot.lane.b32.xlu0 %v3061, 126
  %v3126 = vpop.permute.xlu0 %3125
  %3127 = vrot.lane.b32.xlu0 %v3062, 126
  %v3128 = vpop.permute.xlu0 %3127
  %3129 = vrot.lane.b32.xlu0 %v3063, 126
  %v3130 = vpop.permute.xlu0 %3129
  %3131 = vrot.lane.b32.xlu0 %v3064, 126
  %v3132 = vpop.permute.xlu0 %3131
  %3133 = vrot.lane.b32.xlu0 %v3065, 126
  %v3134 = vpop.permute.xlu0 %3133
  %3135 = vrot.lane.b32.xlu0 %v3066, 126
  %v3136 = vpop.permute.xlu0 %3135
  %v3137 = vsel %vm125, %v3114, %v3116
  %v3138 = vsel %vm125, %v3116, %v3118
  %v3139 = vsel %vm125, %v3118, %v3120
  %v3140 = vsel %vm125, %v3120, %v3122
  %v3141 = vsel %vm125, %v3122, %v3124
  %v3142 = vsel %vm125, %v3126, %v3128
  %v3143 = vsel %vm125, %v3128, %v3130
  %v3144 = vsel %vm125, %v3130, %v3132
  %v3145 = vsel %vm125, %v3132, %v3134
  %v3146 = vsel %vm125, %v3134, %v3136
  %v3147 = vld [vmem:[%s11] sm:$0xf]
  %v3148 = vld [vmem:[%s11 + $0x4] sm:$0xf]
  %v3149 = vld [vmem:[%s11 + $0x8] sm:$0xf]
  %v3150 = vld [vmem:[%s11 + $0xc] sm:$0xf]
  %v3151 = vld [vmem:[#allocation2] sm:$0xff]
  %v3152 = vld [vmem:[#allocation2 + $0x8] sm:$0xff]
  %v3153 = vld [vmem:[#allocation2 + $0x10] sm:$0xff]
  %v3154 = vld [vmem:[#allocation2 + $0x18] sm:$0xff]
  %v3155 = vld [vmem:[#allocation2 + $0x20] sm:$0xff]
  %v3156 = vld [vmem:[#allocation2 + $0x28] sm:$0xff]
  %v3157 = vld [vmem:[#allocation2 + $0x30] sm:$0xff]
  %v3158 = vld [vmem:[#allocation2 + $0x38] sm:$0xff]
  %v3159 = vld [vmem:[#allocation2 + $0x40] sm:$0xff]
  %v3160 = vld [vmem:[#allocation2 + $0x48] sm:$0xff]
  %v3161 = vld [vmem:[#allocation2 + $0x50] sm:$0xff]
  %v3162 = vld [vmem:[#allocation2 + $0x58] sm:$0xff]
  %v3163 = vld [vmem:[#allocation2 + $0x60] sm:$0xff]
  %v3164 = vld [vmem:[#allocation2 + $0x68] sm:$0xff]
  %3177 = vrot.lane.b32.xlu0 %v3152, 127
  %v3178 = vpop.permute.xlu0 %3177
  %3179 = vrot.lane.b32.xlu0 %v3153, 127
  %v3180 = vpop.permute.xlu0 %3179
  %3181 = vrot.lane.b32.xlu0 %v3154, 127
  %v3182 = vpop.permute.xlu0 %3181
  %3183 = vrot.lane.b32.xlu0 %v3155, 127
  %v3184 = vpop.permute.xlu0 %3183
  %3185 = vrot.lane.b32.xlu0 %v3156, 127
  %v3186 = vpop.permute.xlu0 %3185
  %3187 = vrot.lane.b32.xlu0 %v3157, 127
  %v3188 = vpop.permute.xlu0 %3187
  %3189 = vrot.lane.b32.xlu0 %v3159, 127
  %v3190 = vpop.permute.xlu0 %3189
  %3191 = vrot.lane.b32.xlu0 %v3160, 127
  %v3192 = vpop.permute.xlu0 %3191
  %3193 = vrot.lane.b32.xlu0 %v3161, 127
  %v3194 = vpop.permute.xlu0 %3193
  %3195 = vrot.lane.b32.xlu0 %v3162, 127
  %v3196 = vpop.permute.xlu0 %3195
  %3197 = vrot.lane.b32.xlu0 %v3163, 127
  %v3198 = vpop.permute.xlu0 %3197
  %3199 = vrot.lane.b32.xlu0 %v3164, 127
  %v3200 = vpop.permute.xlu0 %3199
  %v3201 = vsel %vm107, %v3178, %v3180
  %v3202 = vsel %vm107, %v3180, %v3182
  %v3203 = vsel %vm107, %v3182, %v3184
  %v3204 = vsel %vm107, %v3184, %v3186
  %v3205 = vsel %vm107, %v3186, %v3188
  %v3206 = vsel %vm107, %v3190, %v3192
  %v3207 = vsel %vm107, %v3192, %v3194
  %v3208 = vsel %vm107, %v3194, %v3196
  %v3209 = vsel %vm107, %v3196, %v3198
  %v3210 = vsel %vm107, %v3198, %v3200
  %3211 = vrot.lane.b32.xlu0 %v3152, 126
  %v3212 = vpop.permute.xlu0 %3211
  %3213 = vrot.lane.b32.xlu0 %v3153, 126
  %v3214 = vpop.permute.xlu0 %3213
  %3215 = vrot.lane.b32.xlu0 %v3154, 126
  %v3216 = vpop.permute.xlu0 %3215
  %3217 = vrot.lane.b32.xlu0 %v3155, 126
  %v3218 = vpop.permute.xlu0 %3217
  %3219 = vrot.lane.b32.xlu0 %v3156, 126
  %v3220 = vpop.permute.xlu0 %3219
  %3221 = vrot.lane.b32.xlu0 %v3157, 126
  %v3222 = vpop.permute.xlu0 %3221
  %3223 = vrot.lane.b32.xlu0 %v3159, 126
  %v3224 = vpop.permute.xlu0 %3223
  %3225 = vrot.lane.b32.xlu0 %v3160, 126
  %v3226 = vpop.permute.xlu0 %3225
  %3227 = vrot.lane.b32.xlu0 %v3161, 126
  %v3228 = vpop.permute.xlu0 %3227
  %3229 = vrot.lane.b32.xlu0 %v3162, 126
  %v3230 = vpop.permute.xlu0 %3229
  %3231 = vrot.lane.b32.xlu0 %v3163, 126
  %v3232 = vpop.permute.xlu0 %3231
  %3233 = vrot.lane.b32.xlu0 %v3164, 126
  %v3234 = vpop.permute.xlu0 %3233
  %v3235 = vsel %vm125, %v3212, %v3214
  %v3236 = vsel %vm125, %v3214, %v3216
  %v3237 = vsel %vm125, %v3216, %v3218
  %v3238 = vsel %vm125, %v3218, %v3220
  %v3239 = vsel %vm125, %v3220, %v3222
  %v3240 = vsel %vm125, %v3224, %v3226
  %v3241 = vsel %vm125, %v3226, %v3228
  %v3242 = vsel %vm125, %v3228, %v3230
  %v3243 = vsel %vm125, %v3230, %v3232
  %v3244 = vsel %vm125, %v3232, %v3234
  %s3245 = scalar_lea.vmem %s11, 16
  %v3246 = vld [vmem:[%s3245] sm:$0xf]
  %v3247 = vld [vmem:[%s3245 + $0x4] sm:$0xf]
  %v3248 = vld [vmem:[%s3245 + $0x8] sm:$0xf]
  %v3249 = vld [vmem:[%s3245 + $0xc] sm:$0xf]
  %v3254 = vunpack.c.l.b16 %v3246
  %v3255 = vunpack.c.l.b16 %v3247
  %v3256 = vunpack.c.l.b16 %v3248
  %v3257 = vunpack.c.l.b16 %v3249
  %v3258 = vpack.c.b16 %v3255, %v3254
  %v3259 = vpack.c.b16 %v3257, %v3256
  %3262 = vrot.lane.b32.xlu0 %v3151, 1
  %v3263 = vpop.permute.xlu0 %3262
  %3264 = vrot.lane.b32.xlu0 %v3152, 1
  %v3265 = vpop.permute.xlu0 %3264
  %3266 = vrot.lane.b32.xlu0 %v3153, 1
  %v3267 = vpop.permute.xlu0 %3266
  %3268 = vrot.lane.b32.xlu0 %v3154, 1
  %v3269 = vpop.permute.xlu0 %3268
  %3270 = vrot.lane.b32.xlu0 %v3155, 1
  %v3271 = vpop.permute.xlu0 %3270
  %3272 = vrot.lane.b32.xlu0 %v3156, 1
  %v3273 = vpop.permute.xlu0 %3272
  %3274 = vrot.lane.b32.xlu0 %v3157, 1
  %v3275 = vpop.permute.xlu0 %3274
  %3276 = vrot.lane.b32.xlu0 %v3158, 1
  %v3277 = vpop.permute.xlu0 %3276
  %3278 = vrot.lane.b32.xlu0 %v3159, 1
  %v3279 = vpop.permute.xlu0 %3278
  %3280 = vrot.lane.b32.xlu0 %v3160, 1
  %v3281 = vpop.permute.xlu0 %3280
  %3282 = vrot.lane.b32.xlu0 %v3161, 1
  %v3283 = vpop.permute.xlu0 %3282
  %3284 = vrot.lane.b32.xlu0 %v3162, 1
  %v3285 = vpop.permute.xlu0 %3284
  %3286 = vrot.lane.b32.xlu0 %v3163, 1
  %v3287 = vpop.permute.xlu0 %3286
  %3288 = vrot.lane.b32.xlu0 %v3164, 1
  %v3289 = vpop.permute.xlu0 %3288
  %3290 = vrot.lane.b32.xlu0 %v3178, 1
  %v3291 = vpop.permute.xlu0 %3290
  %3292 = vrot.lane.b32.xlu0 %v3201, 1
  %v3293 = vpop.permute.xlu0 %3292
  %3294 = vrot.lane.b32.xlu0 %v3202, 1
  %v3295 = vpop.permute.xlu0 %3294
  %3296 = vrot.lane.b32.xlu0 %v3203, 1
  %v3297 = vpop.permute.xlu0 %3296
  %3298 = vrot.lane.b32.xlu0 %v3204, 1
  %v3299 = vpop.permute.xlu0 %3298
  %3300 = vrot.lane.b32.xlu0 %v3205, 1
  %v3301 = vpop.permute.xlu0 %3300
  %3302 = vrot.lane.b32.xlu0 %v3188, 1
  %v3303 = vpop.permute.xlu0 %3302
  %3304 = vrot.lane.b32.xlu0 %v3190, 1
  %v3305 = vpop.permute.xlu0 %3304
  %3306 = vrot.lane.b32.xlu0 %v3206, 1
  %v3307 = vpop.permute.xlu0 %3306
  %3308 = vrot.lane.b32.xlu0 %v3207, 1
  %v3309 = vpop.permute.xlu0 %3308
  %3310 = vrot.lane.b32.xlu0 %v3208, 1
  %v3311 = vpop.permute.xlu0 %3310
  %3312 = vrot.lane.b32.xlu0 %v3209, 1
  %v3313 = vpop.permute.xlu0 %3312
  %3314 = vrot.lane.b32.xlu0 %v3210, 1
  %v3315 = vpop.permute.xlu0 %3314
  %3316 = vrot.lane.b32.xlu0 %v3200, 1
  %v3317 = vpop.permute.xlu0 %3316
  %3318 = vrot.lane.b32.xlu0 %v3212, 1
  %v3319 = vpop.permute.xlu0 %3318
  %3320 = vrot.lane.b32.xlu0 %v3235, 1
  %v3321 = vpop.permute.xlu0 %3320
  %3322 = vrot.lane.b32.xlu0 %v3236, 1
  %v3323 = vpop.permute.xlu0 %3322
  %3324 = vrot.lane.b32.xlu0 %v3237, 1
  %v3325 = vpop.permute.xlu0 %3324
  %3326 = vrot.lane.b32.xlu0 %v3238, 1
  %v3327 = vpop.permute.xlu0 %3326
  %3328 = vrot.lane.b32.xlu0 %v3239, 1
  %v3329 = vpop.permute.xlu0 %3328
  %3330 = vrot.lane.b32.xlu0 %v3222, 1
  %v3331 = vpop.permute.xlu0 %3330
  %3332 = vrot.lane.b32.xlu0 %v3224, 1
  %v3333 = vpop.permute.xlu0 %3332
  %3334 = vrot.lane.b32.xlu0 %v3240, 1
  %v3335 = vpop.permute.xlu0 %3334
  %3336 = vrot.lane.b32.xlu0 %v3241, 1
  %v3337 = vpop.permute.xlu0 %3336
  %3338 = vrot.lane.b32.xlu0 %v3242, 1
  %v3339 = vpop.permute.xlu0 %3338
  %3340 = vrot.lane.b32.xlu0 %v3243, 1
  %v3341 = vpop.permute.xlu0 %3340
  %3342 = vrot.lane.b32.xlu0 %v3244, 1
  %v3343 = vpop.permute.xlu0 %3342
  %3344 = vrot.lane.b32.xlu0 %v3234, 1
  %v3345 = vpop.permute.xlu0 %3344
  %v3346 = vsel %vm293, %v3263, %v3265
  %v3347 = vsel %vm293, %v3265, %v3267
  %v3348 = vsel %vm293, %v3267, %v3269
  %v3349 = vsel %vm293, %v3269, %v3271
  %v3350 = vsel %vm293, %v3271, %v3273
  %v3351 = vsel %vm293, %v3273, %v3275
  %v3352 = vsel %vm293, %v3277, %v3279
  %v3353 = vsel %vm293, %v3279, %v3281
  %v3354 = vsel %vm293, %v3281, %v3283
  %v3355 = vsel %vm293, %v3283, %v3285
  %v3356 = vsel %vm293, %v3285, %v3287
  %v3357 = vsel %vm293, %v3287, %v3289
  %v3358 = vsel %vm293, %v3291, %v3293
  %v3359 = vsel %vm293, %v3293, %v3295
  %v3360 = vsel %vm293, %v3295, %v3297
  %v3361 = vsel %vm293, %v3297, %v3299
  %v3362 = vsel %vm293, %v3299, %v3301
  %v3363 = vsel %vm293, %v3301, %v3303
  %v3364 = vsel %vm293, %v3305, %v3307
  %v3365 = vsel %vm293, %v3307, %v3309
  %v3366 = vsel %vm293, %v3309, %v3311
  %v3367 = vsel %vm293, %v3311, %v3313
  %v3368 = vsel %vm293, %v3313, %v3315
  %v3369 = vsel %vm293, %v3315, %v3317
  %v3370 = vsel %vm293, %v3319, %v3321
  %v3371 = vsel %vm293, %v3321, %v3323
  %v3372 = vsel %vm293, %v3323, %v3325
  %v3373 = vsel %vm293, %v3325, %v3327
  %v3374 = vsel %vm293, %v3327, %v3329
  %v3375 = vsel %vm293, %v3329, %v3331
  %v3376 = vsel %vm293, %v3333, %v3335
  %v3377 = vsel %vm293, %v3335, %v3337
  %v3378 = vsel %vm293, %v3337, %v3339
  %v3379 = vsel %vm293, %v3339, %v3341
  %v3380 = vsel %vm293, %v3341, %v3343
  %v3381 = vsel %vm293, %v3343, %v3345
  %v3419 = vsel %vm1822, %v3258, 0
  %v3422 = vsel %vm1822, %v3259, 0
  %3424 = vmatprep.subr.bf16.mxu0 %v3347
  %3425 = vmatpush1.bf16.msra.mxu0 %v3346
  %3426 = vmatprep.subr.bf16.mxu0 %v3353
  %3427 = vmatpush1.bf16.msra.mxu0 %v3352
  %3428 = vmatprep.subr.bf16.mxu0 %v3359
  %3429 = vmatpush1.bf16.msra.mxu0 %v3358
  %3430 = vmatprep.subr.bf16.mxu0 %v3365
  %3431 = vmatpush1.bf16.msra.mxu0 %v3364
  %3432 = vmatprep.subr.bf16.mxu0 %v3371
  %3433 = vmatpush1.bf16.msra.mxu0 %v3370
  %3434 = vmatprep.subr.bf16.mxu0 %v3377
  %3435 = vmatpush1.bf16.msra.mxu0 %v3376
  %3436 = vmatprep.subr.bf16.mxu0 0
  %3437 = vmatpush1.bf16.msra.mxu0 0
  %3438 = vmatprep.subr.bf16.mxu0 0
  %3439 = vmatpush1.bf16.msra.mxu0 0
  %3440 = vmatprep.subr.bf16.mxu0 0
  %3441 = vmatpush1.bf16.msra.mxu0 0
  %3442 = vmatprep.subr.bf16.mxu0 0
  %3443 = vmatpush1.bf16.msra.mxu0 0
  %3444 = vmatprep.subr.bf16.mxu0 0
  %3445 = vmatpush1.bf16.msra.mxu0 0
  %3446 = vmatprep.subr.bf16.mxu0 0
  %3447 = vmatpush1.bf16.msra.mxu0 0
  %3448 = vmatprep.subr.bf16.mxu0 0
  %3449 = vmatpush1.bf16.msra.mxu0 0
  %3450 = vmatprep.subr.bf16.mxu0 0
  %3451 = vmatpush1.bf16.msra.mxu0 0
  %3452 = vmatprep.subr.bf16.mxu0 0
  %3453 = vmatpush1.bf16.msra.mxu0 0
  %3454 = vmatprep.subr.bf16.mxu0 0
  %3455 = vmatpush1.bf16.msra.mxu0 0
  %3456 = vmatprep.mubr.bf16.mxu0 0
  %3457 = vmatmul.mubr.bf16.gmra.mrb[0].mxu0 %v3419
  %v3458 = vpop.f32.mrb[0].mxu0
  %v3459 = vadd.f32 0.0, %v3458
  %v3460 = vpop.f32.mrb[0].mxu0
  %v3461 = vadd.f32 0.0, %v3460
  %v3462 = vpop.f32.mrb[0].mxu0
  %v3463 = vadd.f32 0.0, %v3462
  %v3464 = vpop.f32.mrb[0].mxu0
  %v3465 = vadd.f32 0.0, %v3464
  %3466 = vmatprep.mubr.bf16.mxu0 0
  %3467 = vmatmul.mubr.bf16.gmra.mrb[0].mxu0 %v3422
  %v3468 = vpop.f32.mrb[0].mxu0
  %v3469 = vadd.f32 0.0, %v3468
  %v3470 = vpop.f32.mrb[0].mxu0
  %v3471 = vadd.f32 0.0, %v3470
  %v3472 = vpop.f32.mrb[0].mxu0
  %v3473 = vadd.f32 0.0, %v3472
  %v3474 = vpop.f32.mrb[0].mxu0
  %v3475 = vadd.f32 0.0, %v3474
  %3476 = vdwg.mxu0
  %3477 = vmatprep.subr.bf16.mxu0 %v3349
  %3478 = vmatpush1.bf16.msra.mxu0 %v3348
  %3479 = vmatprep.subr.bf16.mxu0 %v3355
  %3480 = vmatpush1.bf16.msra.mxu0 %v3354
  %3481 = vmatprep.subr.bf16.mxu0 %v3361
  %3482 = vmatpush1.bf16.msra.mxu0 %v3360
  %3483 = vmatprep.subr.bf16.mxu0 %v3367
  %3484 = vmatpush1.bf16.msra.mxu0 %v3366
  %3485 = vmatprep.subr.bf16.mxu0 %v3373
  %3486 = vmatpush1.bf16.msra.mxu0 %v3372
  %3487 = vmatprep.subr.bf16.mxu0 %v3379
  %3488 = vmatpush1.bf16.msra.mxu0 %v3378
  %3489 = vmatprep.subr.bf16.mxu0 0
  %3490 = vmatpush1.bf16.msra.mxu0 0
  %3491 = vmatprep.subr.bf16.mxu0 0
  %3492 = vmatpush1.bf16.msra.mxu0 0
  %3493 = vmatprep.subr.bf16.mxu0 0
  %3494 = vmatpush1.bf16.msra.mxu0 0
  %3495 = vmatprep.subr.bf16.mxu0 0
  %3496 = vmatpush1.bf16.msra.mxu0 0
  %3497 = vmatprep.subr.bf16.mxu0 0
  %3498 = vmatpush1.bf16.msra.mxu0 0
  %3499 = vmatprep.subr.bf16.mxu0 0
  %3500 = vmatpush1.bf16.msra.mxu0 0
  %3501 = vmatprep.subr.bf16.mxu0 0
  %3502 = vmatpush1.bf16.msra.mxu0 0
  %3503 = vmatprep.subr.bf16.mxu0 0
  %3504 = vmatpush1.bf16.msra.mxu0 0
  %3505 = vmatprep.subr.bf16.mxu0 0
  %3506 = vmatpush1.bf16.msra.mxu0 0
  %3507 = vmatprep.subr.bf16.mxu0 0
  %3508 = vmatpush1.bf16.msra.mxu0 0
  %3509 = vmatprep.mubr.bf16.mxu0 0
  %3510 = vmatmul.mubr.bf16.gmra.mrb[0].mxu0 %v3419
  %v3511 = vpop.f32.mrb[0].mxu0
  %v3512 = vadd.f32 0.0, %v3511
  %v3513 = vpop.f32.mrb[0].mxu0
  %v3514 = vadd.f32 0.0, %v3513
  %v3515 = vpop.f32.mrb[0].mxu0
  %v3516 = vadd.f32 0.0, %v3515
  %v3517 = vpop.f32.mrb[0].mxu0
  %v3518 = vadd.f32 0.0, %v3517
  %3519 = vmatprep.mubr.bf16.mxu0 0
  %3520 = vmatmul.mubr.bf16.gmra.mrb[0].mxu0 %v3422
  %v3521 = vpop.f32.mrb[0].mxu0
  %v3522 = vadd.f32 0.0, %v3521
  %v3523 = vpop.f32.mrb[0].mxu0
  %v3524 = vadd.f32 0.0, %v3523
  %v3525 = vpop.f32.mrb[0].mxu0
  %v3526 = vadd.f32 0.0, %v3525
  %v3527 = vpop.f32.mrb[0].mxu0
  %v3528 = vadd.f32 0.0, %v3527
  %3529 = vdwg.mxu0
  %3530 = vmatprep.subr.bf16.mxu0 %v3351
  %3531 = vmatpush1.bf16.msra.mxu0 %v3350
  %3532 = vmatprep.subr.bf16.mxu0 %v3357
  %3533 = vmatpush1.bf16.msra.mxu0 %v3356
  %3534 = vmatprep.subr.bf16.mxu0 %v3363
  %3535 = vmatpush1.bf16.msra.mxu0 %v3362
  %3536 = vmatprep.subr.bf16.mxu0 %v3369
  %3537 = vmatpush1.bf16.msra.mxu0 %v3368
  %3538 = vmatprep.subr.bf16.mxu0 %v3375
  %3539 = vmatpush1.bf16.msra.mxu0 %v3374
  %3540 = vmatprep.subr.bf16.mxu0 %v3381
  %3541 = vmatpush1.bf16.msra.mxu0 %v3380
  %3542 = vmatprep.subr.bf16.mxu0 0
  %3543 = vmatpush1.bf16.msra.mxu0 0
  %3544 = vmatprep.subr.bf16.mxu0 0
  %3545 = vmatpush1.bf16.msra.mxu0 0
  %3546 = vmatprep.subr.bf16.mxu0 0
  %3547 = vmatpush1.bf16.msra.mxu0 0
  %3548 = vmatprep.subr.bf16.mxu0 0
  %3549 = vmatpush1.bf16.msra.mxu0 0
  %3550 = vmatprep.subr.bf16.mxu0 0
  %3551 = vmatpush1.bf16.msra.mxu0 0
  %3552 = vmatprep.subr.bf16.mxu0 0
  %3553 = vmatpush1.bf16.msra.mxu0 0
  %3554 = vmatprep.subr.bf16.mxu0 0
  %3555 = vmatpush1.bf16.msra.mxu0 0
  %3556 = vmatprep.subr.bf16.mxu0 0
  %3557 = vmatpush1.bf16.msra.mxu0 0
  %3558 = vmatprep.subr.bf16.mxu0 0
  %3559 = vmatpush1.bf16.msra.mxu0 0
  %3560 = vmatprep.subr.bf16.mxu0 0
  %3561 = vmatpush1.bf16.msra.mxu0 0
  %3562 = vmatprep.mubr.bf16.mxu0 0
  %3563 = vmatmul.mubr.bf16.gmra.mrb[0].mxu0 %v3419
  %v3564 = vpop.f32.mrb[0].mxu0
  %v3565 = vadd.f32 0.0, %v3564
  %v3566 = vpop.f32.mrb[0].mxu0
  %v3567 = vadd.f32 0.0, %v3566
  %v3568 = vpop.f32.mrb[0].mxu0
  %v3569 = vadd.f32 0.0, %v3568
  %v3570 = vpop.f32.mrb[0].mxu0
  %v3571 = vadd.f32 0.0, %v3570
  %3572 = vmatprep.mubr.bf16.mxu0 0
  %3573 = vmatmul.mubr.bf16.gmra.mrb[0].mxu0 %v3422
  %v3574 = vpop.f32.mrb[0].mxu0
  %v3575 = vadd.f32 0.0, %v3574
  %v3576 = vpop.f32.mrb[0].mxu0
  %v3577 = vadd.f32 0.0, %v3576
  %v3578 = vpop.f32.mrb[0].mxu0
  %v3579 = vadd.f32 0.0, %v3578
  %v3580 = vpop.f32.mrb[0].mxu0
  %v3581 = vadd.f32 0.0, %v3580
  %3582 = vdwg.mxu0
  %v3587 = vunpack.c.l.b16 %v3147
  %v3588 = vunpack.c.l.b16 %v3148
  %v3589 = vunpack.c.l.b16 %v3149
  %v3590 = vunpack.c.l.b16 %v3150
  %v3591 = vpack.c.b16 %v3588, %v3587
  %v3592 = vpack.c.b16 %v3590, %v3589
  %3593 = vrot.lane.b32.xlu0 %v3055, 19
  %v3594 = vpop.permute.xlu0 %3593
  %3595 = vrot.lane.b32.xlu0 %v3056, 19
  %v3596 = vpop.permute.xlu0 %3595
  %3597 = vrot.lane.b32.xlu0 %v3057, 19
  %v3598 = vpop.permute.xlu0 %3597
  %3599 = vrot.lane.b32.xlu0 %v3058, 19
  %v3600 = vpop.permute.xlu0 %3599
  %3601 = vrot.lane.b32.xlu0 %v3059, 19
  %v3602 = vpop.permute.xlu0 %3601
  %3603 = vrot.lane.b32.xlu0 %v3060, 19
  %v3604 = vpop.permute.xlu0 %3603
  %3605 = vrot.lane.b32.xlu0 %v3061, 19
  %v3606 = vpop.permute.xlu0 %3605
  %3607 = vrot.lane.b32.xlu0 %v3062, 19
  %v3608 = vpop.permute.xlu0 %3607
  %3609 = vrot.lane.b32.xlu0 %v3063, 19
  %v3610 = vpop.permute.xlu0 %3609
  %3611 = vrot.lane.b32.xlu0 %v3064, 19
  %v3612 = vpop.permute.xlu0 %3611
  %3613 = vrot.lane.b32.xlu0 %v3065, 19
  %v3614 = vpop.permute.xlu0 %3613
  %3615 = vrot.lane.b32.xlu0 %v3066, 19
  %v3616 = vpop.permute.xlu0 %3615
  %3617 = vrot.lane.b32.xlu0 %v3103, 19
  %v3618 = vpop.permute.xlu0 %3617
  %3619 = vrot.lane.b32.xlu0 %v3104, 19
  %v3620 = vpop.permute.xlu0 %3619
  %3621 = vrot.lane.b32.xlu0 %v3105, 19
  %v3622 = vpop.permute.xlu0 %3621
  %3623 = vrot.lane.b32.xlu0 %v3106, 19
  %v3624 = vpop.permute.xlu0 %3623
  %3625 = vrot.lane.b32.xlu0 %v3107, 19
  %v3626 = vpop.permute.xlu0 %3625
  %3627 = vrot.lane.b32.xlu0 %v3090, 19
  %v3628 = vpop.permute.xlu0 %3627
  %3629 = vrot.lane.b32.xlu0 %v3108, 19
  %v3630 = vpop.permute.xlu0 %3629
  %3631 = vrot.lane.b32.xlu0 %v3109, 19
  %v3632 = vpop.permute.xlu0 %3631
  %3633 = vrot.lane.b32.xlu0 %v3110, 19
  %v3634 = vpop.permute.xlu0 %3633
  %3635 = vrot.lane.b32.xlu0 %v3111, 19
  %v3636 = vpop.permute.xlu0 %3635
  %3637 = vrot.lane.b32.xlu0 %v3112, 19
  %v3638 = vpop.permute.xlu0 %3637
  %3639 = vrot.lane.b32.xlu0 %v3102, 19
  %v3640 = vpop.permute.xlu0 %3639
  %3641 = vrot.lane.b32.xlu0 %v3137, 19
  %v3642 = vpop.permute.xlu0 %3641
  %3643 = vrot.lane.b32.xlu0 %v3138, 19
  %v3644 = vpop.permute.xlu0 %3643
  %3645 = vrot.lane.b32.xlu0 %v3139, 19
  %v3646 = vpop.permute.xlu0 %3645
  %3647 = vrot.lane.b32.xlu0 %v3140, 19
  %v3648 = vpop.permute.xlu0 %3647
  %3649 = vrot.lane.b32.xlu0 %v3141, 19
  %v3650 = vpop.permute.xlu0 %3649
  %3651 = vrot.lane.b32.xlu0 %v3124, 19
  %v3652 = vpop.permute.xlu0 %3651
  %3653 = vrot.lane.b32.xlu0 %v3142, 19
  %v3654 = vpop.permute.xlu0 %3653
  %3655 = vrot.lane.b32.xlu0 %v3143, 19
  %v3656 = vpop.permute.xlu0 %3655
  %3657 = vrot.lane.b32.xlu0 %v3144, 19
  %v3658 = vpop.permute.xlu0 %3657
  %3659 = vrot.lane.b32.xlu0 %v3145, 19
  %v3660 = vpop.permute.xlu0 %3659
  %3661 = vrot.lane.b32.xlu0 %v3146, 19
  %v3662 = vpop.permute.xlu0 %3661
  %3663 = vrot.lane.b32.xlu0 %v3136, 19
  %v3664 = vpop.permute.xlu0 %3663
  %v3665 = vsel %vm542, %v3594, %v3596
  %v3666 = vsel %vm542, %v3596, %v3598
  %v3667 = vsel %vm542, %v3598, %v3600
  %v3668 = vsel %vm542, %v3600, %v3602
  %v3669 = vsel %vm542, %v3602, %v3604
  %v3670 = vsel %vm542, %v3606, %v3608
  %v3671 = vsel %vm542, %v3608, %v3610
  %v3672 = vsel %vm542, %v3610, %v3612
  %v3673 = vsel %vm542, %v3612, %v3614
  %v3674 = vsel %vm542, %v3614, %v3616
  %v3675 = vsel %vm542, %v3618, %v3620
  %v3676 = vsel %vm542, %v3620, %v3622
  %v3677 = vsel %vm542, %v3622, %v3624
  %v3678 = vsel %vm542, %v3624, %v3626
  %v3679 = vsel %vm542, %v3626, %v3628
  %v3680 = vsel %vm542, %v3630, %v3632
  %v3681 = vsel %vm542, %v3632, %v3634
  %v3682 = vsel %vm542, %v3634, %v3636
  %v3683 = vsel %vm542, %v3636, %v3638
  %v3684 = vsel %vm542, %v3638, %v3640
  %v3685 = vsel %vm542, %v3642, %v3644
  %v3686 = vsel %vm542, %v3644, %v3646
  %v3687 = vsel %vm542, %v3646, %v3648
  %v3688 = vsel %vm542, %v3648, %v3650
  %v3689 = vsel %vm542, %v3650, %v3652
  %v3690 = vsel %vm542, %v3654, %v3656
  %v3691 = vsel %vm542, %v3656, %v3658
  %v3692 = vsel %vm542, %v3658, %v3660
  %v3693 = vsel %vm542, %v3660, %v3662
  %v3694 = vsel %vm542, %v3662, %v3664
  %v3732 = vsel %vm1822, %v3591, 0
  %v3735 = vsel %vm1822, %v3592, 0
  %3737 = vmatprep.subr.bf16.mxu0 %v3666
  %3738 = vmatpush1.bf16.msra.mxu0 %v3665
  %3739 = vmatprep.subr.bf16.mxu0 %v3671
  %3740 = vmatpush1.bf16.msra.mxu0 %v3670
  %3741 = vmatprep.subr.bf16.mxu0 %v3676
  %3742 = vmatpush1.bf16.msra.mxu0 %v3675
  %3743 = vmatprep.subr.bf16.mxu0 %v3681
  %3744 = vmatpush1.bf16.msra.mxu0 %v3680
  %3745 = vmatprep.subr.bf16.mxu0 %v3686
  %3746 = vmatpush1.bf16.msra.mxu0 %v3685
  %3747 = vmatprep.subr.bf16.mxu0 %v3691
  %3748 = vmatpush1.bf16.msra.mxu0 %v3690
  %3749 = vmatprep.subr.bf16.mxu0 0
  %3750 = vmatpush1.bf16.msra.mxu0 0
  %3751 = vmatprep.subr.bf16.mxu0 0
  %3752 = vmatpush1.bf16.msra.mxu0 0
  %3753 = vmatprep.subr.bf16.mxu0 0
  %3754 = vmatpush1.bf16.msra.mxu0 0
  %3755 = vmatprep.subr.bf16.mxu0 0
  %3756 = vmatpush1.bf16.msra.mxu0 0
  %3757 = vmatprep.subr.bf16.mxu0 0
  %3758 = vmatpush1.bf16.msra.mxu0 0
  %3759 = vmatprep.subr.bf16.mxu0 0
  %3760 = vmatpush1.bf16.msra.mxu0 0
  %3761 = vmatprep.subr.bf16.mxu0 0
  %3762 = vmatpush1.bf16.msra.mxu0 0
  %3763 = vmatprep.subr.bf16.mxu0 0
  %3764 = vmatpush1.bf16.msra.mxu0 0
  %3765 = vmatprep.subr.bf16.mxu0 0
  %3766 = vmatpush1.bf16.msra.mxu0 0
  %3767 = vmatprep.subr.bf16.mxu0 0
  %3768 = vmatpush1.bf16.msra.mxu0 0
  %3769 = vmatprep.mubr.bf16.mxu0 0
  %3770 = vmatmul.mubr.bf16.gmra.mrb[0].mxu0 %v3732
  %v3771 = vpop.f32.mrb[0].mxu0
  %v3772 = vadd.f32 %v3459, %v3771
  %v3773 = vpop.f32.mrb[0].mxu0
  %v3774 = vadd.f32 %v3461, %v3773
  %v3775 = vpop.f32.mrb[0].mxu0
  %v3776 = vadd.f32 %v3463, %v3775
  %v3777 = vpop.f32.mrb[0].mxu0
  %v3778 = vadd.f32 %v3465, %v3777
  %3779 = vmatprep.mubr.bf16.mxu0 0
  %3780 = vmatmul.mubr.bf16.gmra.mrb[0].mxu0 %v3735
  %v3781 = vpop.f32.mrb[0].mxu0
  %v3782 = vadd.f32 %v3469, %v3781
  %v3783 = vpop.f32.mrb[0].mxu0
  %v3784 = vadd.f32 %v3471, %v3783
  %v3785 = vpop.f32.mrb[0].mxu0
  %v3786 = vadd.f32 %v3473, %v3785
  %v3787 = vpop.f32.mrb[0].mxu0
  %v3788 = vadd.f32 %v3475, %v3787
  %3789 = vdwg.mxu0
  %3790 = vmatprep.subr.bf16.mxu0 %v3668
  %3791 = vmatpush1.bf16.msra.mxu0 %v3667
  %3792 = vmatprep.subr.bf16.mxu0 %v3673
  %3793 = vmatpush1.bf16.msra.mxu0 %v3672
  %3794 = vmatprep.subr.bf16.mxu0 %v3678
  %3795 = vmatpush1.bf16.msra.mxu0 %v3677
  %3796 = vmatprep.subr.bf16.mxu0 %v3683
  %3797 = vmatpush1.bf16.msra.mxu0 %v3682
  %3798 = vmatprep.subr.bf16.mxu0 %v3688
  %3799 = vmatpush1.bf16.msra.mxu0 %v3687
  %3800 = vmatprep.subr.bf16.mxu0 %v3693
  %3801 = vmatpush1.bf16.msra.mxu0 %v3692
  %3802 = vmatprep.subr.bf16.mxu0 0
  %3803 = vmatpush1.bf16.msra.mxu0 0
  %3804 = vmatprep.subr.bf16.mxu0 0
  %3805 = vmatpush1.bf16.msra.mxu0 0
  %3806 = vmatprep.subr.bf16.mxu0 0
  %3807 = vmatpush1.bf16.msra.mxu0 0
  %3808 = vmatprep.subr.bf16.mxu0 0
  %3809 = vmatpush1.bf16.msra.mxu0 0
  %3810 = vmatprep.subr.bf16.mxu0 0
  %3811 = vmatpush1.bf16.msra.mxu0 0
  %3812 = vmatprep.subr.bf16.mxu0 0
  %3813 = vmatpush1.bf16.msra.mxu0 0
  %3814 = vmatprep.subr.bf16.mxu0 0
  %3815 = vmatpush1.bf16.msra.mxu0 0
  %3816 = vmatprep.subr.bf16.mxu0 0
  %3817 = vmatpush1.bf16.msra.mxu0 0
  %3818 = vmatprep.subr.bf16.mxu0 0
  %3819 = vmatpush1.bf16.msra.mxu0 0
  %3820 = vmatprep.subr.bf16.mxu0 0
  %3821 = vmatpush1.bf16.msra.mxu0 0
  %3822 = vmatprep.mubr.bf16.mxu0 0
  %3823 = vmatmul.mubr.bf16.gmra.mrb[0].mxu0 %v3732
  %v3824 = vpop.f32.mrb[0].mxu0
  %v3825 = vadd.f32 %v3512, %v3824
  %v3826 = vpop.f32.mrb[0].mxu0
  %v3827 = vadd.f32 %v3514, %v3826
  %v3828 = vpop.f32.mrb[0].mxu0
  %v3829 = vadd.f32 %v3516, %v3828
  %v3830 = vpop.f32.mrb[0].mxu0
  %v3831 = vadd.f32 %v3518, %v3830
  %3832 = vmatprep.mubr.bf16.mxu0 0
  %3833 = vmatmul.mubr.bf16.gmra.mrb[0].mxu0 %v3735
  %v3834 = vpop.f32.mrb[0].mxu0
  %v3835 = vadd.f32 %v3522, %v3834
  %v3836 = vpop.f32.mrb[0].mxu0
  %v3837 = vadd.f32 %v3524, %v3836
  %v3838 = vpop.f32.mrb[0].mxu0
  %v3839 = vadd.f32 %v3526, %v3838
  %v3840 = vpop.f32.mrb[0].mxu0
  %v3841 = vadd.f32 %v3528, %v3840
  %3842 = vdwg.mxu0
  %3843 = vmatprep.subr.bf16.mxu0 %v3604
  %3844 = vmatpush1.bf16.msra.mxu0 %v3669
  %3845 = vmatprep.subr.bf16.mxu0 %v3616
  %3846 = vmatpush1.bf16.msra.mxu0 %v3674
  %3847 = vmatprep.subr.bf16.mxu0 %v3628
  %3848 = vmatpush1.bf16.msra.mxu0 %v3679
  %3849 = vmatprep.subr.bf16.mxu0 %v3640
  %3850 = vmatpush1.bf16.msra.mxu0 %v3684
  %3851 = vmatprep.subr.bf16.mxu0 %v3652
  %3852 = vmatpush1.bf16.msra.mxu0 %v3689
  %3853 = vmatprep.subr.bf16.mxu0 %v3664
  %3854 = vmatpush1.bf16.msra.mxu0 %v3694
  %3855 = vmatprep.subr.bf16.mxu0 0
  %3856 = vmatpush1.bf16.msra.mxu0 0
  %3857 = vmatprep.subr.bf16.mxu0 0
  %3858 = vmatpush1.bf16.msra.mxu0 0
  %3859 = vmatprep.subr.bf16.mxu0 0
  %3860 = vmatpush1.bf16.msra.mxu0 0
  %3861 = vmatprep.subr.bf16.mxu0 0
  %3862 = vmatpush1.bf16.msra.mxu0 0
  %3863 = vmatprep.subr.bf16.mxu0 0
  %3864 = vmatpush1.bf16.msra.mxu0 0
  %3865 = vmatprep.subr.bf16.mxu0 0
  %3866 = vmatpush1.bf16.msra.mxu0 0
  %3867 = vmatprep.subr.bf16.mxu0 0
  %3868 = vmatpush1.bf16.msra.mxu0 0
  %3869 = vmatprep.subr.bf16.mxu0 0
  %3870 = vmatpush1.bf16.msra.mxu0 0
  %3871 = vmatprep.subr.bf16.mxu0 0
  %3872 = vmatpush1.bf16.msra.mxu0 0
  %3873 = vmatprep.subr.bf16.mxu0 0
  %3874 = vmatpush1.bf16.msra.mxu0 0
  %3875 = vmatprep.mubr.bf16.mxu0 0
  %3876 = vmatmul.mubr.bf16.gmra.mrb[0].mxu0 %v3732
  %v3877 = vpop.f32.mrb[0].mxu0
  %v3878 = vadd.f32 %v3565, %v3877
  %v3879 = vpop.f32.mrb[0].mxu0
  %v3880 = vadd.f32 %v3567, %v3879
  %v3881 = vpop.f32.mrb[0].mxu0
  %v3882 = vadd.f32 %v3569, %v3881
  %v3883 = vpop.f32.mrb[0].mxu0
  %v3884 = vadd.f32 %v3571, %v3883
  %3885 = vmatprep.mubr.bf16.mxu0 0
  %3886 = vmatmul.mubr.bf16.gmra.mrb[0].mxu0 %v3735
  %v3887 = vpop.f32.mrb[0].mxu0
  %v3888 = vadd.f32 %v3575, %v3887
  %v3889 = vpop.f32.mrb[0].mxu0
  %v3890 = vadd.f32 %v3577, %v3889
  %v3891 = vpop.f32.mrb[0].mxu0
  %v3892 = vadd.f32 %v3579, %v3891
  %v3893 = vpop.f32.mrb[0].mxu0
  %v3894 = vadd.f32 %v3581, %v3893
  %3895 = vdwg.mxu0
  %s3896 = scalar_lea.vmem %s11, 32
  %v3897 = vld [vmem:[%s3896] sm:$0xf]
  %v3898 = vld [vmem:[%s3896 + $0x4] sm:$0xf]
  %v3899 = vld [vmem:[%s3896 + $0x8] sm:$0xf]
  %v3900 = vld [vmem:[%s3896 + $0xc] sm:$0xf]
  %v3905 = vunpack.c.l.b16 %v3897
  %v3906 = vunpack.c.l.b16 %v3898
  %v3907 = vunpack.c.l.b16 %v3899
  %v3908 = vunpack.c.l.b16 %v3900
  %v3909 = vpack.c.b16 %v3906, %v3905
  %v3910 = vpack.c.b16 %v3908, %v3907
  %3911 = vrot.lane.b32.xlu0 %v3152, 111
  %v3912 = vpop.permute.xlu0 %3911
  %3913 = vrot.lane.b32.xlu0 %v3153, 111
  %v3914 = vpop.permute.xlu0 %3913
  %3915 = vrot.lane.b32.xlu0 %v3154, 111
  %v3916 = vpop.permute.xlu0 %3915
  %3917 = vrot.lane.b32.xlu0 %v3155, 111
  %v3918 = vpop.permute.xlu0 %3917
  %3919 = vrot.lane.b32.xlu0 %v3156, 111
  %v3920 = vpop.permute.xlu0 %3919
  %3921 = vrot.lane.b32.xlu0 %v3157, 111
  %v3922 = vpop.permute.xlu0 %3921
  %3923 = vrot.lane.b32.xlu0 %v3159, 111
  %v3924 = vpop.permute.xlu0 %3923
  %3925 = vrot.lane.b32.xlu0 %v3160, 111
  %v3926 = vpop.permute.xlu0 %3925
  %3927 = vrot.lane.b32.xlu0 %v3161, 111
  %v3928 = vpop.permute.xlu0 %3927
  %3929 = vrot.lane.b32.xlu0 %v3162, 111
  %v3930 = vpop.permute.xlu0 %3929
  %3931 = vrot.lane.b32.xlu0 %v3163, 111
  %v3932 = vpop.permute.xlu0 %3931
  %3933 = vrot.lane.b32.xlu0 %v3164, 111
  %v3934 = vpop.permute.xlu0 %3933
  %3935 = vrot.lane.b32.xlu0 %v3201, 111
  %v3936 = vpop.permute.xlu0 %3935
  %3937 = vrot.lane.b32.xlu0 %v3202, 111
  %v3938 = vpop.permute.xlu0 %3937
  %3939 = vrot.lane.b32.xlu0 %v3203, 111
  %v3940 = vpop.permute.xlu0 %3939
  %3941 = vrot.lane.b32.xlu0 %v3204, 111
  %v3942 = vpop.permute.xlu0 %3941
  %3943 = vrot.lane.b32.xlu0 %v3205, 111
  %v3944 = vpop.permute.xlu0 %3943
  %3945 = vrot.lane.b32.xlu0 %v3188, 111
  %v3946 = vpop.permute.xlu0 %3945
  %3947 = vrot.lane.b32.xlu0 %v3206, 111
  %v3948 = vpop.permute.xlu0 %3947
  %3949 = vrot.lane.b32.xlu0 %v3207, 111
  %v3950 = vpop.permute.xlu0 %3949
  %3951 = vrot.lane.b32.xlu0 %v3208, 111
  %v3952 = vpop.permute.xlu0 %3951
  %3953 = vrot.lane.b32.xlu0 %v3209, 111
  %v3954 = vpop.permute.xlu0 %3953
  %3955 = vrot.lane.b32.xlu0 %v3210, 111
  %v3956 = vpop.permute.xlu0 %3955
  %3957 = vrot.lane.b32.xlu0 %v3200, 111
  %v3958 = vpop.permute.xlu0 %3957
  %3959 = vrot.lane.b32.xlu0 %v3235, 111
  %v3960 = vpop.permute.xlu0 %3959
  %3961 = vrot.lane.b32.xlu0 %v3236, 111
  %v3962 = vpop.permute.xlu0 %3961
  %3963 = vrot.lane.b32.xlu0 %v3237, 111
  %v3964 = vpop.permute.xlu0 %3963
  %3965 = vrot.lane.b32.xlu0 %v3238, 111
  %v3966 = vpop.permute.xlu0 %3965
  %3967 = vrot.lane.b32.xlu0 %v3239, 111
  %v3968 = vpop.permute.xlu0 %3967
  %3969 = vrot.lane.b32.xlu0 %v3222, 111
  %v3970 = vpop.permute.xlu0 %3969
  %3971 = vrot.lane.b32.xlu0 %v3240, 111
  %v3972 = vpop.permute.xlu0 %3971
  %3973 = vrot.lane.b32.xlu0 %v3241, 111
  %v3974 = vpop.permute.xlu0 %3973
  %3975 = vrot.lane.b32.xlu0 %v3242, 111
  %v3976 = vpop.permute.xlu0 %3975
  %3977 = vrot.lane.b32.xlu0 %v3243, 111
  %v3978 = vpop.permute.xlu0 %3977
  %3979 = vrot.lane.b32.xlu0 %v3244, 111
  %v3980 = vpop.permute.xlu0 %3979
  %3981 = vrot.lane.b32.xlu0 %v3234, 111
  %v3982 = vpop.permute.xlu0 %3981
  %v3983 = vsel %vm792, %v3912, %v3914
  %v3984 = vsel %vm792, %v3914, %v3916
  %v3985 = vsel %vm792, %v3916, %v3918
  %v3986 = vsel %vm792, %v3918, %v3920
  %v3987 = vsel %vm792, %v3920, %v3922
  %v3988 = vsel %vm792, %v3924, %v3926
  %v3989 = vsel %vm792, %v3926, %v3928
  %v3990 = vsel %vm792, %v3928, %v3930
  %v3991 = vsel %vm792, %v3930, %v3932
  %v3992 = vsel %vm792, %v3932, %v3934
  %v3993 = vsel %vm792, %v3936, %v3938
  %v3994 = vsel %vm792, %v3938, %v3940
  %v3995 = vsel %vm792, %v3940, %v3942
  %v3996 = vsel %vm792, %v3942, %v3944
  %v3997 = vsel %vm792, %v3944, %v3946
  %v3998 = vsel %vm792, %v3948, %v3950
  %v3999 = vsel %vm792, %v3950, %v3952
  %v4000 = vsel %vm792, %v3952, %v3954
  %v4001 = vsel %vm792, %v3954, %v3956
  %v4002 = vsel %vm792, %v3956, %v3958
  %v4003 = vsel %vm792, %v3960, %v3962
  %v4004 = vsel %vm792, %v3962, %v3964
  %v4005 = vsel %vm792, %v3964, %v3966
  %v4006 = vsel %vm792, %v3966, %v3968
  %v4007 = vsel %vm792, %v3968, %v3970
  %v4008 = vsel %vm792, %v3972, %v3974
  %v4009 = vsel %vm792, %v3974, %v3976
  %v4010 = vsel %vm792, %v3976, %v3978
  %v4011 = vsel %vm792, %v3978, %v3980
  %v4012 = vsel %vm792, %v3980, %v3982
  %v4050 = vsel %vm1822, %v3909, 0
  %v4053 = vsel %vm1822, %v3910, 0
  %4055 = vmatprep.subr.bf16.mxu0 %v3984
  %4056 = vmatpush1.bf16.msra.mxu0 %v3983
  %4057 = vmatprep.subr.bf16.mxu0 %v3989
  %4058 = vmatpush1.bf16.msra.mxu0 %v3988
  %4059 = vmatprep.subr.bf16.mxu0 %v3994
  %4060 = vmatpush1.bf16.msra.mxu0 %v3993
  %4061 = vmatprep.subr.bf16.mxu0 %v3999
  %4062 = vmatpush1.bf16.msra.mxu0 %v3998
  %4063 = vmatprep.subr.bf16.mxu0 %v4004
  %4064 = vmatpush1.bf16.msra.mxu0 %v4003
  %4065 = vmatprep.subr.bf16.mxu0 %v4009
  %4066 = vmatpush1.bf16.msra.mxu0 %v4008
  %4067 = vmatprep.subr.bf16.mxu0 0
  %4068 = vmatpush1.bf16.msra.mxu0 0
  %4069 = vmatprep.subr.bf16.mxu0 0
  %4070 = vmatpush1.bf16.msra.mxu0 0
  %4071 = vmatprep.subr.bf16.mxu0 0
  %4072 = vmatpush1.bf16.msra.mxu0 0
  %4073 = vmatprep.subr.bf16.mxu0 0
  %4074 = vmatpush1.bf16.msra.mxu0 0
  %4075 = vmatprep.subr.bf16.mxu0 0
  %4076 = vmatpush1.bf16.msra.mxu0 0
  %4077 = vmatprep.subr.bf16.mxu0 0
  %4078 = vmatpush1.bf16.msra.mxu0 0
  %4079 = vmatprep.subr.bf16.mxu0 0
  %4080 = vmatpush1.bf16.msra.mxu0 0
  %4081 = vmatprep.subr.bf16.mxu0 0
  %4082 = vmatpush1.bf16.msra.mxu0 0
  %4083 = vmatprep.subr.bf16.mxu0 0
  %4084 = vmatpush1.bf16.msra.mxu0 0
  %4085 = vmatprep.subr.bf16.mxu0 0
  %4086 = vmatpush1.bf16.msra.mxu0 0
  %4087 = vmatprep.mubr.bf16.mxu0 0
  %4088 = vmatmul.mubr.bf16.gmra.mrb[0].mxu0 %v4050
  %v4089 = vpop.f32.mrb[0].mxu0
  %v4090 = vadd.f32 0.0, %v4089
  %v4091 = vpop.f32.mrb[0].mxu0
  %v4092 = vadd.f32 0.0, %v4091
  %v4093 = vpop.f32.mrb[0].mxu0
  %v4094 = vadd.f32 0.0, %v4093
  %v4095 = vpop.f32.mrb[0].mxu0
  %v4096 = vadd.f32 0.0, %v4095
  %4097 = vmatprep.mubr.bf16.mxu0 0
  %4098 = vmatmul.mubr.bf16.gmra.mrb[0].mxu0 %v4053
  %v4099 = vpop.f32.mrb[0].mxu0
  %v4100 = vadd.f32 0.0, %v4099
  %v4101 = vpop.f32.mrb[0].mxu0
  %v4102 = vadd.f32 0.0, %v4101
  %v4103 = vpop.f32.mrb[0].mxu0
  %v4104 = vadd.f32 0.0, %v4103
  %v4105 = vpop.f32.mrb[0].mxu0
  %v4106 = vadd.f32 0.0, %v4105
  %4107 = vdwg.mxu0
  %4108 = vmatprep.subr.bf16.mxu0 %v3986
  %4109 = vmatpush1.bf16.msra.mxu0 %v3985
  %4110 = vmatprep.subr.bf16.mxu0 %v3991
  %4111 = vmatpush1.bf16.msra.mxu0 %v3990
  %4112 = vmatprep.subr.bf16.mxu0 %v3996
  %4113 = vmatpush1.bf16.msra.mxu0 %v3995
  %4114 = vmatprep.subr.bf16.mxu0 %v4001
  %4115 = vmatpush1.bf16.msra.mxu0 %v4000
  %4116 = vmatprep.subr.bf16.mxu0 %v4006
  %4117 = vmatpush1.bf16.msra.mxu0 %v4005
  %4118 = vmatprep.subr.bf16.mxu0 %v4011
  %4119 = vmatpush1.bf16.msra.mxu0 %v4010
  %4120 = vmatprep.subr.bf16.mxu0 0
  %4121 = vmatpush1.bf16.msra.mxu0 0
  %4122 = vmatprep.subr.bf16.mxu0 0
  %4123 = vmatpush1.bf16.msra.mxu0 0
  %4124 = vmatprep.subr.bf16.mxu0 0
  %4125 = vmatpush1.bf16.msra.mxu0 0
  %4126 = vmatprep.subr.bf16.mxu0 0
  %4127 = vmatpush1.bf16.msra.mxu0 0
  %4128 = vmatprep.subr.bf16.mxu0 0
  %4129 = vmatpush1.bf16.msra.mxu0 0
  %4130 = vmatprep.subr.bf16.mxu0 0
  %4131 = vmatpush1.bf16.msra.mxu0 0
  %4132 = vmatprep.subr.bf16.mxu0 0
  %4133 = vmatpush1.bf16.msra.mxu0 0
  %4134 = vmatprep.subr.bf16.mxu0 0
  %4135 = vmatpush1.bf16.msra.mxu0 0
  %4136 = vmatprep.subr.bf16.mxu0 0
  %4137 = vmatpush1.bf16.msra.mxu0 0
  %4138 = vmatprep.subr.bf16.mxu0 0
  %4139 = vmatpush1.bf16.msra.mxu0 0
  %4140 = vmatprep.mubr.bf16.mxu0 0
  %4141 = vmatmul.mubr.bf16.gmra.mrb[0].mxu0 %v4050
  %v4142 = vpop.f32.mrb[0].mxu0
  %v4143 = vadd.f32 0.0, %v4142
  %v4144 = vpop.f32.mrb[0].mxu0
  %v4145 = vadd.f32 0.0, %v4144
  %v4146 = vpop.f32.mrb[0].mxu0
  %v4147 = vadd.f32 0.0, %v4146
  %v4148 = vpop.f32.mrb[0].mxu0
  %v4149 = vadd.f32 0.0, %v4148
  %4150 = vmatprep.mubr.bf16.mxu0 0
  %4151 = vmatmul.mubr.bf16.gmra.mrb[0].mxu0 %v4053
  %v4152 = vpop.f32.mrb[0].mxu0
  %v4153 = vadd.f32 0.0, %v4152
  %v4154 = vpop.f32.mrb[0].mxu0
  %v4155 = vadd.f32 0.0, %v4154
  %v4156 = vpop.f32.mrb[0].mxu0
  %v4157 = vadd.f32 0.0, %v4156
  %v4158 = vpop.f32.mrb[0].mxu0
  %v4159 = vadd.f32 0.0, %v4158
  %4160 = vdwg.mxu0
  %4161 = vmatprep.subr.bf16.mxu0 %v3922
  %4162 = vmatpush1.bf16.msra.mxu0 %v3987
  %4163 = vmatprep.subr.bf16.mxu0 %v3934
  %4164 = vmatpush1.bf16.msra.mxu0 %v3992
  %4165 = vmatprep.subr.bf16.mxu0 %v3946
  %4166 = vmatpush1.bf16.msra.mxu0 %v3997
  %4167 = vmatprep.subr.bf16.mxu0 %v3958
  %4168 = vmatpush1.bf16.msra.mxu0 %v4002
  %4169 = vmatprep.subr.bf16.mxu0 %v3970
  %4170 = vmatpush1.bf16.msra.mxu0 %v4007
  %4171 = vmatprep.subr.bf16.mxu0 %v3982
  %4172 = vmatpush1.bf16.msra.mxu0 %v4012
  %4173 = vmatprep.subr.bf16.mxu0 0
  %4174 = vmatpush1.bf16.msra.mxu0 0
  %4175 = vmatprep.subr.bf16.mxu0 0
  %4176 = vmatpush1.bf16.msra.mxu0 0
  %4177 = vmatprep.subr.bf16.mxu0 0
  %4178 = vmatpush1.bf16.msra.mxu0 0
  %4179 = vmatprep.subr.bf16.mxu0 0
  %4180 = vmatpush1.bf16.msra.mxu0 0
  %4181 = vmatprep.subr.bf16.mxu0 0
  %4182 = vmatpush1.bf16.msra.mxu0 0
  %4183 = vmatprep.subr.bf16.mxu0 0
  %4184 = vmatpush1.bf16.msra.mxu0 0
  %4185 = vmatprep.subr.bf16.mxu0 0
  %4186 = vmatpush1.bf16.msra.mxu0 0
  %4187 = vmatprep.subr.bf16.mxu0 0
  %4188 = vmatpush1.bf16.msra.mxu0 0
  %4189 = vmatprep.subr.bf16.mxu0 0
  %4190 = vmatpush1.bf16.msra.mxu0 0
  %4191 = vmatprep.subr.bf16.mxu0 0
  %4192 = vmatpush1.bf16.msra.mxu0 0
  %4193 = vmatprep.mubr.bf16.mxu0 0
  %4194 = vmatmul.mubr.bf16.gmra.mrb[0].mxu0 %v4050
  %v4195 = vpop.f32.mrb[0].mxu0
  %v4196 = vadd.f32 0.0, %v4195
  %v4197 = vpop.f32.mrb[0].mxu0
  %v4198 = vadd.f32 0.0, %v4197
  %v4199 = vpop.f32.mrb[0].mxu0
  %v4200 = vadd.f32 0.0, %v4199
  %v4201 = vpop.f32.mrb[0].mxu0
  %v4202 = vadd.f32 0.0, %v4201
  %4203 = vmatprep.mubr.bf16.mxu0 0
  %4204 = vmatmul.mubr.bf16.gmra.mrb[0].mxu0 %v4053
  %v4205 = vpop.f32.mrb[0].mxu0
  %v4206 = vadd.f32 0.0, %v4205
  %v4207 = vpop.f32.mrb[0].mxu0
  %v4208 = vadd.f32 0.0, %v4207
  %v4209 = vpop.f32.mrb[0].mxu0
  %v4210 = vadd.f32 0.0, %v4209
  %v4211 = vpop.f32.mrb[0].mxu0
  %v4212 = vadd.f32 0.0, %v4211
  %4213 = vdwg.mxu0
  %v4214 = vadd.f32 %v3772, %v4090
  %v4215 = vadd.f32 %v3774, %v4092
  %v4216 = vadd.f32 %v3825, %v4143
  %v4217 = vadd.f32 %v3827, %v4145
  %v4218 = vadd.f32 %v3878, %v4196
  %v4219 = vadd.f32 %v3880, %v4198
  %v4220 = vadd.f32 %v3776, %v4094
  %v4221 = vadd.f32 %v3778, %v4096
  %v4222 = vadd.f32 %v3829, %v4147
  %v4223 = vadd.f32 %v3831, %v4149
  %v4224 = vadd.f32 %v3882, %v4200
  %v4225 = vadd.f32 %v3884, %v4202
  %v4226 = vadd.f32 %v3782, %v4100
  %v4227 = vadd.f32 %v3784, %v4102
  %v4228 = vadd.f32 %v3835, %v4153
  %v4229 = vadd.f32 %v3837, %v4155
  %v4230 = vadd.f32 %v3888, %v4206
  %v4231 = vadd.f32 %v3890, %v4208
  %v4232 = vadd.f32 %v3786, %v4104
  %v4233 = vadd.f32 %v3788, %v4106
  %v4234 = vadd.f32 %v3839, %v4157
  %v4235 = vadd.f32 %v3841, %v4159
  %v4236 = vadd.f32 %v3892, %v4210
  %v4237 = vadd.f32 %v3894, %v4212
  %v4238 = vld [vmem:[%s12] sm:$0xff]
  %v4239 = vld [vmem:[%s12 + $0x8] sm:$0xff]
  %v4240 = vld [vmem:[%s12 + $0x10] sm:$0xff]
  %v4241 = vld [vmem:[%s12 + $0x18] sm:$0xff]
  %4243 = vset.pattern.permute.xlu0 0
  %4244 = vperm.xlu0 %4243, %v4238
  %v4245 = vpop.permute.xlu0 %4244
  %4248 = vset.pattern.permute.xlu0 0
  %4249 = vperm.xlu0 %4248, %v4239
  %v4250 = vpop.permute.xlu0 %4249
  %4253 = vset.pattern.permute.xlu0 0
  %4254 = vperm.xlu0 %4253, %v4240
  %v4255 = vpop.permute.xlu0 %4254
  %4258 = vset.pattern.permute.xlu0 0
  %4259 = vperm.xlu0 %4258, %v4241
  %v4260 = vpop.permute.xlu0 %4259
  %v4262 = vadd.f32 %v4214, %v4245
  %v4263 = vadd.f32 %v4215, %v4245
  %v4264 = vadd.f32 %v4216, %v4245
  %v4265 = vadd.f32 %v4217, %v4245
  %v4266 = vadd.f32 %v4218, %v4245
  %v4267 = vadd.f32 %v4219, %v4245
  %v4268 = vadd.f32 %v4220, %v4250
  %v4269 = vadd.f32 %v4221, %v4250
  %v4270 = vadd.f32 %v4222, %v4250
  %v4271 = vadd.f32 %v4223, %v4250
  %v4272 = vadd.f32 %v4224, %v4250
  %v4273 = vadd.f32 %v4225, %v4250
  %v4274 = vadd.f32 %v4226, %v4255
  %v4275 = vadd.f32 %v4227, %v4255
  %v4276 = vadd.f32 %v4228, %v4255
  %v4277 = vadd.f32 %v4229, %v4255
  %v4278 = vadd.f32 %v4230, %v4255
  %v4279 = vadd.f32 %v4231, %v4255
  %v4280 = vadd.f32 %v4232, %v4260
  %v4281 = vadd.f32 %v4233, %v4260
  %v4282 = vadd.f32 %v4234, %v4260
  %v4283 = vadd.f32 %v4235, %v4260
  %v4284 = vadd.f32 %v4236, %v4260
  %v4285 = vadd.f32 %v4237, %v4260
  %vm4286 = vcmp.ge.f32.partialorder %v4262, 0.0
  %vm4287 = vcmp.ge.f32.partialorder %v4263, 0.0
  %vm4288 = vcmp.ge.f32.partialorder %v4264, 0.0
  %vm4289 = vcmp.ge.f32.partialorder %v4265, 0.0
  %vm4290 = vcmp.ge.f32.partialorder %v4266, 0.0
  %vm4291 = vcmp.ge.f32.partialorder %v4267, 0.0
  %vm4292 = vcmp.ge.f32.partialorder %v4268, 0.0
  %vm4293 = vcmp.ge.f32.partialorder %v4269, 0.0
  %vm4294 = vcmp.ge.f32.partialorder %v4270, 0.0
  %vm4295 = vcmp.ge.f32.partialorder %v4271, 0.0
  %vm4296 = vcmp.ge.f32.partialorder %v4272, 0.0
  %vm4297 = vcmp.ge.f32.partialorder %v4273, 0.0
  %vm4298 = vcmp.ge.f32.partialorder %v4274, 0.0
  %vm4299 = vcmp.ge.f32.partialorder %v4275, 0.0
  %vm4300 = vcmp.ge.f32.partialorder %v4276, 0.0
  %vm4301 = vcmp.ge.f32.partialorder %v4277, 0.0
  %vm4302 = vcmp.ge.f32.partialorder %v4278, 0.0
  %vm4303 = vcmp.ge.f32.partialorder %v4279, 0.0
  %vm4304 = vcmp.ge.f32.partialorder %v4280, 0.0
  %vm4305 = vcmp.ge.f32.partialorder %v4281, 0.0
  %vm4306 = vcmp.ge.f32.partialorder %v4282, 0.0
  %vm4307 = vcmp.ge.f32.partialorder %v4283, 0.0
  %vm4308 = vcmp.ge.f32.partialorder %v4284, 0.0
  %vm4309 = vcmp.ge.f32.partialorder %v4285, 0.0
  %v4310 = vmul.f32 %v4262, 0.01
  %v4311 = vmul.f32 %v4263, 0.01
  %v4312 = vmul.f32 %v4264, 0.01
  %v4313 = vmul.f32 %v4265, 0.01
  %v4314 = vmul.f32 %v4266, 0.01
  %v4315 = vmul.f32 %v4267, 0.01
  %v4316 = vmul.f32 %v4268, 0.01
  %v4317 = vmul.f32 %v4269, 0.01
  %v4318 = vmul.f32 %v4270, 0.01
  %v4319 = vmul.f32 %v4271, 0.01
  %v4320 = vmul.f32 %v4272, 0.01
  %v4321 = vmul.f32 %v4273, 0.01
  %v4322 = vmul.f32 %v4274, 0.01
  %v4323 = vmul.f32 %v4275, 0.01
  %v4324 = vmul.f32 %v4276, 0.01
  %v4325 = vmul.f32 %v4277, 0.01
  %v4326 = vmul.f32 %v4278, 0.01
  %v4327 = vmul.f32 %v4279, 0.01
  %v4328 = vmul.f32 %v4280, 0.01
  %v4329 = vmul.f32 %v4281, 0.01
  %v4330 = vmul.f32 %v4282, 0.01
  %v4331 = vmul.f32 %v4283, 0.01
  %v4332 = vmul.f32 %v4284, 0.01
  %v4333 = vmul.f32 %v4285, 0.01
  %v4334 = vsel %vm4286, %v4262, %v4310
  %v4335 = vsel %vm4287, %v4263, %v4311
  %v4336 = vsel %vm4288, %v4264, %v4312
  %v4337 = vsel %vm4289, %v4265, %v4313
  %v4338 = vsel %vm4290, %v4266, %v4314
  %v4339 = vsel %vm4291, %v4267, %v4315
  %v4340 = vsel %vm4292, %v4268, %v4316
  %v4341 = vsel %vm4293, %v4269, %v4317
  %v4342 = vsel %vm4294, %v4270, %v4318
  %v4343 = vsel %vm4295, %v4271, %v4319
  %v4344 = vsel %vm4296, %v4272, %v4320
  %v4345 = vsel %vm4297, %v4273, %v4321
  %v4346 = vsel %vm4298, %v4274, %v4322
  %v4347 = vsel %vm4299, %v4275, %v4323
  %v4348 = vsel %vm4300, %v4276, %v4324
  %v4349 = vsel %vm4301, %v4277, %v4325
  %v4350 = vsel %vm4302, %v4278, %v4326
  %v4351 = vsel %vm4303, %v4279, %v4327
  %v4352 = vsel %vm4304, %v4280, %v4328
  %v4353 = vsel %vm4305, %v4281, %v4329
  %v4354 = vsel %vm4306, %v4282, %v4330
  %v4355 = vsel %vm4307, %v4283, %v4331
  %v4356 = vsel %vm4308, %v4284, %v4332
  %v4357 = vsel %vm4309, %v4285, %v4333
  %v4358 = vmul.f32 %v4334, %v1139
  %v4359 = vmul.f32 %v4335, %v1143
  %v4360 = vmul.f32 %v4336, %v1147
  %v4361 = vmul.f32 %v4337, %v1151
  %v4362 = vmul.f32 %v4338, %v1155
  %v4363 = vmul.f32 %v4339, %v1159
  %v4364 = vmul.f32 %v4340, %v1139
  %v4365 = vmul.f32 %v4341, %v1143
  %v4366 = vmul.f32 %v4342, %v1147
  %v4367 = vmul.f32 %v4343, %v1151
  %v4368 = vmul.f32 %v4344, %v1155
  %v4369 = vmul.f32 %v4345, %v1159
  %v4370 = vmul.f32 %v4346, %v1139
  %v4371 = vmul.f32 %v4347, %v1143
  %v4372 = vmul.f32 %v4348, %v1147
  %v4373 = vmul.f32 %v4349, %v1151
  %v4374 = vmul.f32 %v4350, %v1155
  %v4375 = vmul.f32 %v4351, %v1159
  %v4376 = vmul.f32 %v4352, %v1139
  %v4377 = vmul.f32 %v4353, %v1143
  %v4378 = vmul.f32 %v4354, %v1147
  %v4379 = vmul.f32 %v4355, %v1151
  %v4380 = vmul.f32 %v4356, %v1155
  %v4381 = vmul.f32 %v4357, %v1159
  %v4382 = vadd.f32 %v4358, %v4359
  %v4383 = vadd.f32 %v4382, %v4360
  %v4384 = vadd.f32 %v4383, %v4361
  %v4385 = vadd.f32 %v4384, %v4362
  %v4386 = vsel %vm1194, %v4363, 0.0
  %v4387 = vadd.f32 %v4385, %v4386
  %4388 = vadd.xlane.f32.xlu0 %v4387
  %v4389 = vpop.xlane.xlu0 %4388
  %v4390 = vadd.f32 %v4364, %v4365
  %v4391 = vadd.f32 %v4390, %v4366
  %v4392 = vadd.f32 %v4391, %v4367
  %v4393 = vadd.f32 %v4392, %v4368
  %v4394 = vsel %vm1194, %v4369, 0.0
  %v4395 = vadd.f32 %v4393, %v4394
  %4396 = vadd.xlane.f32.xlu0 %v4395
  %v4397 = vpop.xlane.xlu0 %4396
  %v4398 = vadd.f32 %v4370, %v4371
  %v4399 = vadd.f32 %v4398, %v4372
  %v4400 = vadd.f32 %v4399, %v4373
  %v4401 = vadd.f32 %v4400, %v4374
  %v4402 = vsel %vm1194, %v4375, 0.0
  %v4403 = vadd.f32 %v4401, %v4402
  %4404 = vadd.xlane.f32.xlu0 %v4403
  %v4405 = vpop.xlane.xlu0 %4404
  %v4406 = vadd.f32 %v4376, %v4377
  %v4407 = vadd.f32 %v4406, %v4378
  %v4408 = vadd.f32 %v4407, %v4379
  %v4409 = vadd.f32 %v4408, %v4380
  %v4410 = vsel %vm1194, %v4381, 0.0
  %v4411 = vadd.f32 %v4409, %v4410
  %4412 = vadd.xlane.f32.xlu0 %v4411
  %v4413 = vpop.xlane.xlu0 %4412
  %v4414 = vmul.f32 %v4389, 0.001953125
  %v4415 = vmul.f32 %v4397, 0.001953125
  %v4416 = vmul.f32 %v4405, 0.001953125
  %v4417 = vmul.f32 %v4413, 0.001953125
  %v4418 = vmul.f32 %v4358, %v4358
  %v4419 = vmul.f32 %v4359, %v4359
  %v4420 = vmul.f32 %v4360, %v4360
  %v4421 = vmul.f32 %v4361, %v4361
  %v4422 = vmul.f32 %v4362, %v4362
  %v4423 = vmul.f32 %v4363, %v4363
  %v4424 = vmul.f32 %v4364, %v4364
  %v4425 = vmul.f32 %v4365, %v4365
  %v4426 = vmul.f32 %v4366, %v4366
  %v4427 = vmul.f32 %v4367, %v4367
  %v4428 = vmul.f32 %v4368, %v4368
  %v4429 = vmul.f32 %v4369, %v4369
  %v4430 = vmul.f32 %v4370, %v4370
  %v4431 = vmul.f32 %v4371, %v4371
  %v4432 = vmul.f32 %v4372, %v4372
  %v4433 = vmul.f32 %v4373, %v4373
  %v4434 = vmul.f32 %v4374, %v4374
  %v4435 = vmul.f32 %v4375, %v4375
  %v4436 = vmul.f32 %v4376, %v4376
  %v4437 = vmul.f32 %v4377, %v4377
  %v4438 = vmul.f32 %v4378, %v4378
  %v4439 = vmul.f32 %v4379, %v4379
  %v4440 = vmul.f32 %v4380, %v4380
  %v4441 = vmul.f32 %v4381, %v4381
  %v4442 = vadd.f32 %v4418, %v4419
  %v4443 = vadd.f32 %v4442, %v4420
  %v4444 = vadd.f32 %v4443, %v4421
  %v4445 = vadd.f32 %v4444, %v4422
  %v4446 = vsel %vm1194, %v4423, 0.0
  %v4447 = vadd.f32 %v4445, %v4446
  %4448 = vadd.xlane.f32.xlu0 %v4447
  %v4449 = vpop.xlane.xlu0 %4448
  %v4450 = vadd.f32 %v4424, %v4425
  %v4451 = vadd.f32 %v4450, %v4426
  %v4452 = vadd.f32 %v4451, %v4427
  %v4453 = vadd.f32 %v4452, %v4428
  %v4454 = vsel %vm1194, %v4429, 0.0
  %v4455 = vadd.f32 %v4453, %v4454
  %4456 = vadd.xlane.f32.xlu0 %v4455
  %v4457 = vpop.xlane.xlu0 %4456
  %v4458 = vadd.f32 %v4430, %v4431
  %v4459 = vadd.f32 %v4458, %v4432
  %v4460 = vadd.f32 %v4459, %v4433
  %v4461 = vadd.f32 %v4460, %v4434
  %v4462 = vsel %vm1194, %v4435, 0.0
  %v4463 = vadd.f32 %v4461, %v4462
  %4464 = vadd.xlane.f32.xlu0 %v4463
  %v4465 = vpop.xlane.xlu0 %4464
  %v4466 = vadd.f32 %v4436, %v4437
  %v4467 = vadd.f32 %v4466, %v4438
  %v4468 = vadd.f32 %v4467, %v4439
  %v4469 = vadd.f32 %v4468, %v4440
  %v4470 = vsel %vm1194, %v4441, 0.0
  %v4471 = vadd.f32 %v4469, %v4470
  %4472 = vadd.xlane.f32.xlu0 %v4471
  %v4473 = vpop.xlane.xlu0 %4472
  %v4474 = vmul.f32 %v4449, 0.001953125
  %v4475 = vmul.f32 %v4457, 0.001953125
  %v4476 = vmul.f32 %v4465, 0.001953125
  %v4477 = vmul.f32 %v4473, 0.001953125
  %v4478 = vmul.f32 %v4414, %v4414
  %v4479 = vmul.f32 %v4415, %v4415
  %v4480 = vmul.f32 %v4416, %v4416
  %v4481 = vmul.f32 %v4417, %v4417
  %v4482 = vsub.f32 %v4474, %v4478
  %v4483 = vsub.f32 %v4475, %v4479
  %v4484 = vsub.f32 %v4476, %v4480
  %v4485 = vsub.f32 %v4477, %v4481
  %v4486 = vld [vmem:[%s13] sm:$0xff]
  %v4487 = vld [vmem:[%s13 + $0x8] sm:$0xff]
  %v4488 = vld [vmem:[%s13 + $0x10] sm:$0xff]
  %v4489 = vld [vmem:[%s13 + $0x18] sm:$0xff]
  %v4490 = vadd.f32 %v4482, 1e-05
  %v4491 = vadd.f32 %v4483, 1e-05
  %v4492 = vadd.f32 %v4484, 1e-05
  %v4493 = vadd.f32 %v4485, 1e-05
  %v4494 = vrsqrt.pop %v4490
  %v4495 = vrsqrt.pop %v4491
  %v4496 = vrsqrt.pop %v4492
  %v4497 = vrsqrt.pop %v4493
  %v4498 = vmul.f32 %v4486, %v4494
  %v4499 = vmul.f32 %v4487, %v4495
  %v4500 = vmul.f32 %v4488, %v4496
  %v4501 = vmul.f32 %v4489, %v4497
  %v4502 = vld [vmem:[%s14] sm:$0xff]
  %v4503 = vld [vmem:[%s14 + $0x8] sm:$0xff]
  %v4504 = vld [vmem:[%s14 + $0x10] sm:$0xff]
  %v4505 = vld [vmem:[%s14 + $0x18] sm:$0xff]
  %v4506 = vmul.f32 %v4414, %v4498
  %v4507 = vmul.f32 %v4415, %v4499
  %v4508 = vmul.f32 %v4416, %v4500
  %v4509 = vmul.f32 %v4417, %v4501
  %v4510 = vsub.f32 %v4502, %v4506
  %v4511 = vsub.f32 %v4503, %v4507
  %v4512 = vsub.f32 %v4504, %v4508
  %v4513 = vsub.f32 %v4505, %v4509
  %4515 = vset.pattern.permute.xlu0 0
  %4516 = vperm.xlu0 %4515, %v4498
  %v4517 = vpop.permute.xlu0 %4516
  %4520 = vset.pattern.permute.xlu0 0
  %4521 = vperm.xlu0 %4520, %v4499
  %v4522 = vpop.permute.xlu0 %4521
  %4525 = vset.pattern.permute.xlu0 0
  %4526 = vperm.xlu0 %4525, %v4500
  %v4527 = vpop.permute.xlu0 %4526
  %4530 = vset.pattern.permute.xlu0 0
  %4531 = vperm.xlu0 %4530, %v4501
  %v4532 = vpop.permute.xlu0 %4531
  %v4534 = vmul.f32 %v4358, %v4517
  %v4535 = vmul.f32 %v4359, %v4517
  %v4536 = vmul.f32 %v4360, %v4517
  %v4537 = vmul.f32 %v4361, %v4517
  %v4538 = vmul.f32 %v4362, %v4517
  %v4539 = vmul.f32 %v4363, %v4517
  %v4540 = vmul.f32 %v4364, %v4522
  %v4541 = vmul.f32 %v4365, %v4522
  %v4542 = vmul.f32 %v4366, %v4522
  %v4543 = vmul.f32 %v4367, %v4522
  %v4544 = vmul.f32 %v4368, %v4522
  %v4545 = vmul.f32 %v4369, %v4522
  %v4546 = vmul.f32 %v4370, %v4527
  %v4547 = vmul.f32 %v4371, %v4527
  %v4548 = vmul.f32 %v4372, %v4527
  %v4549 = vmul.f32 %v4373, %v4527
  %v4550 = vmul.f32 %v4374, %v4527
  %v4551 = vmul.f32 %v4375, %v4527
  %v4552 = vmul.f32 %v4376, %v4532
  %v4553 = vmul.f32 %v4377, %v4532
  %v4554 = vmul.f32 %v4378, %v4532
  %v4555 = vmul.f32 %v4379, %v4532
  %v4556 = vmul.f32 %v4380, %v4532
  %v4557 = vmul.f32 %v4381, %v4532
  %4559 = vset.pattern.permute.xlu0 0
  %4560 = vperm.xlu0 %4559, %v4510
  %v4561 = vpop.permute.xlu0 %4560
  %4564 = vset.pattern.permute.xlu0 0
  %4565 = vperm.xlu0 %4564, %v4511
  %v4566 = vpop.permute.xlu0 %4565
  %4569 = vset.pattern.permute.xlu0 0
  %4570 = vperm.xlu0 %4569, %v4512
  %v4571 = vpop.permute.xlu0 %4570
  %4574 = vset.pattern.permute.xlu0 0
  %4575 = vperm.xlu0 %4574, %v4513
  %v4576 = vpop.permute.xlu0 %4575
  %v4578 = vmul.f32 %v4561, %v1139
  %v4579 = vmul.f32 %v4561, %v1143
  %v4580 = vmul.f32 %v4561, %v1147
  %v4581 = vmul.f32 %v4561, %v1151
  %v4582 = vmul.f32 %v4561, %v1155
  %v4583 = vmul.f32 %v4561, %v1159
  %v4584 = vmul.f32 %v4566, %v1139
  %v4585 = vmul.f32 %v4566, %v1143
  %v4586 = vmul.f32 %v4566, %v1147
  %v4587 = vmul.f32 %v4566, %v1151
  %v4588 = vmul.f32 %v4566, %v1155
  %v4589 = vmul.f32 %v4566, %v1159
  %v4590 = vmul.f32 %v4571, %v1139
  %v4591 = vmul.f32 %v4571, %v1143
  %v4592 = vmul.f32 %v4571, %v1147
  %v4593 = vmul.f32 %v4571, %v1151
  %v4594 = vmul.f32 %v4571, %v1155
  %v4595 = vmul.f32 %v4571, %v1159
  %v4596 = vmul.f32 %v4576, %v1139
  %v4597 = vmul.f32 %v4576, %v1143
  %v4598 = vmul.f32 %v4576, %v1147
  %v4599 = vmul.f32 %v4576, %v1151
  %v4600 = vmul.f32 %v4576, %v1155
  %v4601 = vmul.f32 %v4576, %v1159
  %v4602 = vadd.f32 %v4534, %v4578
  %v4603 = vadd.f32 %v4535, %v4579
  %v4604 = vadd.f32 %v4536, %v4580
  %v4605 = vadd.f32 %v4537, %v4581
  %v4606 = vadd.f32 %v4538, %v4582
  %v4607 = vadd.f32 %v4539, %v4583
  %v4608 = vadd.f32 %v4540, %v4584
  %v4609 = vadd.f32 %v4541, %v4585
  %v4610 = vadd.f32 %v4542, %v4586
  %v4611 = vadd.f32 %v4543, %v4587
  %v4612 = vadd.f32 %v4544, %v4588
  %v4613 = vadd.f32 %v4545, %v4589
  %v4614 = vadd.f32 %v4546, %v4590
  %v4615 = vadd.f32 %v4547, %v4591
  %v4616 = vadd.f32 %v4548, %v4592
  %v4617 = vadd.f32 %v4549, %v4593
  %v4618 = vadd.f32 %v4550, %v4594
  %v4619 = vadd.f32 %v4551, %v4595
  %v4620 = vadd.f32 %v4552, %v4596
  %v4621 = vadd.f32 %v4553, %v4597
  %v4622 = vadd.f32 %v4554, %v4598
  %v4623 = vadd.f32 %v4555, %v4599
  %v4624 = vadd.f32 %v4556, %v4600
  %v4625 = vadd.f32 %v4557, %v4601
  %v4626 = vpack.c.bf16 %v4608, %v4602
  %v4627 = vpack.c.bf16 %v4609, %v4603
  %v4628 = vpack.c.bf16 %v4610, %v4604
  %v4629 = vpack.c.bf16 %v4611, %v4605
  %v4630 = vpack.c.bf16 %v4612, %v4606
  %v4631 = vpack.c.bf16 %v4613, %v4607
  %v4632 = vpack.c.bf16 %v4620, %v4614
  %v4633 = vpack.c.bf16 %v4621, %v4615
  %v4634 = vpack.c.bf16 %v4622, %v4616
  %v4635 = vpack.c.bf16 %v4623, %v4617
  %v4636 = vpack.c.bf16 %v4624, %v4618
  %v4637 = vpack.c.bf16 %v4625, %v4619
  %4638 = vst [vmem:[#allocation2 + $0x8] sm:$0xff] %v4626
  %4639 = vst [vmem:[#allocation2 + $0x10] sm:$0xff] %v4627
  %4640 = vst [vmem:[#allocation2 + $0x18] sm:$0xff] %v4628
  %4641 = vst [vmem:[#allocation2 + $0x20] sm:$0xff] %v4629
  %4642 = vst [vmem:[#allocation2 + $0x28] sm:$0xff] %v4630
  %4643 = vst.msk [vmem:[#allocation2 + $0x30] sm:$0xff] %vm1194, %v4631
  %4644 = vst [vmem:[#allocation2 + $0x40] sm:$0xff] %v4632
  %4645 = vst [vmem:[#allocation2 + $0x48] sm:$0xff] %v4633
  %4646 = vst [vmem:[#allocation2 + $0x50] sm:$0xff] %v4634
  %4647 = vst [vmem:[#allocation2 + $0x58] sm:$0xff] %v4635
  %4648 = vst [vmem:[#allocation2 + $0x60] sm:$0xff] %v4636
  %4649 = vst.msk [vmem:[#allocation2 + $0x68] sm:$0xff] %vm1194, %v4637
  %v4650 = vld [vmem:[#allocation2] sm:$0xff]
  %v4651 = vld [vmem:[#allocation2 + $0x8] sm:$0xff]
  %v4652 = vld [vmem:[#allocation2 + $0x10] sm:$0xff]
  %v4653 = vld [vmem:[#allocation2 + $0x18] sm:$0xff]
  %v4654 = vld [vmem:[#allocation2 + $0x20] sm:$0xff]
  %v4655 = vld [vmem:[#allocation2 + $0x28] sm:$0xff]
  %v4656 = vld [vmem:[#allocation2 + $0x38] sm:$0xff]
  %v4657 = vld [vmem:[#allocation2 + $0x40] sm:$0xff]
  %v4658 = vld [vmem:[#allocation2 + $0x48] sm:$0xff]
  %v4659 = vld [vmem:[#allocation2 + $0x50] sm:$0xff]
  %v4660 = vld [vmem:[#allocation2 + $0x58] sm:$0xff]
  %v4661 = vld [vmem:[#allocation2 + $0x60] sm:$0xff]
  %4674 = vrot.lane.b32.xlu0 %v4650, 127
  %v4675 = vpop.permute.xlu0 %4674
  %4676 = vrot.lane.b32.xlu0 %v4651, 127
  %v4677 = vpop.permute.xlu0 %4676
  %4678 = vrot.lane.b32.xlu0 %v4652, 127
  %v4679 = vpop.permute.xlu0 %4678
  %4680 = vrot.lane.b32.xlu0 %v4653, 127
  %v4681 = vpop.permute.xlu0 %4680
  %4682 = vrot.lane.b32.xlu0 %v4654, 127
  %v4683 = vpop.permute.xlu0 %4682
  %4684 = vrot.lane.b32.xlu0 %v4655, 127
  %v4685 = vpop.permute.xlu0 %4684
  %4686 = vrot.lane.b32.xlu0 %v4656, 127
  %v4687 = vpop.permute.xlu0 %4686
  %4688 = vrot.lane.b32.xlu0 %v4657, 127
  %v4689 = vpop.permute.xlu0 %4688
  %4690 = vrot.lane.b32.xlu0 %v4658, 127
  %v4691 = vpop.permute.xlu0 %4690
  %4692 = vrot.lane.b32.xlu0 %v4659, 127
  %v4693 = vpop.permute.xlu0 %4692
  %4694 = vrot.lane.b32.xlu0 %v4660, 127
  %v4695 = vpop.permute.xlu0 %4694
  %4696 = vrot.lane.b32.xlu0 %v4661, 127
  %v4697 = vpop.permute.xlu0 %4696
  %v4698 = vsel %vm107, %v4675, %v4677
  %v4699 = vsel %vm107, %v4677, %v4679
  %v4700 = vsel %vm107, %v4679, %v4681
  %v4701 = vsel %vm107, %v4681, %v4683
  %v4702 = vsel %vm107, %v4683, %v4685
  %v4703 = vsel %vm107, %v4687, %v4689
  %v4704 = vsel %vm107, %v4689, %v4691
  %v4705 = vsel %vm107, %v4691, %v4693
  %v4706 = vsel %vm107, %v4693, %v4695
  %v4707 = vsel %vm107, %v4695, %v4697
  %4708 = vrot.lane.b32.xlu0 %v4650, 126
  %v4709 = vpop.permute.xlu0 %4708
  %4710 = vrot.lane.b32.xlu0 %v4651, 126
  %v4711 = vpop.permute.xlu0 %4710
  %4712 = vrot.lane.b32.xlu0 %v4652, 126
  %v4713 = vpop.permute.xlu0 %4712
  %4714 = vrot.lane.b32.xlu0 %v4653, 126
  %v4715 = vpop.permute.xlu0 %4714
  %4716 = vrot.lane.b32.xlu0 %v4654, 126
  %v4717 = vpop.permute.xlu0 %4716
  %4718 = vrot.lane.b32.xlu0 %v4655, 126
  %v4719 = vpop.permute.xlu0 %4718
  %4720 = vrot.lane.b32.xlu0 %v4656, 126
  %v4721 = vpop.permute.xlu0 %4720
  %4722 = vrot.lane.b32.xlu0 %v4657, 126
  %v4723 = vpop.permute.xlu0 %4722
  %4724 = vrot.lane.b32.xlu0 %v4658, 126
  %v4725 = vpop.permute.xlu0 %4724
  %4726 = vrot.lane.b32.xlu0 %v4659, 126
  %v4727 = vpop.permute.xlu0 %4726
  %4728 = vrot.lane.b32.xlu0 %v4660, 126
  %v4729 = vpop.permute.xlu0 %4728
  %4730 = vrot.lane.b32.xlu0 %v4661, 126
  %v4731 = vpop.permute.xlu0 %4730
  %v4732 = vsel %vm125, %v4709, %v4711
  %v4733 = vsel %vm125, %v4711, %v4713
  %v4734 = vsel %vm125, %v4713, %v4715
  %v4735 = vsel %vm125, %v4715, %v4717
  %v4736 = vsel %vm125, %v4717, %v4719
  %v4737 = vsel %vm125, %v4721, %v4723
  %v4738 = vsel %vm125, %v4723, %v4725
  %v4739 = vsel %vm125, %v4725, %v4727
  %v4740 = vsel %vm125, %v4727, %v4729
  %v4741 = vsel %vm125, %v4729, %v4731
  %v4742 = vld [vmem:[%s15] sm:$0x1]
  %v4743 = vld [vmem:[#allocation2] sm:$0xff]
  %v4744 = vld [vmem:[#allocation2 + $0x8] sm:$0xff]
  %v4745 = vld [vmem:[#allocation2 + $0x10] sm:$0xff]
  %v4746 = vld [vmem:[#allocation2 + $0x18] sm:$0xff]
  %v4747 = vld [vmem:[#allocation2 + $0x20] sm:$0xff]
  %v4748 = vld [vmem:[#allocation2 + $0x28] sm:$0xff]
  %v4749 = vld [vmem:[#allocation2 + $0x30] sm:$0xff]
  %v4750 = vld [vmem:[#allocation2 + $0x38] sm:$0xff]
  %v4751 = vld [vmem:[#allocation2 + $0x40] sm:$0xff]
  %v4752 = vld [vmem:[#allocation2 + $0x48] sm:$0xff]
  %v4753 = vld [vmem:[#allocation2 + $0x50] sm:$0xff]
  %v4754 = vld [vmem:[#allocation2 + $0x58] sm:$0xff]
  %v4755 = vld [vmem:[#allocation2 + $0x60] sm:$0xff]
  %v4756 = vld [vmem:[#allocation2 + $0x68] sm:$0xff]
  %4769 = vrot.lane.b32.xlu0 %v4744, 127
  %v4770 = vpop.permute.xlu0 %4769
  %4771 = vrot.lane.b32.xlu0 %v4745, 127
  %v4772 = vpop.permute.xlu0 %4771
  %4773 = vrot.lane.b32.xlu0 %v4746, 127
  %v4774 = vpop.permute.xlu0 %4773
  %4775 = vrot.lane.b32.xlu0 %v4747, 127
  %v4776 = vpop.permute.xlu0 %4775
  %4777 = vrot.lane.b32.xlu0 %v4748, 127
  %v4778 = vpop.permute.xlu0 %4777
  %4779 = vrot.lane.b32.xlu0 %v4749, 127
  %v4780 = vpop.permute.xlu0 %4779
  %4781 = vrot.lane.b32.xlu0 %v4751, 127
  %v4782 = vpop.permute.xlu0 %4781
  %4783 = vrot.lane.b32.xlu0 %v4752, 127
  %v4784 = vpop.permute.xlu0 %4783
  %4785 = vrot.lane.b32.xlu0 %v4753, 127
  %v4786 = vpop.permute.xlu0 %4785
  %4787 = vrot.lane.b32.xlu0 %v4754, 127
  %v4788 = vpop.permute.xlu0 %4787
  %4789 = vrot.lane.b32.xlu0 %v4755, 127
  %v4790 = vpop.permute.xlu0 %4789
  %4791 = vrot.lane.b32.xlu0 %v4756, 127
  %v4792 = vpop.permute.xlu0 %4791
  %v4793 = vsel %vm107, %v4770, %v4772
  %v4794 = vsel %vm107, %v4772, %v4774
  %v4795 = vsel %vm107, %v4774, %v4776
  %v4796 = vsel %vm107, %v4776, %v4778
  %v4797 = vsel %vm107, %v4778, %v4780
  %v4798 = vsel %vm107, %v4782, %v4784
  %v4799 = vsel %vm107, %v4784, %v4786
  %v4800 = vsel %vm107, %v4786, %v4788
  %v4801 = vsel %vm107, %v4788, %v4790
  %v4802 = vsel %vm107, %v4790, %v4792
  %4803 = vrot.lane.b32.xlu0 %v4744, 126
  %v4804 = vpop.permute.xlu0 %4803
  %4805 = vrot.lane.b32.xlu0 %v4745, 126
  %v4806 = vpop.permute.xlu0 %4805
  %4807 = vrot.lane.b32.xlu0 %v4746, 126
  %v4808 = vpop.permute.xlu0 %4807
  %4809 = vrot.lane.b32.xlu0 %v4747, 126
  %v4810 = vpop.permute.xlu0 %4809
  %4811 = vrot.lane.b32.xlu0 %v4748, 126
  %v4812 = vpop.permute.xlu0 %4811
  %4813 = vrot.lane.b32.xlu0 %v4749, 126
  %v4814 = vpop.permute.xlu0 %4813
  %4815 = vrot.lane.b32.xlu0 %v4751, 126
  %v4816 = vpop.permute.xlu0 %4815
  %4817 = vrot.lane.b32.xlu0 %v4752, 126
  %v4818 = vpop.permute.xlu0 %4817
  %4819 = vrot.lane.b32.xlu0 %v4753, 126
  %v4820 = vpop.permute.xlu0 %4819
  %4821 = vrot.lane.b32.xlu0 %v4754, 126
  %v4822 = vpop.permute.xlu0 %4821
  %4823 = vrot.lane.b32.xlu0 %v4755, 126
  %v4824 = vpop.permute.xlu0 %4823
  %4825 = vrot.lane.b32.xlu0 %v4756, 126
  %v4826 = vpop.permute.xlu0 %4825
  %v4827 = vsel %vm125, %v4804, %v4806
  %v4828 = vsel %vm125, %v4806, %v4808
  %v4829 = vsel %vm125, %v4808, %v4810
  %v4830 = vsel %vm125, %v4810, %v4812
  %v4831 = vsel %vm125, %v4812, %v4814
  %v4832 = vsel %vm125, %v4816, %v4818
  %v4833 = vsel %vm125, %v4818, %v4820
  %v4834 = vsel %vm125, %v4820, %v4822
  %v4835 = vsel %vm125, %v4822, %v4824
  %v4836 = vsel %vm125, %v4824, %v4826
  %s4837 = scalar_lea.vmem %s15, 1
  %v4838 = vld [vmem:[%s4837] sm:$0x1]
  %4841 = vrot.lane.b32.xlu0 %v4743, 1
  %v4842 = vpop.permute.xlu0 %4841
  %4843 = vrot.lane.b32.xlu0 %v4744, 1
  %v4844 = vpop.permute.xlu0 %4843
  %4845 = vrot.lane.b32.xlu0 %v4745, 1
  %v4846 = vpop.permute.xlu0 %4845
  %4847 = vrot.lane.b32.xlu0 %v4746, 1
  %v4848 = vpop.permute.xlu0 %4847
  %4849 = vrot.lane.b32.xlu0 %v4747, 1
  %v4850 = vpop.permute.xlu0 %4849
  %4851 = vrot.lane.b32.xlu0 %v4748, 1
  %v4852 = vpop.permute.xlu0 %4851
  %4853 = vrot.lane.b32.xlu0 %v4749, 1
  %v4854 = vpop.permute.xlu0 %4853
  %4855 = vrot.lane.b32.xlu0 %v4750, 1
  %v4856 = vpop.permute.xlu0 %4855
  %4857 = vrot.lane.b32.xlu0 %v4751, 1
  %v4858 = vpop.permute.xlu0 %4857
  %4859 = vrot.lane.b32.xlu0 %v4752, 1
  %v4860 = vpop.permute.xlu0 %4859
  %4861 = vrot.lane.b32.xlu0 %v4753, 1
  %v4862 = vpop.permute.xlu0 %4861
  %4863 = vrot.lane.b32.xlu0 %v4754, 1
  %v4864 = vpop.permute.xlu0 %4863
  %4865 = vrot.lane.b32.xlu0 %v4755, 1
  %v4866 = vpop.permute.xlu0 %4865
  %4867 = vrot.lane.b32.xlu0 %v4756, 1
  %v4868 = vpop.permute.xlu0 %4867
  %4869 = vrot.lane.b32.xlu0 %v4770, 1
  %v4870 = vpop.permute.xlu0 %4869
  %4871 = vrot.lane.b32.xlu0 %v4793, 1
  %v4872 = vpop.permute.xlu0 %4871
  %4873 = vrot.lane.b32.xlu0 %v4794, 1
  %v4874 = vpop.permute.xlu0 %4873
  %4875 = vrot.lane.b32.xlu0 %v4795, 1
  %v4876 = vpop.permute.xlu0 %4875
  %4877 = vrot.lane.b32.xlu0 %v4796, 1
  %v4878 = vpop.permute.xlu0 %4877
  %4879 = vrot.lane.b32.xlu0 %v4797, 1
  %v4880 = vpop.permute.xlu0 %4879
  %4881 = vrot.lane.b32.xlu0 %v4780, 1
  %v4882 = vpop.permute.xlu0 %4881
  %4883 = vrot.lane.b32.xlu0 %v4782, 1
  %v4884 = vpop.permute.xlu0 %4883
  %4885 = vrot.lane.b32.xlu0 %v4798, 1
  %v4886 = vpop.permute.xlu0 %4885
  %4887 = vrot.lane.b32.xlu0 %v4799, 1
  %v4888 = vpop.permute.xlu0 %4887
  %4889 = vrot.lane.b32.xlu0 %v4800, 1
  %v4890 = vpop.permute.xlu0 %4889
  %4891 = vrot.lane.b32.xlu0 %v4801, 1
  %v4892 = vpop.permute.xlu0 %4891
  %4893 = vrot.lane.b32.xlu0 %v4802, 1
  %v4894 = vpop.permute.xlu0 %4893
  %4895 = vrot.lane.b32.xlu0 %v4792, 1
  %v4896 = vpop.permute.xlu0 %4895
  %4897 = vrot.lane.b32.xlu0 %v4804, 1
  %v4898 = vpop.permute.xlu0 %4897
  %4899 = vrot.lane.b32.xlu0 %v4827, 1
  %v4900 = vpop.permute.xlu0 %4899
  %4901 = vrot.lane.b32.xlu0 %v4828, 1
  %v4902 = vpop.permute.xlu0 %4901
  %4903 = vrot.lane.b32.xlu0 %v4829, 1
  %v4904 = vpop.permute.xlu0 %4903
  %4905 = vrot.lane.b32.xlu0 %v4830, 1
  %v4906 = vpop.permute.xlu0 %4905
  %4907 = vrot.lane.b32.xlu0 %v4831, 1
  %v4908 = vpop.permute.xlu0 %4907
  %4909 = vrot.lane.b32.xlu0 %v4814, 1
  %v4910 = vpop.permute.xlu0 %4909
  %4911 = vrot.lane.b32.xlu0 %v4816, 1
  %v4912 = vpop.permute.xlu0 %4911
  %4913 = vrot.lane.b32.xlu0 %v4832, 1
  %v4914 = vpop.permute.xlu0 %4913
  %4915 = vrot.lane.b32.xlu0 %v4833, 1
  %v4916 = vpop.permute.xlu0 %4915
  %4917 = vrot.lane.b32.xlu0 %v4834, 1
  %v4918 = vpop.permute.xlu0 %4917
  %4919 = vrot.lane.b32.xlu0 %v4835, 1
  %v4920 = vpop.permute.xlu0 %4919
  %4921 = vrot.lane.b32.xlu0 %v4836, 1
  %v4922 = vpop.permute.xlu0 %4921
  %4923 = vrot.lane.b32.xlu0 %v4826, 1
  %v4924 = vpop.permute.xlu0 %4923
  %v4925 = vsel %vm293, %v4842, %v4844
  %v4926 = vsel %vm293, %v4844, %v4846
  %v4927 = vsel %vm293, %v4846, %v4848
  %v4928 = vsel %vm293, %v4848, %v4850
  %v4929 = vsel %vm293, %v4850, %v4852
  %v4930 = vsel %vm293, %v4852, %v4854
  %v4931 = vsel %vm293, %v4856, %v4858
  %v4932 = vsel %vm293, %v4858, %v4860
  %v4933 = vsel %vm293, %v4860, %v4862
  %v4934 = vsel %vm293, %v4862, %v4864
  %v4935 = vsel %vm293, %v4864, %v4866
  %v4936 = vsel %vm293, %v4866, %v4868
  %v4937 = vsel %vm293, %v4870, %v4872
  %v4938 = vsel %vm293, %v4872, %v4874
  %v4939 = vsel %vm293, %v4874, %v4876
  %v4940 = vsel %vm293, %v4876, %v4878
  %v4941 = vsel %vm293, %v4878, %v4880
  %v4942 = vsel %vm293, %v4880, %v4882
  %v4943 = vsel %vm293, %v4884, %v4886
  %v4944 = vsel %vm293, %v4886, %v4888
  %v4945 = vsel %vm293, %v4888, %v4890
  %v4946 = vsel %vm293, %v4890, %v4892
  %v4947 = vsel %vm293, %v4892, %v4894
  %v4948 = vsel %vm293, %v4894, %v4896
  %v4949 = vsel %vm293, %v4898, %v4900
  %v4950 = vsel %vm293, %v4900, %v4902
  %v4951 = vsel %vm293, %v4902, %v4904
  %v4952 = vsel %vm293, %v4904, %v4906
  %v4953 = vsel %vm293, %v4906, %v4908
  %v4954 = vsel %vm293, %v4908, %v4910
  %v4955 = vsel %vm293, %v4912, %v4914
  %v4956 = vsel %vm293, %v4914, %v4916
  %v4957 = vsel %vm293, %v4916, %v4918
  %v4958 = vsel %vm293, %v4918, %v4920
  %v4959 = vsel %vm293, %v4920, %v4922
  %v4960 = vsel %vm293, %v4922, %v4924
  %v4998 = vsel %vm1822, %v4838, 0
  %5000 = vmatprep.subr.bf16.mxu0 %v4926
  %5001 = vmatpush1.bf16.msra.mxu0 %v4925
  %5002 = vmatprep.subr.bf16.mxu0 %v4932
  %5003 = vmatpush1.bf16.msra.mxu0 %v4931
  %5004 = vmatprep.subr.bf16.mxu0 %v4938
  %5005 = vmatpush1.bf16.msra.mxu0 %v4937
  %5006 = vmatprep.subr.bf16.mxu0 %v4944
  %5007 = vmatpush1.bf16.msra.mxu0 %v4943
  %5008 = vmatprep.subr.bf16.mxu0 %v4950
  %5009 = vmatpush1.bf16.msra.mxu0 %v4949
  %5010 = vmatprep.subr.bf16.mxu0 %v4956
  %5011 = vmatpush1.bf16.msra.mxu0 %v4955
  %5012 = vmatprep.subr.bf16.mxu0 0
  %5013 = vmatpush1.bf16.msra.mxu0 0
  %5014 = vmatprep.subr.bf16.mxu0 0
  %5015 = vmatpush1.bf16.msra.mxu0 0
  %5016 = vmatprep.subr.bf16.mxu0 0
  %5017 = vmatpush1.bf16.msra.mxu0 0
  %5018 = vmatprep.subr.bf16.mxu0 0
  %5019 = vmatpush1.bf16.msra.mxu0 0
  %5020 = vmatprep.subr.bf16.mxu0 0
  %5021 = vmatpush1.bf16.msra.mxu0 0
  %5022 = vmatprep.subr.bf16.mxu0 0
  %5023 = vmatpush1.bf16.msra.mxu0 0
  %5024 = vmatprep.subr.bf16.mxu0 0
  %5025 = vmatpush1.bf16.msra.mxu0 0
  %5026 = vmatprep.subr.bf16.mxu0 0
  %5027 = vmatpush1.bf16.msra.mxu0 0
  %5028 = vmatprep.subr.bf16.mxu0 0
  %5029 = vmatpush1.bf16.msra.mxu0 0
  %5030 = vmatprep.subr.bf16.mxu0 0
  %5031 = vmatpush1.bf16.msra.mxu0 0
  %5032 = vmatprep.mubr.bf16.mxu0 0
  %5033 = vmatmul.mubr.bf16.gmra.mrb[0].mxu0 %v4998
  %v5034 = vpop.f32.mrb[0].mxu0
  %v5035 = vadd.f32 0.0, %v5034
  %v5036 = vpop.f32.mrb[0].mxu0
  %v5037 = vadd.f32 0.0, %v5036
  %v5038 = vpop.f32.mrb[0].mxu0
  %v5039 = vpop.f32.mrb[0].mxu0
  %5040 = vdwg.mxu0
  %5041 = vmatprep.subr.bf16.mxu0 %v4928
  %5042 = vmatpush1.bf16.msra.mxu0 %v4927
  %5043 = vmatprep.subr.bf16.mxu0 %v4934
  %5044 = vmatpush1.bf16.msra.mxu0 %v4933
  %5045 = vmatprep.subr.bf16.mxu0 %v4940
  %5046 = vmatpush1.bf16.msra.mxu0 %v4939
  %5047 = vmatprep.subr.bf16.mxu0 %v4946
  %5048 = vmatpush1.bf16.msra.mxu0 %v4945
  %5049 = vmatprep.subr.bf16.mxu0 %v4952
  %5050 = vmatpush1.bf16.msra.mxu0 %v4951
  %5051 = vmatprep.subr.bf16.mxu0 %v4958
  %5052 = vmatpush1.bf16.msra.mxu0 %v4957
  %5053 = vmatprep.subr.bf16.mxu0 0
  %5054 = vmatpush1.bf16.msra.mxu0 0
  %5055 = vmatprep.subr.bf16.mxu0 0
  %5056 = vmatpush1.bf16.msra.mxu0 0
  %5057 = vmatprep.subr.bf16.mxu0 0
  %5058 = vmatpush1.bf16.msra.mxu0 0
  %5059 = vmatprep.subr.bf16.mxu0 0
  %5060 = vmatpush1.bf16.msra.mxu0 0
  %5061 = vmatprep.subr.bf16.mxu0 0
  %5062 = vmatpush1.bf16.msra.mxu0 0
  %5063 = vmatprep.subr.bf16.mxu0 0
  %5064 = vmatpush1.bf16.msra.mxu0 0
  %5065 = vmatprep.subr.bf16.mxu0 0
  %5066 = vmatpush1.bf16.msra.mxu0 0
  %5067 = vmatprep.subr.bf16.mxu0 0
  %5068 = vmatpush1.bf16.msra.mxu0 0
  %5069 = vmatprep.subr.bf16.mxu0 0
  %5070 = vmatpush1.bf16.msra.mxu0 0
  %5071 = vmatprep.subr.bf16.mxu0 0
  %5072 = vmatpush1.bf16.msra.mxu0 0
  %5073 = vmatprep.mubr.bf16.mxu0 0
  %5074 = vmatmul.mubr.bf16.gmra.mrb[0].mxu0 %v4998
  %v5075 = vpop.f32.mrb[0].mxu0
  %v5076 = vadd.f32 0.0, %v5075
  %v5077 = vpop.f32.mrb[0].mxu0
  %v5078 = vadd.f32 0.0, %v5077
  %v5079 = vpop.f32.mrb[0].mxu0
  %v5080 = vpop.f32.mrb[0].mxu0
  %5081 = vdwg.mxu0
  %5082 = vmatprep.subr.bf16.mxu0 %v4930
  %5083 = vmatpush1.bf16.msra.mxu0 %v4929
  %5084 = vmatprep.subr.bf16.mxu0 %v4936
  %5085 = vmatpush1.bf16.msra.mxu0 %v4935
  %5086 = vmatprep.subr.bf16.mxu0 %v4942
  %5087 = vmatpush1.bf16.msra.mxu0 %v4941
  %5088 = vmatprep.subr.bf16.mxu0 %v4948
  %5089 = vmatpush1.bf16.msra.mxu0 %v4947
  %5090 = vmatprep.subr.bf16.mxu0 %v4954
  %5091 = vmatpush1.bf16.msra.mxu0 %v4953
  %5092 = vmatprep.subr.bf16.mxu0 %v4960
  %5093 = vmatpush1.bf16.msra.mxu0 %v4959
  %5094 = vmatprep.subr.bf16.mxu0 0
  %5095 = vmatpush1.bf16.msra.mxu0 0
  %5096 = vmatprep.subr.bf16.mxu0 0
  %5097 = vmatpush1.bf16.msra.mxu0 0
  %5098 = vmatprep.subr.bf16.mxu0 0
  %5099 = vmatpush1.bf16.msra.mxu0 0
  %5100 = vmatprep.subr.bf16.mxu0 0
  %5101 = vmatpush1.bf16.msra.mxu0 0
  %5102 = vmatprep.subr.bf16.mxu0 0
  %5103 = vmatpush1.bf16.msra.mxu0 0
  %5104 = vmatprep.subr.bf16.mxu0 0
  %5105 = vmatpush1.bf16.msra.mxu0 0
  %5106 = vmatprep.subr.bf16.mxu0 0
  %5107 = vmatpush1.bf16.msra.mxu0 0
  %5108 = vmatprep.subr.bf16.mxu0 0
  %5109 = vmatpush1.bf16.msra.mxu0 0
  %5110 = vmatprep.subr.bf16.mxu0 0
  %5111 = vmatpush1.bf16.msra.mxu0 0
  %5112 = vmatprep.subr.bf16.mxu0 0
  %5113 = vmatpush1.bf16.msra.mxu0 0
  %5114 = vmatprep.mubr.bf16.mxu0 0
  %5115 = vmatmul.mubr.bf16.gmra.mrb[0].mxu0 %v4998
  %v5116 = vpop.f32.mrb[0].mxu0
  %v5117 = vadd.f32 0.0, %v5116
  %v5118 = vpop.f32.mrb[0].mxu0
  %v5119 = vadd.f32 0.0, %v5118
  %v5120 = vpop.f32.mrb[0].mxu0
  %v5121 = vpop.f32.mrb[0].mxu0
  %5122 = vdwg.mxu0
  %5123 = vrot.lane.b32.xlu0 %v4650, 19
  %v5124 = vpop.permute.xlu0 %5123
  %5125 = vrot.lane.b32.xlu0 %v4651, 19
  %v5126 = vpop.permute.xlu0 %5125
  %5127 = vrot.lane.b32.xlu0 %v4652, 19
  %v5128 = vpop.permute.xlu0 %5127
  %5129 = vrot.lane.b32.xlu0 %v4653, 19
  %v5130 = vpop.permute.xlu0 %5129
  %5131 = vrot.lane.b32.xlu0 %v4654, 19
  %v5132 = vpop.permute.xlu0 %5131
  %5133 = vrot.lane.b32.xlu0 %v4655, 19
  %v5134 = vpop.permute.xlu0 %5133
  %5135 = vrot.lane.b32.xlu0 %v4656, 19
  %v5136 = vpop.permute.xlu0 %5135
  %5137 = vrot.lane.b32.xlu0 %v4657, 19
  %v5138 = vpop.permute.xlu0 %5137
  %5139 = vrot.lane.b32.xlu0 %v4658, 19
  %v5140 = vpop.permute.xlu0 %5139
  %5141 = vrot.lane.b32.xlu0 %v4659, 19
  %v5142 = vpop.permute.xlu0 %5141
  %5143 = vrot.lane.b32.xlu0 %v4660, 19
  %v5144 = vpop.permute.xlu0 %5143
  %5145 = vrot.lane.b32.xlu0 %v4661, 19
  %v5146 = vpop.permute.xlu0 %5145
  %5147 = vrot.lane.b32.xlu0 %v4698, 19
  %v5148 = vpop.permute.xlu0 %5147
  %5149 = vrot.lane.b32.xlu0 %v4699, 19
  %v5150 = vpop.permute.xlu0 %5149
  %5151 = vrot.lane.b32.xlu0 %v4700, 19
  %v5152 = vpop.permute.xlu0 %5151
  %5153 = vrot.lane.b32.xlu0 %v4701, 19
  %v5154 = vpop.permute.xlu0 %5153
  %5155 = vrot.lane.b32.xlu0 %v4702, 19
  %v5156 = vpop.permute.xlu0 %5155
  %5157 = vrot.lane.b32.xlu0 %v4685, 19
  %v5158 = vpop.permute.xlu0 %5157
  %5159 = vrot.lane.b32.xlu0 %v4703, 19
  %v5160 = vpop.permute.xlu0 %5159
  %5161 = vrot.lane.b32.xlu0 %v4704, 19
  %v5162 = vpop.permute.xlu0 %5161
  %5163 = vrot.lane.b32.xlu0 %v4705, 19
  %v5164 = vpop.permute.xlu0 %5163
  %5165 = vrot.lane.b32.xlu0 %v4706, 19
  %v5166 = vpop.permute.xlu0 %5165
  %5167 = vrot.lane.b32.xlu0 %v4707, 19
  %v5168 = vpop.permute.xlu0 %5167
  %5169 = vrot.lane.b32.xlu0 %v4697, 19
  %v5170 = vpop.permute.xlu0 %5169
  %5171 = vrot.lane.b32.xlu0 %v4732, 19
  %v5172 = vpop.permute.xlu0 %5171
  %5173 = vrot.lane.b32.xlu0 %v4733, 19
  %v5174 = vpop.permute.xlu0 %5173
  %5175 = vrot.lane.b32.xlu0 %v4734, 19
  %v5176 = vpop.permute.xlu0 %5175
  %5177 = vrot.lane.b32.xlu0 %v4735, 19
  %v5178 = vpop.permute.xlu0 %5177
  %5179 = vrot.lane.b32.xlu0 %v4736, 19
  %v5180 = vpop.permute.xlu0 %5179
  %5181 = vrot.lane.b32.xlu0 %v4719, 19
  %v5182 = vpop.permute.xlu0 %5181
  %5183 = vrot.lane.b32.xlu0 %v4737, 19
  %v5184 = vpop.permute.xlu0 %5183
  %5185 = vrot.lane.b32.xlu0 %v4738, 19
  %v5186 = vpop.permute.xlu0 %5185
  %5187 = vrot.lane.b32.xlu0 %v4739, 19
  %v5188 = vpop.permute.xlu0 %5187
  %5189 = vrot.lane.b32.xlu0 %v4740, 19
  %v5190 = vpop.permute.xlu0 %5189
  %5191 = vrot.lane.b32.xlu0 %v4741, 19
  %v5192 = vpop.permute.xlu0 %5191
  %5193 = vrot.lane.b32.xlu0 %v4731, 19
  %v5194 = vpop.permute.xlu0 %5193
  %v5195 = vsel %vm542, %v5124, %v5126
  %v5196 = vsel %vm542, %v5126, %v5128
  %v5197 = vsel %vm542, %v5128, %v5130
  %v5198 = vsel %vm542, %v5130, %v5132
  %v5199 = vsel %vm542, %v5132, %v5134
  %v5200 = vsel %vm542, %v5136, %v5138
  %v5201 = vsel %vm542, %v5138, %v5140
  %v5202 = vsel %vm542, %v5140, %v5142
  %v5203 = vsel %vm542, %v5142, %v5144
  %v5204 = vsel %vm542, %v5144, %v5146
  %v5205 = vsel %vm542, %v5148, %v5150
  %v5206 = vsel %vm542, %v5150, %v5152
  %v5207 = vsel %vm542, %v5152, %v5154
  %v5208 = vsel %vm542, %v5154, %v5156
  %v5209 = vsel %vm542, %v5156, %v5158
  %v5210 = vsel %vm542, %v5160, %v5162
  %v5211 = vsel %vm542, %v5162, %v5164
  %v5212 = vsel %vm542, %v5164, %v5166
  %v5213 = vsel %vm542, %v5166, %v5168
  %v5214 = vsel %vm542, %v5168, %v5170
  %v5215 = vsel %vm542, %v5172, %v5174
  %v5216 = vsel %vm542, %v5174, %v5176
  %v5217 = vsel %vm542, %v5176, %v5178
  %v5218 = vsel %vm542, %v5178, %v5180
  %v5219 = vsel %vm542, %v5180, %v5182
  %v5220 = vsel %vm542, %v5184, %v5186
  %v5221 = vsel %vm542, %v5186, %v5188
  %v5222 = vsel %vm542, %v5188, %v5190
  %v5223 = vsel %vm542, %v5190, %v5192
  %v5224 = vsel %vm542, %v5192, %v5194
  %v5262 = vsel %vm1822, %v4742, 0
  %5264 = vmatprep.subr.bf16.mxu0 %v5196
  %5265 = vmatpush1.bf16.msra.mxu0 %v5195
  %5266 = vmatprep.subr.bf16.mxu0 %v5201
  %5267 = vmatpush1.bf16.msra.mxu0 %v5200
  %5268 = vmatprep.subr.bf16.mxu0 %v5206
  %5269 = vmatpush1.bf16.msra.mxu0 %v5205
  %5270 = vmatprep.subr.bf16.mxu0 %v5211
  %5271 = vmatpush1.bf16.msra.mxu0 %v5210
  %5272 = vmatprep.subr.bf16.mxu0 %v5216
  %5273 = vmatpush1.bf16.msra.mxu0 %v5215
  %5274 = vmatprep.subr.bf16.mxu0 %v5221
  %5275 = vmatpush1.bf16.msra.mxu0 %v5220
  %5276 = vmatprep.subr.bf16.mxu0 0
  %5277 = vmatpush1.bf16.msra.mxu0 0
  %5278 = vmatprep.subr.bf16.mxu0 0
  %5279 = vmatpush1.bf16.msra.mxu0 0
  %5280 = vmatprep.subr.bf16.mxu0 0
  %5281 = vmatpush1.bf16.msra.mxu0 0
  %5282 = vmatprep.subr.bf16.mxu0 0
  %5283 = vmatpush1.bf16.msra.mxu0 0
  %5284 = vmatprep.subr.bf16.mxu0 0
  %5285 = vmatpush1.bf16.msra.mxu0 0
  %5286 = vmatprep.subr.bf16.mxu0 0
  %5287 = vmatpush1.bf16.msra.mxu0 0
  %5288 = vmatprep.subr.bf16.mxu0 0
  %5289 = vmatpush1.bf16.msra.mxu0 0
  %5290 = vmatprep.subr.bf16.mxu0 0
  %5291 = vmatpush1.bf16.msra.mxu0 0
  %5292 = vmatprep.subr.bf16.mxu0 0
  %5293 = vmatpush1.bf16.msra.mxu0 0
  %5294 = vmatprep.subr.bf16.mxu0 0
  %5295 = vmatpush1.bf16.msra.mxu0 0
  %5296 = vmatprep.mubr.bf16.mxu0 0
  %5297 = vmatmul.mubr.bf16.gmra.mrb[0].mxu0 %v5262
  %v5298 = vpop.f32.mrb[0].mxu0
  %v5299 = vadd.f32 %v5035, %v5298
  %v5300 = vpop.f32.mrb[0].mxu0
  %v5301 = vadd.f32 %v5037, %v5300
  %v5302 = vpop.f32.mrb[0].mxu0
  %v5303 = vpop.f32.mrb[0].mxu0
  %5304 = vdwg.mxu0
  %5305 = vmatprep.subr.bf16.mxu0 %v5198
  %5306 = vmatpush1.bf16.msra.mxu0 %v5197
  %5307 = vmatprep.subr.bf16.mxu0 %v5203
  %5308 = vmatpush1.bf16.msra.mxu0 %v5202
  %5309 = vmatprep.subr.bf16.mxu0 %v5208
  %5310 = vmatpush1.bf16.msra.mxu0 %v5207
  %5311 = vmatprep.subr.bf16.mxu0 %v5213
  %5312 = vmatpush1.bf16.msra.mxu0 %v5212
  %5313 = vmatprep.subr.bf16.mxu0 %v5218
  %5314 = vmatpush1.bf16.msra.mxu0 %v5217
  %5315 = vmatprep.subr.bf16.mxu0 %v5223
  %5316 = vmatpush1.bf16.msra.mxu0 %v5222
  %5317 = vmatprep.subr.bf16.mxu0 0
  %5318 = vmatpush1.bf16.msra.mxu0 0
  %5319 = vmatprep.subr.bf16.mxu0 0
  %5320 = vmatpush1.bf16.msra.mxu0 0
  %5321 = vmatprep.subr.bf16.mxu0 0
  %5322 = vmatpush1.bf16.msra.mxu0 0
  %5323 = vmatprep.subr.bf16.mxu0 0
  %5324 = vmatpush1.bf16.msra.mxu0 0
  %5325 = vmatprep.subr.bf16.mxu0 0
  %5326 = vmatpush1.bf16.msra.mxu0 0
  %5327 = vmatprep.subr.bf16.mxu0 0
  %5328 = vmatpush1.bf16.msra.mxu0 0
  %5329 = vmatprep.subr.bf16.mxu0 0
  %5330 = vmatpush1.bf16.msra.mxu0 0
  %5331 = vmatprep.subr.bf16.mxu0 0
  %5332 = vmatpush1.bf16.msra.mxu0 0
  %5333 = vmatprep.subr.bf16.mxu0 0
  %5334 = vmatpush1.bf16.msra.mxu0 0
  %5335 = vmatprep.subr.bf16.mxu0 0
  %5336 = vmatpush1.bf16.msra.mxu0 0
  %5337 = vmatprep.mubr.bf16.mxu0 0
  %5338 = vmatmul.mubr.bf16.gmra.mrb[0].mxu0 %v5262
  %v5339 = vpop.f32.mrb[0].mxu0
  %v5340 = vadd.f32 %v5076, %v5339
  %v5341 = vpop.f32.mrb[0].mxu0
  %v5342 = vadd.f32 %v5078, %v5341
  %v5343 = vpop.f32.mrb[0].mxu0
  %v5344 = vpop.f32.mrb[0].mxu0
  %5345 = vdwg.mxu0
  %5346 = vmatprep.subr.bf16.mxu0 %v5134
  %5347 = vmatpush1.bf16.msra.mxu0 %v5199
  %5348 = vmatprep.subr.bf16.mxu0 %v5146
  %5349 = vmatpush1.bf16.msra.mxu0 %v5204
  %5350 = vmatprep.subr.bf16.mxu0 %v5158
  %5351 = vmatpush1.bf16.msra.mxu0 %v5209
  %5352 = vmatprep.subr.bf16.mxu0 %v5170
  %5353 = vmatpush1.bf16.msra.mxu0 %v5214
  %5354 = vmatprep.subr.bf16.mxu0 %v5182
  %5355 = vmatpush1.bf16.msra.mxu0 %v5219
  %5356 = vmatprep.subr.bf16.mxu0 %v5194
  %5357 = vmatpush1.bf16.msra.mxu0 %v5224
  %5358 = vmatprep.subr.bf16.mxu0 0
  %5359 = vmatpush1.bf16.msra.mxu0 0
  %5360 = vmatprep.subr.bf16.mxu0 0
  %5361 = vmatpush1.bf16.msra.mxu0 0
  %5362 = vmatprep.subr.bf16.mxu0 0
  %5363 = vmatpush1.bf16.msra.mxu0 0
  %5364 = vmatprep.subr.bf16.mxu0 0
  %5365 = vmatpush1.bf16.msra.mxu0 0
  %5366 = vmatprep.subr.bf16.mxu0 0
  %5367 = vmatpush1.bf16.msra.mxu0 0
  %5368 = vmatprep.subr.bf16.mxu0 0
  %5369 = vmatpush1.bf16.msra.mxu0 0
  %5370 = vmatprep.subr.bf16.mxu0 0
  %5371 = vmatpush1.bf16.msra.mxu0 0
  %5372 = vmatprep.subr.bf16.mxu0 0
  %5373 = vmatpush1.bf16.msra.mxu0 0
  %5374 = vmatprep.subr.bf16.mxu0 0
  %5375 = vmatpush1.bf16.msra.mxu0 0
  %5376 = vmatprep.subr.bf16.mxu0 0
  %5377 = vmatpush1.bf16.msra.mxu0 0
  %5378 = vmatprep.mubr.bf16.mxu0 0
  %5379 = vmatmul.mubr.bf16.gmra.mrb[0].mxu0 %v5262
  %v5380 = vpop.f32.mrb[0].mxu0
  %v5381 = vadd.f32 %v5117, %v5380
  %v5382 = vpop.f32.mrb[0].mxu0
  %v5383 = vadd.f32 %v5119, %v5382
  %v5384 = vpop.f32.mrb[0].mxu0
  %v5385 = vpop.f32.mrb[0].mxu0
  %5386 = vdwg.mxu0
  %s5387 = scalar_lea.vmem %s15, 2
  %v5388 = vld [vmem:[%s5387] sm:$0x1]
  %5389 = vrot.lane.b32.xlu0 %v4744, 111
  %v5390 = vpop.permute.xlu0 %5389
  %5391 = vrot.lane.b32.xlu0 %v4745, 111
  %v5392 = vpop.permute.xlu0 %5391
  %5393 = vrot.lane.b32.xlu0 %v4746, 111
  %v5394 = vpop.permute.xlu0 %5393
  %5395 = vrot.lane.b32.xlu0 %v4747, 111
  %v5396 = vpop.permute.xlu0 %5395
  %5397 = vrot.lane.b32.xlu0 %v4748, 111
  %v5398 = vpop.permute.xlu0 %5397
  %5399 = vrot.lane.b32.xlu0 %v4749, 111
  %v5400 = vpop.permute.xlu0 %5399
  %5401 = vrot.lane.b32.xlu0 %v4751, 111
  %v5402 = vpop.permute.xlu0 %5401
  %5403 = vrot.lane.b32.xlu0 %v4752, 111
  %v5404 = vpop.permute.xlu0 %5403
  %5405 = vrot.lane.b32.xlu0 %v4753, 111
  %v5406 = vpop.permute.xlu0 %5405
  %5407 = vrot.lane.b32.xlu0 %v4754, 111
  %v5408 = vpop.permute.xlu0 %5407
  %5409 = vrot.lane.b32.xlu0 %v4755, 111
  %v5410 = vpop.permute.xlu0 %5409
  %5411 = vrot.lane.b32.xlu0 %v4756, 111
  %v5412 = vpop.permute.xlu0 %5411
  %5413 = vrot.lane.b32.xlu0 %v4793, 111
  %v5414 = vpop.permute.xlu0 %5413
  %5415 = vrot.lane.b32.xlu0 %v4794, 111
  %v5416 = vpop.permute.xlu0 %5415
  %5417 = vrot.lane.b32.xlu0 %v4795, 111
  %v5418 = vpop.permute.xlu0 %5417
  %5419 = vrot.lane.b32.xlu0 %v4796, 111
  %v5420 = vpop.permute.xlu0 %5419
  %5421 = vrot.lane.b32.xlu0 %v4797, 111
  %v5422 = vpop.permute.xlu0 %5421
  %5423 = vrot.lane.b32.xlu0 %v4780, 111
  %v5424 = vpop.permute.xlu0 %5423
  %5425 = vrot.lane.b32.xlu0 %v4798, 111
  %v5426 = vpop.permute.xlu0 %5425
  %5427 = vrot.lane.b32.xlu0 %v4799, 111
  %v5428 = vpop.permute.xlu0 %5427
  %5429 = vrot.lane.b32.xlu0 %v4800, 111
  %v5430 = vpop.permute.xlu0 %5429
  %5431 = vrot.lane.b32.xlu0 %v4801, 111
  %v5432 = vpop.permute.xlu0 %5431
  %5433 = vrot.lane.b32.xlu0 %v4802, 111
  %v5434 = vpop.permute.xlu0 %5433
  %5435 = vrot.lane.b32.xlu0 %v4792, 111
  %v5436 = vpop.permute.xlu0 %5435
  %5437 = vrot.lane.b32.xlu0 %v4827, 111
  %v5438 = vpop.permute.xlu0 %5437
  %5439 = vrot.lane.b32.xlu0 %v4828, 111
  %v5440 = vpop.permute.xlu0 %5439
  %5441 = vrot.lane.b32.xlu0 %v4829, 111
  %v5442 = vpop.permute.xlu0 %5441
  %5443 = vrot.lane.b32.xlu0 %v4830, 111
  %v5444 = vpop.permute.xlu0 %5443
  %5445 = vrot.lane.b32.xlu0 %v4831, 111
  %v5446 = vpop.permute.xlu0 %5445
  %5447 = vrot.lane.b32.xlu0 %v4814, 111
  %v5448 = vpop.permute.xlu0 %5447
  %5449 = vrot.lane.b32.xlu0 %v4832, 111
  %v5450 = vpop.permute.xlu0 %5449
  %5451 = vrot.lane.b32.xlu0 %v4833, 111
  %v5452 = vpop.permute.xlu0 %5451
  %5453 = vrot.lane.b32.xlu0 %v4834, 111
  %v5454 = vpop.permute.xlu0 %5453
  %5455 = vrot.lane.b32.xlu0 %v4835, 111
  %v5456 = vpop.permute.xlu0 %5455
  %5457 = vrot.lane.b32.xlu0 %v4836, 111
  %v5458 = vpop.permute.xlu0 %5457
  %5459 = vrot.lane.b32.xlu0 %v4826, 111
  %v5460 = vpop.permute.xlu0 %5459
  %v5461 = vsel %vm792, %v5390, %v5392
  %v5462 = vsel %vm792, %v5392, %v5394
  %v5463 = vsel %vm792, %v5394, %v5396
  %v5464 = vsel %vm792, %v5396, %v5398
  %v5465 = vsel %vm792, %v5398, %v5400
  %v5466 = vsel %vm792, %v5402, %v5404
  %v5467 = vsel %vm792, %v5404, %v5406
  %v5468 = vsel %vm792, %v5406, %v5408
  %v5469 = vsel %vm792, %v5408, %v5410
  %v5470 = vsel %vm792, %v5410, %v5412
  %v5471 = vsel %vm792, %v5414, %v5416
  %v5472 = vsel %vm792, %v5416, %v5418
  %v5473 = vsel %vm792, %v5418, %v5420
  %v5474 = vsel %vm792, %v5420, %v5422
  %v5475 = vsel %vm792, %v5422, %v5424
  %v5476 = vsel %vm792, %v5426, %v5428
  %v5477 = vsel %vm792, %v5428, %v5430
  %v5478 = vsel %vm792, %v5430, %v5432
  %v5479 = vsel %vm792, %v5432, %v5434
  %v5480 = vsel %vm792, %v5434, %v5436
  %v5481 = vsel %vm792, %v5438, %v5440
  %v5482 = vsel %vm792, %v5440, %v5442
  %v5483 = vsel %vm792, %v5442, %v5444
  %v5484 = vsel %vm792, %v5444, %v5446
  %v5485 = vsel %vm792, %v5446, %v5448
  %v5486 = vsel %vm792, %v5450, %v5452
  %v5487 = vsel %vm792, %v5452, %v5454
  %v5488 = vsel %vm792, %v5454, %v5456
  %v5489 = vsel %vm792, %v5456, %v5458
  %v5490 = vsel %vm792, %v5458, %v5460
  %v5528 = vsel %vm1822, %v5388, 0
  %5530 = vmatprep.subr.bf16.mxu0 %v5462
  %5531 = vmatpush1.bf16.msra.mxu0 %v5461
  %5532 = vmatprep.subr.bf16.mxu0 %v5467
  %5533 = vmatpush1.bf16.msra.mxu0 %v5466
  %5534 = vmatprep.subr.bf16.mxu0 %v5472
  %5535 = vmatpush1.bf16.msra.mxu0 %v5471
  %5536 = vmatprep.subr.bf16.mxu0 %v5477
  %5537 = vmatpush1.bf16.msra.mxu0 %v5476
  %5538 = vmatprep.subr.bf16.mxu0 %v5482
  %5539 = vmatpush1.bf16.msra.mxu0 %v5481
  %5540 = vmatprep.subr.bf16.mxu0 %v5487
  %5541 = vmatpush1.bf16.msra.mxu0 %v5486
  %5542 = vmatprep.subr.bf16.mxu0 0
  %5543 = vmatpush1.bf16.msra.mxu0 0
  %5544 = vmatprep.subr.bf16.mxu0 0
  %5545 = vmatpush1.bf16.msra.mxu0 0
  %5546 = vmatprep.subr.bf16.mxu0 0
  %5547 = vmatpush1.bf16.msra.mxu0 0
  %5548 = vmatprep.subr.bf16.mxu0 0
  %5549 = vmatpush1.bf16.msra.mxu0 0
  %5550 = vmatprep.subr.bf16.mxu0 0
  %5551 = vmatpush1.bf16.msra.mxu0 0
  %5552 = vmatprep.subr.bf16.mxu0 0
  %5553 = vmatpush1.bf16.msra.mxu0 0
  %5554 = vmatprep.subr.bf16.mxu0 0
  %5555 = vmatpush1.bf16.msra.mxu0 0
  %5556 = vmatprep.subr.bf16.mxu0 0
  %5557 = vmatpush1.bf16.msra.mxu0 0
  %5558 = vmatprep.subr.bf16.mxu0 0
  %5559 = vmatpush1.bf16.msra.mxu0 0
  %5560 = vmatprep.subr.bf16.mxu0 0
  %5561 = vmatpush1.bf16.msra.mxu0 0
  %5562 = vmatprep.mubr.bf16.mxu0 0
  %5563 = vmatmul.mubr.bf16.gmra.mrb[0].mxu0 %v5528
  %v5564 = vpop.f32.mrb[0].mxu0
  %v5565 = vadd.f32 0.0, %v5564
  %v5566 = vpop.f32.mrb[0].mxu0
  %v5567 = vadd.f32 0.0, %v5566
  %v5568 = vpop.f32.mrb[0].mxu0
  %v5569 = vpop.f32.mrb[0].mxu0
  %5570 = vdwg.mxu0
  %5571 = vmatprep.subr.bf16.mxu0 %v5464
  %5572 = vmatpush1.bf16.msra.mxu0 %v5463
  %5573 = vmatprep.subr.bf16.mxu0 %v5469
  %5574 = vmatpush1.bf16.msra.mxu0 %v5468
  %5575 = vmatprep.subr.bf16.mxu0 %v5474
  %5576 = vmatpush1.bf16.msra.mxu0 %v5473
  %5577 = vmatprep.subr.bf16.mxu0 %v5479
  %5578 = vmatpush1.bf16.msra.mxu0 %v5478
  %5579 = vmatprep.subr.bf16.mxu0 %v5484
  %5580 = vmatpush1.bf16.msra.mxu0 %v5483
  %5581 = vmatprep.subr.bf16.mxu0 %v5489
  %5582 = vmatpush1.bf16.msra.mxu0 %v5488
  %5583 = vmatprep.subr.bf16.mxu0 0
  %5584 = vmatpush1.bf16.msra.mxu0 0
  %5585 = vmatprep.subr.bf16.mxu0 0
  %5586 = vmatpush1.bf16.msra.mxu0 0
  %5587 = vmatprep.subr.bf16.mxu0 0
  %5588 = vmatpush1.bf16.msra.mxu0 0
  %5589 = vmatprep.subr.bf16.mxu0 0
  %5590 = vmatpush1.bf16.msra.mxu0 0
  %5591 = vmatprep.subr.bf16.mxu0 0
  %5592 = vmatpush1.bf16.msra.mxu0 0
  %5593 = vmatprep.subr.bf16.mxu0 0
  %5594 = vmatpush1.bf16.msra.mxu0 0
  %5595 = vmatprep.subr.bf16.mxu0 0
  %5596 = vmatpush1.bf16.msra.mxu0 0
  %5597 = vmatprep.subr.bf16.mxu0 0
  %5598 = vmatpush1.bf16.msra.mxu0 0
  %5599 = vmatprep.subr.bf16.mxu0 0
  %5600 = vmatpush1.bf16.msra.mxu0 0
  %5601 = vmatprep.subr.bf16.mxu0 0
  %5602 = vmatpush1.bf16.msra.mxu0 0
  %5603 = vmatprep.mubr.bf16.mxu0 0
  %5604 = vmatmul.mubr.bf16.gmra.mrb[0].mxu0 %v5528
  %v5605 = vpop.f32.mrb[0].mxu0
  %v5606 = vadd.f32 0.0, %v5605
  %v5607 = vpop.f32.mrb[0].mxu0
  %v5608 = vadd.f32 0.0, %v5607
  %v5609 = vpop.f32.mrb[0].mxu0
  %v5610 = vpop.f32.mrb[0].mxu0
  %5611 = vdwg.mxu0
  %5612 = vmatprep.subr.bf16.mxu0 %v5400
  %5613 = vmatpush1.bf16.msra.mxu0 %v5465
  %5614 = vmatprep.subr.bf16.mxu0 %v5412
  %5615 = vmatpush1.bf16.msra.mxu0 %v5470
  %5616 = vmatprep.subr.bf16.mxu0 %v5424
  %5617 = vmatpush1.bf16.msra.mxu0 %v5475
  %5618 = vmatprep.subr.bf16.mxu0 %v5436
  %5619 = vmatpush1.bf16.msra.mxu0 %v5480
  %5620 = vmatprep.subr.bf16.mxu0 %v5448
  %5621 = vmatpush1.bf16.msra.mxu0 %v5485
  %5622 = vmatprep.subr.bf16.mxu0 %v5460
  %5623 = vmatpush1.bf16.msra.mxu0 %v5490
  %5624 = vmatprep.subr.bf16.mxu0 0
  %5625 = vmatpush1.bf16.msra.mxu0 0
  %5626 = vmatprep.subr.bf16.mxu0 0
  %5627 = vmatpush1.bf16.msra.mxu0 0
  %5628 = vmatprep.subr.bf16.mxu0 0
  %5629 = vmatpush1.bf16.msra.mxu0 0
  %5630 = vmatprep.subr.bf16.mxu0 0
  %5631 = vmatpush1.bf16.msra.mxu0 0
  %5632 = vmatprep.subr.bf16.mxu0 0
  %5633 = vmatpush1.bf16.msra.mxu0 0
  %5634 = vmatprep.subr.bf16.mxu0 0
  %5635 = vmatpush1.bf16.msra.mxu0 0
  %5636 = vmatprep.subr.bf16.mxu0 0
  %5637 = vmatpush1.bf16.msra.mxu0 0
  %5638 = vmatprep.subr.bf16.mxu0 0
  %5639 = vmatpush1.bf16.msra.mxu0 0
  %5640 = vmatprep.subr.bf16.mxu0 0
  %5641 = vmatpush1.bf16.msra.mxu0 0
  %5642 = vmatprep.subr.bf16.mxu0 0
  %5643 = vmatpush1.bf16.msra.mxu0 0
  %5644 = vmatprep.mubr.bf16.mxu0 0
  %5645 = vmatmul.mubr.bf16.gmra.mrb[0].mxu0 %v5528
  %v5646 = vpop.f32.mrb[0].mxu0
  %v5647 = vadd.f32 0.0, %v5646
  %v5648 = vpop.f32.mrb[0].mxu0
  %v5649 = vadd.f32 0.0, %v5648
  %v5650 = vpop.f32.mrb[0].mxu0
  %v5651 = vpop.f32.mrb[0].mxu0
  %5652 = vdwg.mxu0
  %v5653 = vadd.f32 %v5299, %v5565
  %v5654 = vadd.f32 %v5301, %v5567
  %v5655 = vadd.f32 %v5340, %v5606
  %v5656 = vadd.f32 %v5342, %v5608
  %v5657 = vadd.f32 %v5381, %v5647
  %v5658 = vadd.f32 %v5383, %v5649
  %v5659 = vld [vmem:[#allocation3] sm:$0x1]
  %5661 = vset.pattern.permute.xlu0 0
  %5662 = vperm.xlu0 %5661, %v5659
  %v5663 = vpop.permute.xlu0 %5662
  %v5665 = vlaneseq
  %v5666 = vshrl.u32 %v5665, 7
  %v5667 = vsub.s32 0, %v5666
  %v5668 = vrot.slane %v5663, %v5667
  %v5669 = vadd.f32 %v5653, %v5668
  %v5670 = vadd.f32 %v5654, %v5668
  %v5671 = vadd.f32 %v5655, %v5668
  %v5672 = vadd.f32 %v5656, %v5668
  %v5673 = vadd.f32 %v5657, %v5668
  %v5674 = vadd.f32 %v5658, %v5668
  %v5675 = vld [vmem:[%s2] sm:$0xff]
  %v5676 = vld [vmem:[%s2 + $0x8] sm:$0xf]
  %v5677 = vlaneseq
  %v5678 = vshrl.u32 %v5677, 7
  %v5679 = vsub.s32 0, %v5678
  %v5680 = vrot.slane %v5669, %v5679
  %v5681 = vlaneseq
  %v5682 = vshrl.u32 %v5681, 7
  %v5683 = vsub.s32 0, %v5682
  %v5684 = vrot.slane %v5670, %v5683
  %v5685 = vlaneseq
  %v5686 = vshrl.u32 %v5685, 7
  %v5687 = vsub.s32 0, %v5686
  %v5688 = vrot.slane %v5671, %v5687
  %v5689 = vlaneseq
  %v5690 = vshrl.u32 %v5689, 7
  %v5691 = vsub.s32 0, %v5690
  %v5692 = vrot.slane %v5672, %v5691
  %v5693 = vlaneseq
  %v5694 = vshrl.u32 %v5693, 7
  %v5695 = vsub.s32 0, %v5694
  %v5696 = vrot.slane %v5673, %v5695
  %v5697 = vlaneseq
  %v5698 = vshrl.u32 %v5697, 7
  %v5699 = vsub.s32 0, %v5698
  %v5700 = vrot.slane %v5674, %v5699
  %v5707 = vcombine.low %v5680, %v5684
  %v5708 = vcombine.low %v5688, %v5692
  %v5710 = vunpack.c.l.s4 1983009808
  %v5711 = vunpack.c.0.s8 %v5710
  %v5712 = vlaneseq
  %v5713 = vshrl.u32 %v5712, 7
  %v5714 = vsub.s32 %v5711, %v5713
  %v5715 = vrot.slane %v5707, %v5714
  %v5717 = vunpack.c.l.s4 1983009808
  %v5718 = vunpack.c.0.s8 %v5717
  %v5719 = vlaneseq
  %v5720 = vshrl.u32 %v5719, 7
  %v5721 = vsub.s32 %v5718, %v5720
  %v5722 = vrot.slane %v5708, %v5721
  %v5723 = vcombine.low %v5715, %v5722
  %v5724 = vcombine.low %v5696, %v5700
  %v5726 = vunpack.c.l.s4 1983009808
  %v5727 = vunpack.c.0.s8 %v5726
  %v5728 = vlaneseq
  %v5729 = vshrl.u32 %v5728, 7
  %v5730 = vsub.s32 %v5727, %v5729
  %v5731 = vrot.slane %v5724, %v5730
  %v5734 = vmul.f32 %v5675, %v5723
  %v5735 = vmul.f32 %v5676, %v5731
  %v5738 = vcombine.high %v5734, %v5734
  %v5740 = vunpack.c.l.s4 1983009808
  %v5741 = vunpack.c.0.s8 %v5740
  %v5742 = vlaneseq
  %v5743 = vshrl.u32 %v5742, 7
  %v5744 = vsub.s32 %v5741, %v5743
  %v5745 = vrot.slane %v5734, %v5744
  %v5747 = vunpack.c.l.s4 1983009808
  %v5748 = vunpack.c.0.s8 %v5747
  %v5749 = vlaneseq
  %v5750 = vshrl.u32 %v5749, 7
  %v5751 = vsub.s32 %v5748, %v5750
  %v5752 = vrot.slane %v5738, %v5751
  %v5753 = vcombine.high %v5745, %v5745
  %v5754 = vcombine.high %v5752, %v5752
  %v5756 = vunpack.c.l.s4 1983009808
  %v5757 = vunpack.c.0.s8 %v5756
  %v5758 = vlaneseq
  %v5759 = vshrl.u32 %v5758, 7
  %v5760 = vsub.s32 %v5757, %v5759
  %v5761 = vrot.slane %v5735, %v5760
  %v5762 = vcombine.high %v5761, %v5761
  %vm5769 = vcmask 1041408
  %v5770 = vsel %vm5769, %v5745, 0.0
  %v5771 = vsel %vm5769, %v5753, 0.0
  %v5772 = vadd.f32 %v5770, %v5771
  %v5773 = vsel %vm5769, %v5752, 0.0
  %v5774 = vadd.f32 %v5772, %v5773
  %v5775 = vsel %vm5769, %v5754, 0.0
  %v5776 = vadd.f32 %v5774, %v5775
  %v5777 = vsel %vm5769, %v5761, 0.0
  %v5778 = vadd.f32 %v5776, %v5777
  %vm5779 = vcmask 58368
  %v5780 = vsel %vm5779, %v5762, 0.0
  %v5781 = vadd.f32 %v5778, %v5780
  %5782 = vadd.xlane.f32.xlu0 %v5781
  %v5783 = vpop.xlane.xlu0 %5782
  %vm5784 = vcmask 1024
  %5785 = vst.msk [vmem:[%s17] sm:$0x3] %vm5784, %v5783
  // Predicated region
  $region70: #{tpu_custom_call.1} parent=0 // pred_check
    _
  $region71: #{tpu_custom_call.1} parent=0 // pred_check_branch
    %5787 = sbr.rel (0) target = $region73
  $region72: #{tpu_custom_call.1} parent=0 // pred_region
    _
  $region73: #{tpu_custom_call.1} parent=0 // pred_fallthru
    _
  // Predicated region
  $region74: #{tpu_custom_call.1} parent=0 // pred_check
    _
  $region75: #{tpu_custom_call.1} parent=0 // pred_check_branch
    %5789 = sbr.rel (0) target = $region77
  $region76: #{tpu_custom_call.1} parent=0 // pred_region
    _
  $region77: #{tpu_custom_call.1} parent=0 // pred_fallthru
    _

</llo_original>
